<compile_context>
chip_gen: v7x
topology: tpu7x:2x2x1
jax: 0.10.0
libtpu: 0.0.40
codegen_flags: <defaults>
</compile_context>

<pallas_src>
import functools

import jax
import jax.numpy as jnp
import numpy as np
from jax import lax
from jax.experimental import pallas as pl
from jax.experimental.pallas import tpu as pltpu


def _round_up(x, m):
    return ((x + m - 1) // m) * m


# ----------------------------------------------------------------------------
# Fused kernel factory: all LSTM layers + final FC in one invocation (no grid).
# ----------------------------------------------------------------------------
def _make_fused_kernel(L, T, Bp, Hp, Tc, unroll, mm_dtype, proj_dtype, seq_dtype):
    H3 = 3 * Hp
    n_chunks = (T + Tc - 1) // Tc
    has_seq = L > 1

    def kernel(*args):
        x_ref = args[0]                          # (T, Bp, I)  time-major, batch padded
        layer_refs = args[1:1 + 3 * L]           # per layer: w_ih (Ip,4Hp), w_hh (Hp,4Hp), b (1,4Hp)
        fc_w_ref = args[1 + 3 * L]               # (Hp, Op)
        fc_b_ref = args[2 + 3 * L]               # (1, Op)
        out_ref = args[3 + 3 * L]                # (Bp, Op)
        scratch = args[4 + 3 * L:]
        proj_sc = scratch[0]                     # (Tc, Bp, 4Hp)
        seq_sc = scratch[1] if has_seq else None  # (T, Bp, Hp) inter-layer sequence

        h = None
        for layer in range(L):
            w_ih_ref = layer_refs[3 * layer]
            w_hh_ref = layer_refs[3 * layer + 1]
            b_ref = layer_refs[3 * layer + 2]

            inp_ref = x_ref if layer == 0 else seq_sc
            write_seq = has_seq and (layer < L - 1)   # last layer only feeds the FC

            w_hh = w_hh_ref[...]                 # resident across all timesteps
            bias = b_ref[...]                    # (1, 4Hp), b_ih + b_hh folded

            # h / c carried as register values — no per-step VMEM round trip.
            h = jnp.zeros((Bp, Hp), jnp.float32)
            c = jnp.zeros((Bp, Hp), jnp.float32)

            for ci in range(n_chunks):
                t0 = ci * Tc
                clen = min(Tc, T - t0)

                # Hoisted input projection for this chunk of timesteps:
                # one (clen*Bp, Ip) x (Ip, 4Hp) matmul, bias folded in here.
                xc = inp_ref[pl.ds(t0, clen)]                   # (clen, Bp, Ip)
                xc = xc.reshape(clen * Bp, xc.shape[-1])
                proj = jnp.dot(xc.astype(mm_dtype), w_ih_ref[...],
                               preferred_element_type=jnp.float32) + bias
                proj_sc[pl.ds(0, clen)] = (
                    proj.reshape(clen, Bp, 4 * Hp).astype(proj_dtype))

                # Serial recurrence: only h @ W_hh remains in the time loop.
                def body(t, carry, _t0=t0, _write=write_seq):
                    h, c = carry
                    gates = (proj_sc[t].astype(jnp.float32)
                             + jnp.dot(h.astype(mm_dtype), w_hh,
                                       preferred_element_type=jnp.float32))
                    # gate layout [i | f | o || g]: one contiguous sigmoid, one tanh
                    sig = jax.nn.sigmoid(gates[:, :H3])
                    g_g = jnp.tanh(gates[:, H3:])
                    i_g = sig[:, :Hp]
                    f_g = sig[:, Hp:2 * Hp]
                    o_g = sig[:, 2 * Hp:]
                    c_new = f_g * c + i_g * g_g
                    h_new = o_g * jnp.tanh(c_new)
                    if _write:
                        seq_sc[_t0 + t] = h_new.astype(seq_dtype)
                    return h_new, c_new

                h, c = lax.fori_loop(0, clen, body, (h, c),
                                     unroll=min(unroll, clen))

        # Fused final FC on the last hidden state of the last layer
        # (lane-dense Op-wide output; real columns sliced off in the wrapper).
        out_ref[...] = (jnp.dot(h.astype(mm_dtype), fc_w_ref[...],
                                preferred_element_type=jnp.float32)
                        + fc_b_ref[...])

    return kernel


# ----------------------------------------------------------------------------
# Weight prep helpers: gate reorder [i,f,g,o] -> [i,f,o,g], lane-pad, transpose.
# ----------------------------------------------------------------------------
def _prep_gate_weight(w, H, Hp, in_dim, in_pad, dtype):
    """w: (4H, in_dim) in PyTorch gate order [i, f, g, o].
    Returns (in_pad, 4Hp) transposed weight with gate order [i, f, o, g] and each
    gate block zero-padded from H to Hp output lanes."""
    gi, gf, gg, go = w[0:H], w[H:2 * H], w[2 * H:3 * H], w[3 * H:4 * H]
    blocks = [jnp.pad(g, ((0, Hp - H), (0, in_pad - in_dim)))
              for g in (gi, gf, go, gg)]
    return jnp.concatenate(blocks, axis=0).T.astype(dtype)


def _prep_gate_bias(b_ih, b_hh, H, Hp):
    b = (b_ih + b_hh).astype(jnp.float32)
    gi, gf, gg, go = b[0:H], b[H:2 * H], b[2 * H:3 * H], b[3 * H:4 * H]
    blocks = [jnp.pad(g, (0, Hp - H)) for g in (gi, gf, go, gg)]
    return jnp.concatenate(blocks).reshape(1, 4 * Hp)


# ----------------------------------------------------------------------------
# Wrapper: layout prep (XLA) + one fused pallas_call.
# ----------------------------------------------------------------------------
def lstm_regressor_forward(x_btf, params, matmul_dtype=jnp.bfloat16):
    """x_btf: (B, T, input_size), batch_first, as in the PyTorch module."""
    B, T, I = x_btf.shape
    H = params["lstm"][0][1].shape[1]        # w_hh: (4H, H)
    O = params["fc_w"].shape[0]
    L = len(params["lstm"])

    # Lane/sublane-aligned padded sizes (padded rows/cols are exact zeros and
    # are sliced off at the end; they never contaminate real rows/columns).
    Bp = _round_up(max(B, 1), 8)             # full sublane tiles per timestep
    Hp = _round_up(H, 128)                   # lane-aligned gate blocks
    Op = _round_up(O, 128)                   # lane-dense output store

    mm_dtype = jnp.dtype(matmul_dtype)
    use_bf16 = mm_dtype == jnp.dtype(jnp.bfloat16)
    proj_dtype = jnp.bfloat16 if use_bf16 else jnp.float32
    seq_dtype = jnp.bfloat16 if use_bf16 else jnp.float32

    # Cheap XLA prologue: time-major + batch pad (single pass over x).
    xt = jnp.transpose(x_btf, (1, 0, 2)).astype(mm_dtype)      # (T, B, I)
    if Bp != B:
        xt = jnp.pad(xt, ((0, 0), (0, Bp - B), (0, 0)))        # (T, Bp, I)

    # Pre-transposed, gate-reordered, lane-padded weights; biases folded once.
    flat_params = []
    for li, (w_ih, w_hh, b_ih, b_hh) in enumerate(params["lstm"]):
        in_dim = w_ih.shape[1]
        in_pad = in_dim if li == 0 else Hp
        flat_params.append(_prep_gate_weight(w_ih, H, Hp, in_dim, in_pad, mm_dtype))
        flat_params.append(_prep_gate_weight(w_hh, H, Hp, H, Hp, mm_dtype))
        flat_params.append(_prep_gate_bias(b_ih, b_hh, H, Hp))
    fc_w = jnp.pad(params["fc_w"], ((0, Op - O), (0, Hp - H))).T.astype(mm_dtype)
    fc_b = jnp.pad(params["fc_b"], (0, Op - O)).reshape(1, Op).astype(jnp.float32)
    flat_params += [fc_w, fc_b]

    # Time-chunked projection scratch: VMEM use independent of T (<= ~8 MiB).
    proj_step_bytes = Bp * 4 * Hp * jnp.dtype(proj_dtype).itemsize
    Tc = min(T, max(1, (8 * 2**20) // proj_step_bytes))
    unroll = 8 if Bp * 4 * Hp <= 4096 else 4

    scratch_shapes = [pltpu.VMEM((Tc, Bp, 4 * Hp), proj_dtype)]
    scratch_bytes = Tc * Bp * 4 * Hp * jnp.dtype(proj_dtype).itemsize
    if L > 1:
        scratch_shapes.append(pltpu.VMEM((T, Bp, Hp), seq_dtype))
        scratch_bytes += T * Bp * Hp * jnp.dtype(seq_dtype).itemsize

    all_inputs = [xt] + flat_params
    vmem_spec = pl.BlockSpec(memory_space=pltpu.MemorySpace.VMEM)  # untiled, no pipeline buffers
    in_specs = [vmem_spec] * len(all_inputs)

    # Explicit scoped-VMEM budget: actual residents + headroom, capped so it
    # stays within every generation's physical VMEM.
    resident = sum(int(a.size) * a.dtype.itemsize for a in all_inputs)
    resident += scratch_bytes + Bp * Op * 4
    vmem_limit = int(min(max(2 * resident + (1 << 20), 32 << 20), 96 << 20))

    kernel = _make_fused_kernel(L, T, Bp, Hp, Tc, unroll, mm_dtype,
                                proj_dtype, seq_dtype)

    y_pad = pl.pallas_call(
        kernel,
        out_shape=jax.ShapeDtypeStruct((Bp, Op), jnp.float32),
        in_specs=in_specs,
        out_specs=pl.BlockSpec(memory_space=pltpu.MemorySpace.VMEM),
        scratch_shapes=scratch_shapes,
        compiler_params=pltpu.CompilerParams(vmem_limit_bytes=vmem_limit),
    )(*all_inputs)
    return y_pad[:B, :O]


# ----------------------------------------------------------------------------
# Parameter init (mirrors nn.LSTM / nn.Linear parameter shapes & gate order)
# ----------------------------------------------------------------------------
def init_params(key, input_size, hidden_size, num_layers, output_size):
    params = {"lstm": []}
    scale = 1.0 / np.sqrt(hidden_size)
    in_sz = input_size
    for _ in range(num_layers):
        key, k1, k2, k3, k4 = jax.random.split(key, 5)
        w_ih = jax.random.uniform(k1, (4 * hidden_size, in_sz), jnp.float32, -scale, scale)
        w_hh = jax.random.uniform(k2, (4 * hidden_size, hidden_size), jnp.float32, -scale, scale)
        b_ih = jax.random.uniform(k3, (4 * hidden_size,), jnp.float32, -scale, scale)
        b_hh = jax.random.uniform(k4, (4 * hidden_size,), jnp.float32, -scale, scale)
        params["lstm"].append((w_ih, w_hh, b_ih, b_hh))
        in_sz = hidden_size
    key, k1, k2 = jax.random.split(key, 3)
    fscale = 1.0 / np.sqrt(hidden_size)
    params["fc_w"] = jax.random.uniform(k1, (output_size, hidden_size), jnp.float32, -fscale, fscale)
    params["fc_b"] = jax.random.uniform(k2, (output_size,), jnp.float32, -fscale, fscale)
    return params


# ----------------------------------------------------------------------------
# Pure-JAX reference (PyTorch gate order [i, f, g, o]) for correctness check
# ----------------------------------------------------------------------------
def _reference_forward(x_btf, params):
    def cell(carry, x_t, w_ih, w_hh, b):
        h, c = carry
        H = h.shape[1]
        g = x_t @ w_ih.T + h @ w_hh.T + b
        i = jax.nn.sigmoid(g[:, :H])
        f = jax.nn.sigmoid(g[:, H:2 * H])
        gg = jnp.tanh(g[:, 2 * H:3 * H])
        o = jax.nn.sigmoid(g[:, 3 * H:])
        c = f * c + i * gg
        h = o * jnp.tanh(c)
        return (h, c), h

    h_seq = jnp.transpose(x_btf, (1, 0, 2)).astype(jnp.float32)
    B = x_btf.shape[0]
    for (w_ih, w_hh, b_ih, b_hh) in params["lstm"]:
        H = w_hh.shape[1]
        init = (jnp.zeros((B, H), jnp.float32), jnp.zeros((B, H), jnp.float32))
        b = b_ih + b_hh
        (_, _), h_seq = lax.scan(
            functools.partial(cell, w_ih=w_ih, w_hh=w_hh, b=b), init, h_seq
        )
    return h_seq[-1] @ params["fc_w"].T + params["fc_b"]


if __name__ == "__main__":
    # Small shapes consistent with the module's forward.
    batch, seq_len = 2, 8
    input_size, hidden_size, num_layers, output_size = 8, 32, 2, 1

    key = jax.random.PRNGKey(0)
    key, kx = jax.random.split(key)
    x = jax.random.normal(kx, (batch, seq_len, input_size), jnp.float32)
    params = init_params(key, input_size, hidden_size, num_layers, output_size)

    y_ref = jax.block_until_ready(_reference_forward(x, params))

    # f32 MXU feed: tight check against the pure-JAX reference.
    y_f32 = jax.block_until_ready(
        lstm_regressor_forward(x, params, matmul_dtype=jnp.float32))
    np.testing.assert_allclose(np.asarray(y_f32), np.asarray(y_ref), atol=1e-4, rtol=1e-4)
    assert y_f32.shape == (batch, output_size)

    # Default bf16 MXU feed (gate math and h/c state stay f32): looser tolerance.
    y_bf16 = jax.block_until_ready(lstm_regressor_forward(x, params))
    np.testing.assert_allclose(np.asarray(y_bf16), np.asarray(y_ref), atol=5e-2, rtol=5e-2)
    assert y_bf16.shape == (batch, output_size)

    print("KERNEL_OK")
</pallas_src>

<mosaic_0001>
module attributes {stable_mosaic.version = 11 : i64} {
  func.func @kernel(%arg0: memref<8x8x8xf32, #tpu.memory_space<vmem>>, %arg1: memref<8x512xf32, #tpu.memory_space<vmem>>, %arg2: memref<128x512xf32, #tpu.memory_space<vmem>>, %arg3: memref<1x512xf32, #tpu.memory_space<vmem>>, %arg4: memref<128x512xf32, #tpu.memory_space<vmem>>, %arg5: memref<128x512xf32, #tpu.memory_space<vmem>>, %arg6: memref<1x512xf32, #tpu.memory_space<vmem>>, %arg7: memref<128x128xf32, #tpu.memory_space<vmem>>, %arg8: memref<1x128xf32, #tpu.memory_space<vmem>>, %arg9: memref<8x128xf32, #tpu.memory_space<vmem>>, %arg10: memref<8x8x512xf32, #tpu.memory_space<vmem>>, %arg11: memref<8x8x128xf32, #tpu.memory_space<vmem>>) attributes {dimension_semantics = [], scalar_prefetch = 0 : i64, scratch_operands = 2 : i64, tpu.core_type = #tpu.core_type<tc>} {
    %c0 = arith.constant 0 : index
    %c0_0 = arith.constant 0 : index
    %0 = vector.load %arg2[%c0, %c0_0] : memref<128x512xf32, #tpu.memory_space<vmem>>, vector<128x512xf32>
    %c0_1 = arith.constant 0 : index
    %c0_2 = arith.constant 0 : index
    %1 = vector.load %arg3[%c0_1, %c0_2] : memref<1x512xf32, #tpu.memory_space<vmem>>, vector<1x512xf32>
    %cst = arith.constant 0.000000e+00 : f32
    %2 = vector.broadcast %cst : f32 to vector<8x128xf32>
    %cst_3 = arith.constant 0.000000e+00 : f32
    %3 = vector.broadcast %cst_3 : f32 to vector<8x128xf32>
    %c0_4 = arith.constant 0 : index
    %c0_5 = arith.constant 0 : index
    %c0_6 = arith.constant 0 : index
    %4 = vector.load %arg0[%c0_4, %c0_5, %c0_6] : memref<8x8x8xf32, #tpu.memory_space<vmem>>, vector<8x8x8xf32>
    %5 = vector.shape_cast %4 : vector<8x8x8xf32> to vector<64x8xf32>
    %c0_7 = arith.constant 0 : index
    %c0_8 = arith.constant 0 : index
    %6 = vector.load %arg1[%c0_7, %c0_8] : memref<8x512xf32, #tpu.memory_space<vmem>>, vector<8x512xf32>
    %cst_9 = arith.constant dense<0.000000e+00> : vector<64x512xf32>
    %7 = tpu.matmul %5, %6, %cst_9 {dimension_numbers = #tpu.dot_dimension_numbers<[1], [0], [0], [1], [0, 0, 1, 1], [], []>} : vector<64x8xf32>, vector<8x512xf32>, vector<64x512xf32> -> vector<64x512xf32>
    %8 = vector.broadcast %1 : vector<1x512xf32> to vector<64x512xf32>
    %9 = arith.addf %7, %8 : vector<64x512xf32>
    %10 = vector.shape_cast %9 : vector<64x512xf32> to vector<8x8x512xf32>
    %c0_10 = arith.constant 0 : index
    %c0_11 = arith.constant 0 : index
    %c0_12 = arith.constant 0 : index
    %11 = vector.load %arg10[%c0_10, %c0_11, %c0_12] : memref<8x8x512xf32, #tpu.memory_space<vmem>>, vector<8x8x512xf32>
    tpu.vector_store %arg10[%c0_10, %c0_11, %c0_12], %10 {strides = array<i32>} : memref<8x8x512xf32, #tpu.memory_space<vmem>>, vector<8x8x512xf32>,
    %c0_i32 = arith.constant 0 : i32
    %12 = arith.index_cast %c0_i32 : i32 to index
    %c0_13 = arith.constant 0 : index
    %c0_14 = arith.constant 0 : index
    %13 = vector.load %arg10[%12, %c0_13, %c0_14] : memref<8x8x512xf32, #tpu.memory_space<vmem>>, vector<1x8x512xf32>
    %14 = vector.shape_cast %13 : vector<1x8x512xf32> to vector<8x512xf32>
    %cst_15 = arith.constant dense<0.000000e+00> : vector<8x512xf32>
    %15 = tpu.matmul %2, %0, %cst_15 {dimension_numbers = #tpu.dot_dimension_numbers<[1], [0], [0], [1], [0, 0, 1, 1], [], []>} : vector<8x128xf32>, vector<128x512xf32>, vector<8x512xf32> -> vector<8x512xf32>
    %16 = arith.addf %14, %15 : vector<8x512xf32>
    %17 = vector.extract_strided_slice %16 {offsets = [0, 0], sizes = [8, 384], strides = [1, 1]} : vector<8x512xf32> to vector<8x384xf32>
    %18 = arith.negf %17 : vector<8x384xf32>
    %19 = math.exp %18 : vector<8x384xf32>
    %cst_16 = arith.constant 1.000000e+00 : f32
    %20 = vector.broadcast %cst_16 : f32 to vector<8x384xf32>
    %21 = arith.addf %20, %19 : vector<8x384xf32>
    %22 = arith.divf %20, %21 : vector<8x384xf32>
    %23 = vector.extract_strided_slice %16 {offsets = [0, 384], sizes = [8, 128], strides = [1, 1]} : vector<8x512xf32> to vector<8x128xf32>
    %24 = math.tanh %23 : vector<8x128xf32>
    %25 = vector.extract_strided_slice %22 {offsets = [0, 0], sizes = [8, 128], strides = [1, 1]} : vector<8x384xf32> to vector<8x128xf32>
    %26 = vector.extract_strided_slice %22 {offsets = [0, 128], sizes = [8, 128], strides = [1, 1]} : vector<8x384xf32> to vector<8x128xf32>
    %27 = vector.extract_strided_slice %22 {offsets = [0, 256], sizes = [8, 128], strides = [1, 1]} : vector<8x384xf32> to vector<8x128xf32>
    %28 = arith.mulf %26, %3 : vector<8x128xf32>
    %29 = arith.mulf %25, %24 : vector<8x128xf32>
    %30 = arith.addf %28, %29 : vector<8x128xf32>
    %31 = math.tanh %30 : vector<8x128xf32>
    %32 = arith.mulf %27, %31 : vector<8x128xf32>
    %c0_i32_17 = arith.constant 0 : i32
    %33 = arith.addi %c0_i32_17, %c0_i32 : i32
    %34 = arith.index_cast %33 : i32 to index
    %c0_18 = arith.constant 0 : index
    %c0_19 = arith.constant 0 : index
    %35 = vector.load %arg11[%34, %c0_18, %c0_19] : memref<8x8x128xf32, #tpu.memory_space<vmem>>, vector<1x8x128xf32>
    %36 = vector.shape_cast %35 : vector<1x8x128xf32> to vector<8x128xf32>
    %37 = vector.shape_cast %32 : vector<8x128xf32> to vector<1x8x128xf32>
    tpu.vector_store %arg11[%34, %c0_18, %c0_19], %37 {strides = array<i32>} : memref<8x8x128xf32, #tpu.memory_space<vmem>>, vector<1x8x128xf32>,
    %c1_i32 = arith.constant 1 : i32
    %38 = arith.index_cast %c1_i32 : i32 to index
    %c0_20 = arith.constant 0 : index
    %c0_21 = arith.constant 0 : index
    %39 = vector.load %arg10[%38, %c0_20, %c0_21] : memref<8x8x512xf32, #tpu.memory_space<vmem>>, vector<1x8x512xf32>
    %40 = vector.shape_cast %39 : vector<1x8x512xf32> to vector<8x512xf32>
    %cst_22 = arith.constant dense<0.000000e+00> : vector<8x512xf32>
    %41 = tpu.matmul %32, %0, %cst_22 {dimension_numbers = #tpu.dot_dimension_numbers<[1], [0], [0], [1], [0, 0, 1, 1], [], []>} : vector<8x128xf32>, vector<128x512xf32>, vector<8x512xf32> -> vector<8x512xf32>
    %42 = arith.addf %40, %41 : vector<8x512xf32>
    %43 = vector.extract_strided_slice %42 {offsets = [0, 0], sizes = [8, 384], strides = [1, 1]} : vector<8x512xf32> to vector<8x384xf32>
    %44 = arith.negf %43 : vector<8x384xf32>
    %45 = math.exp %44 : vector<8x384xf32>
    %cst_23 = arith.constant 1.000000e+00 : f32
    %46 = vector.broadcast %cst_23 : f32 to vector<8x384xf32>
    %47 = arith.addf %46, %45 : vector<8x384xf32>
    %48 = arith.divf %46, %47 : vector<8x384xf32>
    %49 = vector.extract_strided_slice %42 {offsets = [0, 384], sizes = [8, 128], strides = [1, 1]} : vector<8x512xf32> to vector<8x128xf32>
    %50 = math.tanh %49 : vector<8x128xf32>
    %51 = vector.extract_strided_slice %48 {offsets = [0, 0], sizes = [8, 128], strides = [1, 1]} : vector<8x384xf32> to vector<8x128xf32>
    %52 = vector.extract_strided_slice %48 {offsets = [0, 128], sizes = [8, 128], strides = [1, 1]} : vector<8x384xf32> to vector<8x128xf32>
    %53 = vector.extract_strided_slice %48 {offsets = [0, 256], sizes = [8, 128], strides = [1, 1]} : vector<8x384xf32> to vector<8x128xf32>
    %54 = arith.mulf %52, %30 : vector<8x128xf32>
    %55 = arith.mulf %51, %50 : vector<8x128xf32>
    %56 = arith.addf %54, %55 : vector<8x128xf32>
    %57 = math.tanh %56 : vector<8x128xf32>
    %58 = arith.mulf %53, %57 : vector<8x128xf32>
    %c0_i32_24 = arith.constant 0 : i32
    %59 = arith.addi %c0_i32_24, %c1_i32 : i32
    %60 = arith.index_cast %59 : i32 to index
    %c0_25 = arith.constant 0 : index
    %c0_26 = arith.constant 0 : index
    %61 = vector.load %arg11[%60, %c0_25, %c0_26] : memref<8x8x128xf32, #tpu.memory_space<vmem>>, vector<1x8x128xf32>
    %62 = vector.shape_cast %61 : vector<1x8x128xf32> to vector<8x128xf32>
    %63 = vector.shape_cast %58 : vector<8x128xf32> to vector<1x8x128xf32>
    tpu.vector_store %arg11[%60, %c0_25, %c0_26], %63 {strides = array<i32>} : memref<8x8x128xf32, #tpu.memory_space<vmem>>, vector<1x8x128xf32>,
    %c2_i32 = arith.constant 2 : i32
    %64 = arith.index_cast %c2_i32 : i32 to index
    %c0_27 = arith.constant 0 : index
    %c0_28 = arith.constant 0 : index
    %65 = vector.load %arg10[%64, %c0_27, %c0_28] : memref<8x8x512xf32, #tpu.memory_space<vmem>>, vector<1x8x512xf32>
    %66 = vector.shape_cast %65 : vector<1x8x512xf32> to vector<8x512xf32>
    %cst_29 = arith.constant dense<0.000000e+00> : vector<8x512xf32>
    %67 = tpu.matmul %58, %0, %cst_29 {dimension_numbers = #tpu.dot_dimension_numbers<[1], [0], [0], [1], [0, 0, 1, 1], [], []>} : vector<8x128xf32>, vector<128x512xf32>, vector<8x512xf32> -> vector<8x512xf32>
    %68 = arith.addf %66, %67 : vector<8x512xf32>
    %69 = vector.extract_strided_slice %68 {offsets = [0, 0], sizes = [8, 384], strides = [1, 1]} : vector<8x512xf32> to vector<8x384xf32>
    %70 = arith.negf %69 : vector<8x384xf32>
    %71 = math.exp %70 : vector<8x384xf32>
    %cst_30 = arith.constant 1.000000e+00 : f32
    %72 = vector.broadcast %cst_30 : f32 to vector<8x384xf32>
    %73 = arith.addf %72, %71 : vector<8x384xf32>
    %74 = arith.divf %72, %73 : vector<8x384xf32>
    %75 = vector.extract_strided_slice %68 {offsets = [0, 384], sizes = [8, 128], strides = [1, 1]} : vector<8x512xf32> to vector<8x128xf32>
    %76 = math.tanh %75 : vector<8x128xf32>
    %77 = vector.extract_strided_slice %74 {offsets = [0, 0], sizes = [8, 128], strides = [1, 1]} : vector<8x384xf32> to vector<8x128xf32>
    %78 = vector.extract_strided_slice %74 {offsets = [0, 128], sizes = [8, 128], strides = [1, 1]} : vector<8x384xf32> to vector<8x128xf32>
    %79 = vector.extract_strided_slice %74 {offsets = [0, 256], sizes = [8, 128], strides = [1, 1]} : vector<8x384xf32> to vector<8x128xf32>
    %80 = arith.mulf %78, %56 : vector<8x128xf32>
    %81 = arith.mulf %77, %76 : vector<8x128xf32>
    %82 = arith.addf %80, %81 : vector<8x128xf32>
    %83 = math.tanh %82 : vector<8x128xf32>
    %84 = arith.mulf %79, %83 : vector<8x128xf32>
    %c0_i32_31 = arith.constant 0 : i32
    %85 = arith.addi %c0_i32_31, %c2_i32 : i32
    %86 = arith.index_cast %85 : i32 to index
    %c0_32 = arith.constant 0 : index
    %c0_33 = arith.constant 0 : index
    %87 = vector.load %arg11[%86, %c0_32, %c0_33] : memref<8x8x128xf32, #tpu.memory_space<vmem>>, vector<1x8x128xf32>
    %88 = vector.shape_cast %87 : vector<1x8x128xf32> to vector<8x128xf32>
    %89 = vector.shape_cast %84 : vector<8x128xf32> to vector<1x8x128xf32>
    tpu.vector_store %arg11[%86, %c0_32, %c0_33], %89 {strides = array<i32>} : memref<8x8x128xf32, #tpu.memory_space<vmem>>, vector<1x8x128xf32>,
    %c3_i32 = arith.constant 3 : i32
    %90 = arith.index_cast %c3_i32 : i32 to index
    %c0_34 = arith.constant 0 : index
    %c0_35 = arith.constant 0 : index
    %91 = vector.load %arg10[%90, %c0_34, %c0_35] : memref<8x8x512xf32, #tpu.memory_space<vmem>>, vector<1x8x512xf32>
    %92 = vector.shape_cast %91 : vector<1x8x512xf32> to vector<8x512xf32>
    %cst_36 = arith.constant dense<0.000000e+00> : vector<8x512xf32>
    %93 = tpu.matmul %84, %0, %cst_36 {dimension_numbers = #tpu.dot_dimension_numbers<[1], [0], [0], [1], [0, 0, 1, 1], [], []>} : vector<8x128xf32>, vector<128x512xf32>, vector<8x512xf32> -> vector<8x512xf32>
    %94 = arith.addf %92, %93 : vector<8x512xf32>
    %95 = vector.extract_strided_slice %94 {offsets = [0, 0], sizes = [8, 384], strides = [1, 1]} : vector<8x512xf32> to vector<8x384xf32>
    %96 = arith.negf %95 : vector<8x384xf32>
    %97 = math.exp %96 : vector<8x384xf32>
    %cst_37 = arith.constant 1.000000e+00 : f32
    %98 = vector.broadcast %cst_37 : f32 to vector<8x384xf32>
    %99 = arith.addf %98, %97 : vector<8x384xf32>
    %100 = arith.divf %98, %99 : vector<8x384xf32>
    %101 = vector.extract_strided_slice %94 {offsets = [0, 384], sizes = [8, 128], strides = [1, 1]} : vector<8x512xf32> to vector<8x128xf32>
    %102 = math.tanh %101 : vector<8x128xf32>
    %103 = vector.extract_strided_slice %100 {offsets = [0, 0], sizes = [8, 128], strides = [1, 1]} : vector<8x384xf32> to vector<8x128xf32>
    %104 = vector.extract_strided_slice %100 {offsets = [0, 128], sizes = [8, 128], strides = [1, 1]} : vector<8x384xf32> to vector<8x128xf32>
    %105 = vector.extract_strided_slice %100 {offsets = [0, 256], sizes = [8, 128], strides = [1, 1]} : vector<8x384xf32> to vector<8x128xf32>
    %106 = arith.mulf %104, %82 : vector<8x128xf32>
    %107 = arith.mulf %103, %102 : vector<8x128xf32>
    %108 = arith.addf %106, %107 : vector<8x128xf32>
    %109 = math.tanh %108 : vector<8x128xf32>
    %110 = arith.mulf %105, %109 : vector<8x128xf32>
    %c0_i32_38 = arith.constant 0 : i32
    %111 = arith.addi %c0_i32_38, %c3_i32 : i32
    %112 = arith.index_cast %111 : i32 to index
    %c0_39 = arith.constant 0 : index
    %c0_40 = arith.constant 0 : index
    %113 = vector.load %arg11[%112, %c0_39, %c0_40] : memref<8x8x128xf32, #tpu.memory_space<vmem>>, vector<1x8x128xf32>
    %114 = vector.shape_cast %113 : vector<1x8x128xf32> to vector<8x128xf32>
    %115 = vector.shape_cast %110 : vector<8x128xf32> to vector<1x8x128xf32>
    tpu.vector_store %arg11[%112, %c0_39, %c0_40], %115 {strides = array<i32>} : memref<8x8x128xf32, #tpu.memory_space<vmem>>, vector<1x8x128xf32>,
    %c4_i32 = arith.constant 4 : i32
    %116 = arith.index_cast %c4_i32 : i32 to index
    %c0_41 = arith.constant 0 : index
    %c0_42 = arith.constant 0 : index
    %117 = vector.load %arg10[%116, %c0_41, %c0_42] : memref<8x8x512xf32, #tpu.memory_space<vmem>>, vector<1x8x512xf32>
    %118 = vector.shape_cast %117 : vector<1x8x512xf32> to vector<8x512xf32>
    %cst_43 = arith.constant dense<0.000000e+00> : vector<8x512xf32>
    %119 = tpu.matmul %110, %0, %cst_43 {dimension_numbers = #tpu.dot_dimension_numbers<[1], [0], [0], [1], [0, 0, 1, 1], [], []>} : vector<8x128xf32>, vector<128x512xf32>, vector<8x512xf32> -> vector<8x512xf32>
    %120 = arith.addf %118, %119 : vector<8x512xf32>
    %121 = vector.extract_strided_slice %120 {offsets = [0, 0], sizes = [8, 384], strides = [1, 1]} : vector<8x512xf32> to vector<8x384xf32>
    %122 = arith.negf %121 : vector<8x384xf32>
    %123 = math.exp %122 : vector<8x384xf32>
    %cst_44 = arith.constant 1.000000e+00 : f32
    %124 = vector.broadcast %cst_44 : f32 to vector<8x384xf32>
    %125 = arith.addf %124, %123 : vector<8x384xf32>
    %126 = arith.divf %124, %125 : vector<8x384xf32>
    %127 = vector.extract_strided_slice %120 {offsets = [0, 384], sizes = [8, 128], strides = [1, 1]} : vector<8x512xf32> to vector<8x128xf32>
    %128 = math.tanh %127 : vector<8x128xf32>
    %129 = vector.extract_strided_slice %126 {offsets = [0, 0], sizes = [8, 128], strides = [1, 1]} : vector<8x384xf32> to vector<8x128xf32>
    %130 = vector.extract_strided_slice %126 {offsets = [0, 128], sizes = [8, 128], strides = [1, 1]} : vector<8x384xf32> to vector<8x128xf32>
    %131 = vector.extract_strided_slice %126 {offsets = [0, 256], sizes = [8, 128], strides = [1, 1]} : vector<8x384xf32> to vector<8x128xf32>
    %132 = arith.mulf %130, %108 : vector<8x128xf32>
    %133 = arith.mulf %129, %128 : vector<8x128xf32>
    %134 = arith.addf %132, %133 : vector<8x128xf32>
    %135 = math.tanh %134 : vector<8x128xf32>
    %136 = arith.mulf %131, %135 : vector<8x128xf32>
    %c0_i32_45 = arith.constant 0 : i32
    %137 = arith.addi %c0_i32_45, %c4_i32 : i32
    %138 = arith.index_cast %137 : i32 to index
    %c0_46 = arith.constant 0 : index
    %c0_47 = arith.constant 0 : index
    %139 = vector.load %arg11[%138, %c0_46, %c0_47] : memref<8x8x128xf32, #tpu.memory_space<vmem>>, vector<1x8x128xf32>
    %140 = vector.shape_cast %139 : vector<1x8x128xf32> to vector<8x128xf32>
    %141 = vector.shape_cast %136 : vector<8x128xf32> to vector<1x8x128xf32>
    tpu.vector_store %arg11[%138, %c0_46, %c0_47], %141 {strides = array<i32>} : memref<8x8x128xf32, #tpu.memory_space<vmem>>, vector<1x8x128xf32>,
    %c5_i32 = arith.constant 5 : i32
    %142 = arith.index_cast %c5_i32 : i32 to index
    %c0_48 = arith.constant 0 : index
    %c0_49 = arith.constant 0 : index
    %143 = vector.load %arg10[%142, %c0_48, %c0_49] : memref<8x8x512xf32, #tpu.memory_space<vmem>>, vector<1x8x512xf32>
    %144 = vector.shape_cast %143 : vector<1x8x512xf32> to vector<8x512xf32>
    %cst_50 = arith.constant dense<0.000000e+00> : vector<8x512xf32>
    %145 = tpu.matmul %136, %0, %cst_50 {dimension_numbers = #tpu.dot_dimension_numbers<[1], [0], [0], [1], [0, 0, 1, 1], [], []>} : vector<8x128xf32>, vector<128x512xf32>, vector<8x512xf32> -> vector<8x512xf32>
    %146 = arith.addf %144, %145 : vector<8x512xf32>
    %147 = vector.extract_strided_slice %146 {offsets = [0, 0], sizes = [8, 384], strides = [1, 1]} : vector<8x512xf32> to vector<8x384xf32>
    %148 = arith.negf %147 : vector<8x384xf32>
    %149 = math.exp %148 : vector<8x384xf32>
    %cst_51 = arith.constant 1.000000e+00 : f32
    %150 = vector.broadcast %cst_51 : f32 to vector<8x384xf32>
    %151 = arith.addf %150, %149 : vector<8x384xf32>
    %152 = arith.divf %150, %151 : vector<8x384xf32>
    %153 = vector.extract_strided_slice %146 {offsets = [0, 384], sizes = [8, 128], strides = [1, 1]} : vector<8x512xf32> to vector<8x128xf32>
    %154 = math.tanh %153 : vector<8x128xf32>
    %155 = vector.extract_strided_slice %152 {offsets = [0, 0], sizes = [8, 128], strides = [1, 1]} : vector<8x384xf32> to vector<8x128xf32>
    %156 = vector.extract_strided_slice %152 {offsets = [0, 128], sizes = [8, 128], strides = [1, 1]} : vector<8x384xf32> to vector<8x128xf32>
    %157 = vector.extract_strided_slice %152 {offsets = [0, 256], sizes = [8, 128], strides = [1, 1]} : vector<8x384xf32> to vector<8x128xf32>
    %158 = arith.mulf %156, %134 : vector<8x128xf32>
    %159 = arith.mulf %155, %154 : vector<8x128xf32>
    %160 = arith.addf %158, %159 : vector<8x128xf32>
    %161 = math.tanh %160 : vector<8x128xf32>
    %162 = arith.mulf %157, %161 : vector<8x128xf32>
    %c0_i32_52 = arith.constant 0 : i32
    %163 = arith.addi %c0_i32_52, %c5_i32 : i32
    %164 = arith.index_cast %163 : i32 to index
    %c0_53 = arith.constant 0 : index
    %c0_54 = arith.constant 0 : index
    %165 = vector.load %arg11[%164, %c0_53, %c0_54] : memref<8x8x128xf32, #tpu.memory_space<vmem>>, vector<1x8x128xf32>
    %166 = vector.shape_cast %165 : vector<1x8x128xf32> to vector<8x128xf32>
    %167 = vector.shape_cast %162 : vector<8x128xf32> to vector<1x8x128xf32>
    tpu.vector_store %arg11[%164, %c0_53, %c0_54], %167 {strides = array<i32>} : memref<8x8x128xf32, #tpu.memory_space<vmem>>, vector<1x8x128xf32>,
    %c6_i32 = arith.constant 6 : i32
    %168 = arith.index_cast %c6_i32 : i32 to index
    %c0_55 = arith.constant 0 : index
    %c0_56 = arith.constant 0 : index
    %169 = vector.load %arg10[%168, %c0_55, %c0_56] : memref<8x8x512xf32, #tpu.memory_space<vmem>>, vector<1x8x512xf32>
    %170 = vector.shape_cast %169 : vector<1x8x512xf32> to vector<8x512xf32>
    %cst_57 = arith.constant dense<0.000000e+00> : vector<8x512xf32>
    %171 = tpu.matmul %162, %0, %cst_57 {dimension_numbers = #tpu.dot_dimension_numbers<[1], [0], [0], [1], [0, 0, 1, 1], [], []>} : vector<8x128xf32>, vector<128x512xf32>, vector<8x512xf32> -> vector<8x512xf32>
    %172 = arith.addf %170, %171 : vector<8x512xf32>
    %173 = vector.extract_strided_slice %172 {offsets = [0, 0], sizes = [8, 384], strides = [1, 1]} : vector<8x512xf32> to vector<8x384xf32>
    %174 = arith.negf %173 : vector<8x384xf32>
    %175 = math.exp %174 : vector<8x384xf32>
    %cst_58 = arith.constant 1.000000e+00 : f32
    %176 = vector.broadcast %cst_58 : f32 to vector<8x384xf32>
    %177 = arith.addf %176, %175 : vector<8x384xf32>
    %178 = arith.divf %176, %177 : vector<8x384xf32>
    %179 = vector.extract_strided_slice %172 {offsets = [0, 384], sizes = [8, 128], strides = [1, 1]} : vector<8x512xf32> to vector<8x128xf32>
    %180 = math.tanh %179 : vector<8x128xf32>
    %181 = vector.extract_strided_slice %178 {offsets = [0, 0], sizes = [8, 128], strides = [1, 1]} : vector<8x384xf32> to vector<8x128xf32>
    %182 = vector.extract_strided_slice %178 {offsets = [0, 128], sizes = [8, 128], strides = [1, 1]} : vector<8x384xf32> to vector<8x128xf32>
    %183 = vector.extract_strided_slice %178 {offsets = [0, 256], sizes = [8, 128], strides = [1, 1]} : vector<8x384xf32> to vector<8x128xf32>
    %184 = arith.mulf %182, %160 : vector<8x128xf32>
    %185 = arith.mulf %181, %180 : vector<8x128xf32>
    %186 = arith.addf %184, %185 : vector<8x128xf32>
    %187 = math.tanh %186 : vector<8x128xf32>
    %188 = arith.mulf %183, %187 : vector<8x128xf32>
    %c0_i32_59 = arith.constant 0 : i32
    %189 = arith.addi %c0_i32_59, %c6_i32 : i32
    %190 = arith.index_cast %189 : i32 to index
    %c0_60 = arith.constant 0 : index
    %c0_61 = arith.constant 0 : index
    %191 = vector.load %arg11[%190, %c0_60, %c0_61] : memref<8x8x128xf32, #tpu.memory_space<vmem>>, vector<1x8x128xf32>
    %192 = vector.shape_cast %191 : vector<1x8x128xf32> to vector<8x128xf32>
    %193 = vector.shape_cast %188 : vector<8x128xf32> to vector<1x8x128xf32>
    tpu.vector_store %arg11[%190, %c0_60, %c0_61], %193 {strides = array<i32>} : memref<8x8x128xf32, #tpu.memory_space<vmem>>, vector<1x8x128xf32>,
    %c7_i32 = arith.constant 7 : i32
    %194 = arith.index_cast %c7_i32 : i32 to index
    %c0_62 = arith.constant 0 : index
    %c0_63 = arith.constant 0 : index
    %195 = vector.load %arg10[%194, %c0_62, %c0_63] : memref<8x8x512xf32, #tpu.memory_space<vmem>>, vector<1x8x512xf32>
    %196 = vector.shape_cast %195 : vector<1x8x512xf32> to vector<8x512xf32>
    %cst_64 = arith.constant dense<0.000000e+00> : vector<8x512xf32>
    %197 = tpu.matmul %188, %0, %cst_64 {dimension_numbers = #tpu.dot_dimension_numbers<[1], [0], [0], [1], [0, 0, 1, 1], [], []>} : vector<8x128xf32>, vector<128x512xf32>, vector<8x512xf32> -> vector<8x512xf32>
    %198 = arith.addf %196, %197 : vector<8x512xf32>
    %199 = vector.extract_strided_slice %198 {offsets = [0, 0], sizes = [8, 384], strides = [1, 1]} : vector<8x512xf32> to vector<8x384xf32>
    %200 = arith.negf %199 : vector<8x384xf32>
    %201 = math.exp %200 : vector<8x384xf32>
    %cst_65 = arith.constant 1.000000e+00 : f32
    %202 = vector.broadcast %cst_65 : f32 to vector<8x384xf32>
    %203 = arith.addf %202, %201 : vector<8x384xf32>
    %204 = arith.divf %202, %203 : vector<8x384xf32>
    %205 = vector.extract_strided_slice %198 {offsets = [0, 384], sizes = [8, 128], strides = [1, 1]} : vector<8x512xf32> to vector<8x128xf32>
    %206 = math.tanh %205 : vector<8x128xf32>
    %207 = vector.extract_strided_slice %204 {offsets = [0, 0], sizes = [8, 128], strides = [1, 1]} : vector<8x384xf32> to vector<8x128xf32>
    %208 = vector.extract_strided_slice %204 {offsets = [0, 128], sizes = [8, 128], strides = [1, 1]} : vector<8x384xf32> to vector<8x128xf32>
    %209 = vector.extract_strided_slice %204 {offsets = [0, 256], sizes = [8, 128], strides = [1, 1]} : vector<8x384xf32> to vector<8x128xf32>
    %210 = arith.mulf %208, %186 : vector<8x128xf32>
    %211 = arith.mulf %207, %206 : vector<8x128xf32>
    %212 = arith.addf %210, %211 : vector<8x128xf32>
    %213 = math.tanh %212 : vector<8x128xf32>
    %214 = arith.mulf %209, %213 : vector<8x128xf32>
    %c0_i32_66 = arith.constant 0 : i32
    %215 = arith.addi %c0_i32_66, %c7_i32 : i32
    %216 = arith.index_cast %215 : i32 to index
    %c0_67 = arith.constant 0 : index
    %c0_68 = arith.constant 0 : index
    %217 = vector.load %arg11[%216, %c0_67, %c0_68] : memref<8x8x128xf32, #tpu.memory_space<vmem>>, vector<1x8x128xf32>
    %218 = vector.shape_cast %217 : vector<1x8x128xf32> to vector<8x128xf32>
    %219 = vector.shape_cast %214 : vector<8x128xf32> to vector<1x8x128xf32>
    tpu.vector_store %arg11[%216, %c0_67, %c0_68], %219 {strides = array<i32>} : memref<8x8x128xf32, #tpu.memory_space<vmem>>, vector<1x8x128xf32>,
    %c8_i32 = arith.constant 8 : i32
    %c0_69 = arith.constant 0 : index
    %c0_70 = arith.constant 0 : index
    %220 = vector.load %arg5[%c0_69, %c0_70] : memref<128x512xf32, #tpu.memory_space<vmem>>, vector<128x512xf32>
    %c0_71 = arith.constant 0 : index
    %c0_72 = arith.constant 0 : index
    %221 = vector.load %arg6[%c0_71, %c0_72] : memref<1x512xf32, #tpu.memory_space<vmem>>, vector<1x512xf32>
    %cst_73 = arith.constant 0.000000e+00 : f32
    %222 = vector.broadcast %cst_73 : f32 to vector<8x128xf32>
    %cst_74 = arith.constant 0.000000e+00 : f32
    %223 = vector.broadcast %cst_74 : f32 to vector<8x128xf32>
    %c0_75 = arith.constant 0 : index
    %c0_76 = arith.constant 0 : index
    %c0_77 = arith.constant 0 : index
    %224 = vector.load %arg11[%c0_75, %c0_76, %c0_77] : memref<8x8x128xf32, #tpu.memory_space<vmem>>, vector<8x8x128xf32>
    %225 = vector.shape_cast %224 : vector<8x8x128xf32> to vector<64x128xf32>
    %c0_78 = arith.constant 0 : index
    %c0_79 = arith.constant 0 : index
    %226 = vector.load %arg4[%c0_78, %c0_79] : memref<128x512xf32, #tpu.memory_space<vmem>>, vector<128x512xf32>
    %cst_80 = arith.constant dense<0.000000e+00> : vector<64x512xf32>
    %227 = tpu.matmul %225, %226, %cst_80 {dimension_numbers = #tpu.dot_dimension_numbers<[1], [0], [0], [1], [0, 0, 1, 1], [], []>} : vector<64x128xf32>, vector<128x512xf32>, vector<64x512xf32> -> vector<64x512xf32>
    %228 = vector.broadcast %221 : vector<1x512xf32> to vector<64x512xf32>
    %229 = arith.addf %227, %228 : vector<64x512xf32>
    %230 = vector.shape_cast %229 : vector<64x512xf32> to vector<8x8x512xf32>
    %c0_81 = arith.constant 0 : index
    %c0_82 = arith.constant 0 : index
    %c0_83 = arith.constant 0 : index
    %231 = vector.load %arg10[%c0_81, %c0_82, %c0_83] : memref<8x8x512xf32, #tpu.memory_space<vmem>>, vector<8x8x512xf32>
    tpu.vector_store %arg10[%c0_81, %c0_82, %c0_83], %230 {strides = array<i32>} : memref<8x8x512xf32, #tpu.memory_space<vmem>>, vector<8x8x512xf32>,
    %c0_i32_84 = arith.constant 0 : i32
    %232 = arith.index_cast %c0_i32_84 : i32 to index
    %c0_85 = arith.constant 0 : index
    %c0_86 = arith.constant 0 : index
    %233 = vector.load %arg10[%232, %c0_85, %c0_86] : memref<8x8x512xf32, #tpu.memory_space<vmem>>, vector<1x8x512xf32>
    %234 = vector.shape_cast %233 : vector<1x8x512xf32> to vector<8x512xf32>
    %cst_87 = arith.constant dense<0.000000e+00> : vector<8x512xf32>
    %235 = tpu.matmul %222, %220, %cst_87 {dimension_numbers = #tpu.dot_dimension_numbers<[1], [0], [0], [1], [0, 0, 1, 1], [], []>} : vector<8x128xf32>, vector<128x512xf32>, vector<8x512xf32> -> vector<8x512xf32>
    %236 = arith.addf %234, %235 : vector<8x512xf32>
    %237 = vector.extract_strided_slice %236 {offsets = [0, 0], sizes = [8, 384], strides = [1, 1]} : vector<8x512xf32> to vector<8x384xf32>
    %238 = arith.negf %237 : vector<8x384xf32>
    %239 = math.exp %238 : vector<8x384xf32>
    %cst_88 = arith.constant 1.000000e+00 : f32
    %240 = vector.broadcast %cst_88 : f32 to vector<8x384xf32>
    %241 = arith.addf %240, %239 : vector<8x384xf32>
    %242 = arith.divf %240, %241 : vector<8x384xf32>
    %243 = vector.extract_strided_slice %236 {offsets = [0, 384], sizes = [8, 128], strides = [1, 1]} : vector<8x512xf32> to vector<8x128xf32>
    %244 = math.tanh %243 : vector<8x128xf32>
    %245 = vector.extract_strided_slice %242 {offsets = [0, 0], sizes = [8, 128], strides = [1, 1]} : vector<8x384xf32> to vector<8x128xf32>
    %246 = vector.extract_strided_slice %242 {offsets = [0, 128], sizes = [8, 128], strides = [1, 1]} : vector<8x384xf32> to vector<8x128xf32>
    %247 = vector.extract_strided_slice %242 {offsets = [0, 256], sizes = [8, 128], strides = [1, 1]} : vector<8x384xf32> to vector<8x128xf32>
    %248 = arith.mulf %246, %223 : vector<8x128xf32>
    %249 = arith.mulf %245, %244 : vector<8x128xf32>
    %250 = arith.addf %248, %249 : vector<8x128xf32>
    %251 = math.tanh %250 : vector<8x128xf32>
    %252 = arith.mulf %247, %251 : vector<8x128xf32>
    %c1_i32_89 = arith.constant 1 : i32
    %253 = arith.index_cast %c1_i32_89 : i32 to index
    %c0_90 = arith.constant 0 : index
    %c0_91 = arith.constant 0 : index
    %254 = vector.load %arg10[%253, %c0_90, %c0_91] : memref<8x8x512xf32, #tpu.memory_space<vmem>>, vector<1x8x512xf32>
    %255 = vector.shape_cast %254 : vector<1x8x512xf32> to vector<8x512xf32>
    %cst_92 = arith.constant dense<0.000000e+00> : vector<8x512xf32>
    %256 = tpu.matmul %252, %220, %cst_92 {dimension_numbers = #tpu.dot_dimension_numbers<[1], [0], [0], [1], [0, 0, 1, 1], [], []>} : vector<8x128xf32>, vector<128x512xf32>, vector<8x512xf32> -> vector<8x512xf32>
    %257 = arith.addf %255, %256 : vector<8x512xf32>
    %258 = vector.extract_strided_slice %257 {offsets = [0, 0], sizes = [8, 384], strides = [1, 1]} : vector<8x512xf32> to vector<8x384xf32>
    %259 = arith.negf %258 : vector<8x384xf32>
    %260 = math.exp %259 : vector<8x384xf32>
    %cst_93 = arith.constant 1.000000e+00 : f32
    %261 = vector.broadcast %cst_93 : f32 to vector<8x384xf32>
    %262 = arith.addf %261, %260 : vector<8x384xf32>
    %263 = arith.divf %261, %262 : vector<8x384xf32>
    %264 = vector.extract_strided_slice %257 {offsets = [0, 384], sizes = [8, 128], strides = [1, 1]} : vector<8x512xf32> to vector<8x128xf32>
    %265 = math.tanh %264 : vector<8x128xf32>
    %266 = vector.extract_strided_slice %263 {offsets = [0, 0], sizes = [8, 128], strides = [1, 1]} : vector<8x384xf32> to vector<8x128xf32>
    %267 = vector.extract_strided_slice %263 {offsets = [0, 128], sizes = [8, 128], strides = [1, 1]} : vector<8x384xf32> to vector<8x128xf32>
    %268 = vector.extract_strided_slice %263 {offsets = [0, 256], sizes = [8, 128], strides = [1, 1]} : vector<8x384xf32> to vector<8x128xf32>
    %269 = arith.mulf %267, %250 : vector<8x128xf32>
    %270 = arith.mulf %266, %265 : vector<8x128xf32>
    %271 = arith.addf %269, %270 : vector<8x128xf32>
    %272 = math.tanh %271 : vector<8x128xf32>
    %273 = arith.mulf %268, %272 : vector<8x128xf32>
    %c2_i32_94 = arith.constant 2 : i32
    %274 = arith.index_cast %c2_i32_94 : i32 to index
    %c0_95 = arith.constant 0 : index
    %c0_96 = arith.constant 0 : index
    %275 = vector.load %arg10[%274, %c0_95, %c0_96] : memref<8x8x512xf32, #tpu.memory_space<vmem>>, vector<1x8x512xf32>
    %276 = vector.shape_cast %275 : vector<1x8x512xf32> to vector<8x512xf32>
    %cst_97 = arith.constant dense<0.000000e+00> : vector<8x512xf32>
    %277 = tpu.matmul %273, %220, %cst_97 {dimension_numbers = #tpu.dot_dimension_numbers<[1], [0], [0], [1], [0, 0, 1, 1], [], []>} : vector<8x128xf32>, vector<128x512xf32>, vector<8x512xf32> -> vector<8x512xf32>
    %278 = arith.addf %276, %277 : vector<8x512xf32>
    %279 = vector.extract_strided_slice %278 {offsets = [0, 0], sizes = [8, 384], strides = [1, 1]} : vector<8x512xf32> to vector<8x384xf32>
    %280 = arith.negf %279 : vector<8x384xf32>
    %281 = math.exp %280 : vector<8x384xf32>
    %cst_98 = arith.constant 1.000000e+00 : f32
    %282 = vector.broadcast %cst_98 : f32 to vector<8x384xf32>
    %283 = arith.addf %282, %281 : vector<8x384xf32>
    %284 = arith.divf %282, %283 : vector<8x384xf32>
    %285 = vector.extract_strided_slice %278 {offsets = [0, 384], sizes = [8, 128], strides = [1, 1]} : vector<8x512xf32> to vector<8x128xf32>
    %286 = math.tanh %285 : vector<8x128xf32>
    %287 = vector.extract_strided_slice %284 {offsets = [0, 0], sizes = [8, 128], strides = [1, 1]} : vector<8x384xf32> to vector<8x128xf32>
    %288 = vector.extract_strided_slice %284 {offsets = [0, 128], sizes = [8, 128], strides = [1, 1]} : vector<8x384xf32> to vector<8x128xf32>
    %289 = vector.extract_strided_slice %284 {offsets = [0, 256], sizes = [8, 128], strides = [1, 1]} : vector<8x384xf32> to vector<8x128xf32>
    %290 = arith.mulf %288, %271 : vector<8x128xf32>
    %291 = arith.mulf %287, %286 : vector<8x128xf32>
    %292 = arith.addf %290, %291 : vector<8x128xf32>
    %293 = math.tanh %292 : vector<8x128xf32>
    %294 = arith.mulf %289, %293 : vector<8x128xf32>
    %c3_i32_99 = arith.constant 3 : i32
    %295 = arith.index_cast %c3_i32_99 : i32 to index
    %c0_100 = arith.constant 0 : index
    %c0_101 = arith.constant 0 : index
    %296 = vector.load %arg10[%295, %c0_100, %c0_101] : memref<8x8x512xf32, #tpu.memory_space<vmem>>, vector<1x8x512xf32>
    %297 = vector.shape_cast %296 : vector<1x8x512xf32> to vector<8x512xf32>
    %cst_102 = arith.constant dense<0.000000e+00> : vector<8x512xf32>
    %298 = tpu.matmul %294, %220, %cst_102 {dimension_numbers = #tpu.dot_dimension_numbers<[1], [0], [0], [1], [0, 0, 1, 1], [], []>} : vector<8x128xf32>, vector<128x512xf32>, vector<8x512xf32> -> vector<8x512xf32>
    %299 = arith.addf %297, %298 : vector<8x512xf32>
    %300 = vector.extract_strided_slice %299 {offsets = [0, 0], sizes = [8, 384], strides = [1, 1]} : vector<8x512xf32> to vector<8x384xf32>
    %301 = arith.negf %300 : vector<8x384xf32>
    %302 = math.exp %301 : vector<8x384xf32>
    %cst_103 = arith.constant 1.000000e+00 : f32
    %303 = vector.broadcast %cst_103 : f32 to vector<8x384xf32>
    %304 = arith.addf %303, %302 : vector<8x384xf32>
    %305 = arith.divf %303, %304 : vector<8x384xf32>
    %306 = vector.extract_strided_slice %299 {offsets = [0, 384], sizes = [8, 128], strides = [1, 1]} : vector<8x512xf32> to vector<8x128xf32>
    %307 = math.tanh %306 : vector<8x128xf32>
    %308 = vector.extract_strided_slice %305 {offsets = [0, 0], sizes = [8, 128], strides = [1, 1]} : vector<8x384xf32> to vector<8x128xf32>
    %309 = vector.extract_strided_slice %305 {offsets = [0, 128], sizes = [8, 128], strides = [1, 1]} : vector<8x384xf32> to vector<8x128xf32>
    %310 = vector.extract_strided_slice %305 {offsets = [0, 256], sizes = [8, 128], strides = [1, 1]} : vector<8x384xf32> to vector<8x128xf32>
    %311 = arith.mulf %309, %292 : vector<8x128xf32>
    %312 = arith.mulf %308, %307 : vector<8x128xf32>
    %313 = arith.addf %311, %312 : vector<8x128xf32>
    %314 = math.tanh %313 : vector<8x128xf32>
    %315 = arith.mulf %310, %314 : vector<8x128xf32>
    %c4_i32_104 = arith.constant 4 : i32
    %316 = arith.index_cast %c4_i32_104 : i32 to index
    %c0_105 = arith.constant 0 : index
    %c0_106 = arith.constant 0 : index
    %317 = vector.load %arg10[%316, %c0_105, %c0_106] : memref<8x8x512xf32, #tpu.memory_space<vmem>>, vector<1x8x512xf32>
    %318 = vector.shape_cast %317 : vector<1x8x512xf32> to vector<8x512xf32>
    %cst_107 = arith.constant dense<0.000000e+00> : vector<8x512xf32>
    %319 = tpu.matmul %315, %220, %cst_107 {dimension_numbers = #tpu.dot_dimension_numbers<[1], [0], [0], [1], [0, 0, 1, 1], [], []>} : vector<8x128xf32>, vector<128x512xf32>, vector<8x512xf32> -> vector<8x512xf32>
    %320 = arith.addf %318, %319 : vector<8x512xf32>
    %321 = vector.extract_strided_slice %320 {offsets = [0, 0], sizes = [8, 384], strides = [1, 1]} : vector<8x512xf32> to vector<8x384xf32>
    %322 = arith.negf %321 : vector<8x384xf32>
    %323 = math.exp %322 : vector<8x384xf32>
    %cst_108 = arith.constant 1.000000e+00 : f32
    %324 = vector.broadcast %cst_108 : f32 to vector<8x384xf32>
    %325 = arith.addf %324, %323 : vector<8x384xf32>
    %326 = arith.divf %324, %325 : vector<8x384xf32>
    %327 = vector.extract_strided_slice %320 {offsets = [0, 384], sizes = [8, 128], strides = [1, 1]} : vector<8x512xf32> to vector<8x128xf32>
    %328 = math.tanh %327 : vector<8x128xf32>
    %329 = vector.extract_strided_slice %326 {offsets = [0, 0], sizes = [8, 128], strides = [1, 1]} : vector<8x384xf32> to vector<8x128xf32>
    %330 = vector.extract_strided_slice %326 {offsets = [0, 128], sizes = [8, 128], strides = [1, 1]} : vector<8x384xf32> to vector<8x128xf32>
    %331 = vector.extract_strided_slice %326 {offsets = [0, 256], sizes = [8, 128], strides = [1, 1]} : vector<8x384xf32> to vector<8x128xf32>
    %332 = arith.mulf %330, %313 : vector<8x128xf32>
    %333 = arith.mulf %329, %328 : vector<8x128xf32>
    %334 = arith.addf %332, %333 : vector<8x128xf32>
    %335 = math.tanh %334 : vector<8x128xf32>
    %336 = arith.mulf %331, %335 : vector<8x128xf32>
    %c5_i32_109 = arith.constant 5 : i32
    %337 = arith.index_cast %c5_i32_109 : i32 to index
    %c0_110 = arith.constant 0 : index
    %c0_111 = arith.constant 0 : index
    %338 = vector.load %arg10[%337, %c0_110, %c0_111] : memref<8x8x512xf32, #tpu.memory_space<vmem>>, vector<1x8x512xf32>
    %339 = vector.shape_cast %338 : vector<1x8x512xf32> to vector<8x512xf32>
    %cst_112 = arith.constant dense<0.000000e+00> : vector<8x512xf32>
    %340 = tpu.matmul %336, %220, %cst_112 {dimension_numbers = #tpu.dot_dimension_numbers<[1], [0], [0], [1], [0, 0, 1, 1], [], []>} : vector<8x128xf32>, vector<128x512xf32>, vector<8x512xf32> -> vector<8x512xf32>
    %341 = arith.addf %339, %340 : vector<8x512xf32>
    %342 = vector.extract_strided_slice %341 {offsets = [0, 0], sizes = [8, 384], strides = [1, 1]} : vector<8x512xf32> to vector<8x384xf32>
    %343 = arith.negf %342 : vector<8x384xf32>
    %344 = math.exp %343 : vector<8x384xf32>
    %cst_113 = arith.constant 1.000000e+00 : f32
    %345 = vector.broadcast %cst_113 : f32 to vector<8x384xf32>
    %346 = arith.addf %345, %344 : vector<8x384xf32>
    %347 = arith.divf %345, %346 : vector<8x384xf32>
    %348 = vector.extract_strided_slice %341 {offsets = [0, 384], sizes = [8, 128], strides = [1, 1]} : vector<8x512xf32> to vector<8x128xf32>
    %349 = math.tanh %348 : vector<8x128xf32>
    %350 = vector.extract_strided_slice %347 {offsets = [0, 0], sizes = [8, 128], strides = [1, 1]} : vector<8x384xf32> to vector<8x128xf32>
    %351 = vector.extract_strided_slice %347 {offsets = [0, 128], sizes = [8, 128], strides = [1, 1]} : vector<8x384xf32> to vector<8x128xf32>
    %352 = vector.extract_strided_slice %347 {offsets = [0, 256], sizes = [8, 128], strides = [1, 1]} : vector<8x384xf32> to vector<8x128xf32>
    %353 = arith.mulf %351, %334 : vector<8x128xf32>
    %354 = arith.mulf %350, %349 : vector<8x128xf32>
    %355 = arith.addf %353, %354 : vector<8x128xf32>
    %356 = math.tanh %355 : vector<8x128xf32>
    %357 = arith.mulf %352, %356 : vector<8x128xf32>
    %c6_i32_114 = arith.constant 6 : i32
    %358 = arith.index_cast %c6_i32_114 : i32 to index
    %c0_115 = arith.constant 0 : index
    %c0_116 = arith.constant 0 : index
    %359 = vector.load %arg10[%358, %c0_115, %c0_116] : memref<8x8x512xf32, #tpu.memory_space<vmem>>, vector<1x8x512xf32>
    %360 = vector.shape_cast %359 : vector<1x8x512xf32> to vector<8x512xf32>
    %cst_117 = arith.constant dense<0.000000e+00> : vector<8x512xf32>
    %361 = tpu.matmul %357, %220, %cst_117 {dimension_numbers = #tpu.dot_dimension_numbers<[1], [0], [0], [1], [0, 0, 1, 1], [], []>} : vector<8x128xf32>, vector<128x512xf32>, vector<8x512xf32> -> vector<8x512xf32>
    %362 = arith.addf %360, %361 : vector<8x512xf32>
    %363 = vector.extract_strided_slice %362 {offsets = [0, 0], sizes = [8, 384], strides = [1, 1]} : vector<8x512xf32> to vector<8x384xf32>
    %364 = arith.negf %363 : vector<8x384xf32>
    %365 = math.exp %364 : vector<8x384xf32>
    %cst_118 = arith.constant 1.000000e+00 : f32
    %366 = vector.broadcast %cst_118 : f32 to vector<8x384xf32>
    %367 = arith.addf %366, %365 : vector<8x384xf32>
    %368 = arith.divf %366, %367 : vector<8x384xf32>
    %369 = vector.extract_strided_slice %362 {offsets = [0, 384], sizes = [8, 128], strides = [1, 1]} : vector<8x512xf32> to vector<8x128xf32>
    %370 = math.tanh %369 : vector<8x128xf32>
    %371 = vector.extract_strided_slice %368 {offsets = [0, 0], sizes = [8, 128], strides = [1, 1]} : vector<8x384xf32> to vector<8x128xf32>
    %372 = vector.extract_strided_slice %368 {offsets = [0, 128], sizes = [8, 128], strides = [1, 1]} : vector<8x384xf32> to vector<8x128xf32>
    %373 = vector.extract_strided_slice %368 {offsets = [0, 256], sizes = [8, 128], strides = [1, 1]} : vector<8x384xf32> to vector<8x128xf32>
    %374 = arith.mulf %372, %355 : vector<8x128xf32>
    %375 = arith.mulf %371, %370 : vector<8x128xf32>
    %376 = arith.addf %374, %375 : vector<8x128xf32>
    %377 = math.tanh %376 : vector<8x128xf32>
    %378 = arith.mulf %373, %377 : vector<8x128xf32>
    %c7_i32_119 = arith.constant 7 : i32
    %379 = arith.index_cast %c7_i32_119 : i32 to index
    %c0_120 = arith.constant 0 : index
    %c0_121 = arith.constant 0 : index
    %380 = vector.load %arg10[%379, %c0_120, %c0_121] : memref<8x8x512xf32, #tpu.memory_space<vmem>>, vector<1x8x512xf32>
    %381 = vector.shape_cast %380 : vector<1x8x512xf32> to vector<8x512xf32>
    %cst_122 = arith.constant dense<0.000000e+00> : vector<8x512xf32>
    %382 = tpu.matmul %378, %220, %cst_122 {dimension_numbers = #tpu.dot_dimension_numbers<[1], [0], [0], [1], [0, 0, 1, 1], [], []>} : vector<8x128xf32>, vector<128x512xf32>, vector<8x512xf32> -> vector<8x512xf32>
    %383 = arith.addf %381, %382 : vector<8x512xf32>
    %384 = vector.extract_strided_slice %383 {offsets = [0, 0], sizes = [8, 384], strides = [1, 1]} : vector<8x512xf32> to vector<8x384xf32>
    %385 = arith.negf %384 : vector<8x384xf32>
    %386 = math.exp %385 : vector<8x384xf32>
    %cst_123 = arith.constant 1.000000e+00 : f32
    %387 = vector.broadcast %cst_123 : f32 to vector<8x384xf32>
    %388 = arith.addf %387, %386 : vector<8x384xf32>
    %389 = arith.divf %387, %388 : vector<8x384xf32>
    %390 = vector.extract_strided_slice %383 {offsets = [0, 384], sizes = [8, 128], strides = [1, 1]} : vector<8x512xf32> to vector<8x128xf32>
    %391 = math.tanh %390 : vector<8x128xf32>
    %392 = vector.extract_strided_slice %389 {offsets = [0, 0], sizes = [8, 128], strides = [1, 1]} : vector<8x384xf32> to vector<8x128xf32>
    %393 = vector.extract_strided_slice %389 {offsets = [0, 128], sizes = [8, 128], strides = [1, 1]} : vector<8x384xf32> to vector<8x128xf32>
    %394 = vector.extract_strided_slice %389 {offsets = [0, 256], sizes = [8, 128], strides = [1, 1]} : vector<8x384xf32> to vector<8x128xf32>
    %395 = arith.mulf %393, %376 : vector<8x128xf32>
    %396 = arith.mulf %392, %391 : vector<8x128xf32>
    %397 = arith.addf %395, %396 : vector<8x128xf32>
    %398 = math.tanh %397 : vector<8x128xf32>
    %399 = arith.mulf %394, %398 : vector<8x128xf32>
    %c8_i32_124 = arith.constant 8 : i32
    %c0_125 = arith.constant 0 : index
    %c0_126 = arith.constant 0 : index
    %400 = vector.load %arg7[%c0_125, %c0_126] : memref<128x128xf32, #tpu.memory_space<vmem>>, vector<128x128xf32>
    %cst_127 = arith.constant dense<0.000000e+00> : vector<8x128xf32>
    %401 = tpu.matmul %399, %400, %cst_127 {dimension_numbers = #tpu.dot_dimension_numbers<[1], [0], [0], [1], [0, 0, 1, 1], [], []>} : vector<8x128xf32>, vector<128x128xf32>, vector<8x128xf32> -> vector<8x128xf32>
    %c0_128 = arith.constant 0 : index
    %c0_129 = arith.constant 0 : index
    %402 = vector.load %arg8[%c0_128, %c0_129] : memref<1x128xf32, #tpu.memory_space<vmem>>, vector<1x128xf32>
    %403 = vector.broadcast %402 : vector<1x128xf32> to vector<8x128xf32>
    %404 = arith.addf %401, %403 : vector<8x128xf32>
    %c0_130 = arith.constant 0 : index
    %c0_131 = arith.constant 0 : index
    %405 = vector.load %arg9[%c0_130, %c0_131] : memref<8x128xf32, #tpu.memory_space<vmem>>, vector<8x128xf32>
    tpu.vector_store %arg9[%c0_130, %c0_131], %404 {strides = array<i32>} : memref<8x128xf32, #tpu.memory_space<vmem>>, vector<8x128xf32>,
    return
  }
}

</mosaic_0001>

<llo_original>
// kernel: tpu_custom_call.1
$region0: #{tpu_custom_call.1}
  #allocation0 [shape = 'u32[]', space=smem, size = 0x4, offset = 0x4, fixed_abs, tag = 'smem constant byte address 0x4 - core index']
  #allocation1 [shape = 'u32[144,128]{1,0:T(1,128)}', space=vmem, size = 0x12000, scoped, tag = 'internal scratch']
  #allocation2 [shape = 'f32[8,8,512]{2,1,0:T(8,128)}', space=vmem, size = 0x20000, scoped, tag = 'scratch operand']
  #allocation3 [shape = 'f32[8,8,128]{2,1,0:T(8,128)}', space=vmem, size = 0x8000, scoped, tag = 'scratch operand']
  %s0 = inlined_call_operand.hbm [shape: f32[8,8,8], index: 0, kind: input, shape index: {}]
  %s1 = inlined_call_operand.hbm [shape: f32[8,512], index: 1, kind: input, shape index: {}]
  %s2 = inlined_call_operand.hbm [shape: f32[128,512], index: 2, kind: input, shape index: {}]
  %s3 = inlined_call_operand.vmem [shape: f32[1,512], index: 3, kind: input, shape index: {}]
  %s4 = inlined_call_operand.hbm [shape: f32[128,512], index: 4, kind: input, shape index: {}]
  %s5 = inlined_call_operand.hbm [shape: f32[128,512], index: 5, kind: input, shape index: {}]
  %s6 = inlined_call_operand.vmem [shape: f32[1,512], index: 6, kind: input, shape index: {}]
  %s7 = inlined_call_operand.hbm [shape: f32[128,128], index: 7, kind: input, shape index: {}]
  %s8 = inlined_call_operand.vmem [shape: f32[1,128], index: 8, kind: input, shape index: {}]
  %s9 = inlined_call_operand.hbm [shape: f32[8,128], index: 9, kind: output, shape index: {}]
  %s10 = sld [smem:[#allocation0]]
  $region70: #{tpu_custom_call.1} parent=0
    _
  %s12 = ssub.s32 1, %s10
  %s13 = scalar_select 0, %s12, %s10
  $region1: #{tpu_custom_call.1} parent=0
    #allocation4 [shape = 'u8[32768]{0}', space=vmem, size = 0x8000, scoped, tag = 'input window, operand 0, single buffered']
    #allocation5 [shape = 's32[1]{0}', space=sflag, size = 0x4, scoped, tag = 'scoped memory for tpu_custom_call.1']
    #allocation6 [shape = 's32[1]{0}', space=sflag, size = 0x4, scoped, tag = 'scoped memory for tpu_custom_call.1']
    #allocation7 [shape = 'u8[16384]{0}', space=vmem, size = 0x4000, scoped, tag = 'input window, operand 1, single buffered']
    #allocation8 [shape = 's32[1]{0}', space=sflag, size = 0x4, scoped, tag = 'scoped memory for tpu_custom_call.1']
    #allocation9 [shape = 'u8[262144]{0}', space=vmem, size = 0x40000, scoped, tag = 'input window, operand 2, single buffered']
    #allocation10 [shape = 'u8[262144]{0}', space=vmem, size = 0x40000, scoped, tag = 'input window, operand 4, single buffered']
    #allocation11 [shape = 's32[1]{0}', space=sflag, size = 0x4, scoped, tag = 'scoped memory for tpu_custom_call.1']
    #allocation12 [shape = 'u8[262144]{0}', space=vmem, size = 0x40000, scoped, tag = 'input window, operand 5, single buffered']
    #allocation13 [shape = 'u8[65536]{0}', space=vmem, size = 0x10000, scoped, tag = 'input window, operand 7, single buffered']
    #allocation14 [shape = 's32[1]{0}', space=sflag, size = 0x4, scoped, tag = 'scoped memory for tpu_custom_call.1']
    #allocation15 [shape = 'u8[4096]{0}', space=vmem, size = 0x1000, scoped, tag = 'output window, operand 0, single buffered']
    %14 = vsyncpa [#allocation5], 0
    %15 = vsyncpa [#allocation8], 0
    %16 = vsyncpa [#allocation11], 0
    %17 = vsyncpa [#allocation14], 0
    %18 = vsyncpa [#allocation6], 0
    // Predicated region
    $region2: #{tpu_custom_call.1} parent=1 // pred_check
      _
    $region3: #{tpu_custom_call.1} parent=1 // pred_check_branch
      %20 = sbr.rel (0) target = $region5
    $region4: #{tpu_custom_call.1} parent=1 // pred_region
      %s22 = ssub.s32 1024, 1024
      %23 = vsyncadd [#allocation5], %s22
      %s24 = sshll.u32 [#allocation4], 4
      %s25 = int_to_ptr.vmem [resolvable:$true] %s24
      %30 = dma.hbm_to_vmem [thread:$0]  %s0, 1024, %s25, [#allocation5], 128, 128, 8
    $region5: #{tpu_custom_call.1} parent=1 // pred_fallthru
      _
    // Predicated region
    $region6: #{tpu_custom_call.1} parent=1 // pred_check
      _
    $region7: #{tpu_custom_call.1} parent=1 // pred_check_branch
      %32 = sbr.rel (0) target = $region9
    $region8: #{tpu_custom_call.1} parent=1 // pred_region
      %s34 = ssub.s32 512, 512
      %35 = vsyncadd [#allocation8], %s34
      %s37 = sshll.u32 [#allocation7], 4
      %s38 = int_to_ptr.vmem [resolvable:$true] %s37
      %40 = dma.hbm_to_vmem [thread:$0]  %s1, 512, %s38, [#allocation8]
    $region9: #{tpu_custom_call.1} parent=1 // pred_fallthru
      _
    // Predicated region
    $region10: #{tpu_custom_call.1} parent=1 // pred_check
      _
    $region11: #{tpu_custom_call.1} parent=1 // pred_check_branch
      %42 = sbr.rel (0) target = $region13
    $region12: #{tpu_custom_call.1} parent=1 // pred_region
      %s44 = ssub.s32 8192, 8192
      %45 = vsyncadd [#allocation8], %s44
      %s46 = sshll.u32 [#allocation9], 4
      %s47 = int_to_ptr.vmem [resolvable:$true] %s46
      %52 = dma.hbm_to_vmem [thread:$0]  %s2, 8192, %s47, [#allocation8], 512, 512, 32
    $region13: #{tpu_custom_call.1} parent=1 // pred_fallthru
      _
    // Predicated region
    $region14: #{tpu_custom_call.1} parent=1 // pred_check
      _
    $region15: #{tpu_custom_call.1} parent=1 // pred_check_branch
      %54 = sbr.rel (0) target = $region17
    $region16: #{tpu_custom_call.1} parent=1 // pred_region
      _
    $region17: #{tpu_custom_call.1} parent=1 // pred_fallthru
      _
    // Predicated region
    $region18: #{tpu_custom_call.1} parent=1 // pred_check
      _
    $region19: #{tpu_custom_call.1} parent=1 // pred_check_branch
      %56 = sbr.rel (0) target = $region21
    $region20: #{tpu_custom_call.1} parent=1 // pred_region
      %s58 = ssub.s32 8192, 8192
      %59 = vsyncadd [#allocation11], %s58
      %s60 = sshll.u32 [#allocation10], 4
      %s61 = int_to_ptr.vmem [resolvable:$true] %s60
      %66 = dma.hbm_to_vmem [thread:$0]  %s4, 8192, %s61, [#allocation11], 512, 512, 32
    $region21: #{tpu_custom_call.1} parent=1 // pred_fallthru
      _
    // Predicated region
    $region22: #{tpu_custom_call.1} parent=1 // pred_check
      _
    $region23: #{tpu_custom_call.1} parent=1 // pred_check_branch
      %68 = sbr.rel (0) target = $region25
    $region24: #{tpu_custom_call.1} parent=1 // pred_region
      %s70 = ssub.s32 8192, 8192
      %71 = vsyncadd [#allocation11], %s70
      %s72 = sshll.u32 [#allocation12], 4
      %s73 = int_to_ptr.vmem [resolvable:$true] %s72
      %78 = dma.hbm_to_vmem [thread:$0]  %s5, 8192, %s73, [#allocation11], 512, 512, 32
    $region25: #{tpu_custom_call.1} parent=1 // pred_fallthru
      _
    // Predicated region
    $region26: #{tpu_custom_call.1} parent=1 // pred_check
      _
    $region27: #{tpu_custom_call.1} parent=1 // pred_check_branch
      %80 = sbr.rel (0) target = $region29
    $region28: #{tpu_custom_call.1} parent=1 // pred_region
      _
    $region29: #{tpu_custom_call.1} parent=1 // pred_fallthru
      _
    // Predicated region
    $region30: #{tpu_custom_call.1} parent=1 // pred_check
      _
    $region31: #{tpu_custom_call.1} parent=1 // pred_check_branch
      %82 = sbr.rel (0) target = $region33
    $region32: #{tpu_custom_call.1} parent=1 // pred_region
      %s84 = ssub.s32 2048, 2048
      %85 = vsyncadd [#allocation14], %s84
      %s86 = sshll.u32 [#allocation13], 4
      %s87 = int_to_ptr.vmem [resolvable:$true] %s86
      %92 = dma.hbm_to_vmem [thread:$0]  %s7, 2048, %s87, [#allocation14], 128, 128, 8
    $region33: #{tpu_custom_call.1} parent=1 // pred_fallthru
      _
    // Predicated region
    $region34: #{tpu_custom_call.1} parent=1 // pred_check
      _
    $region35: #{tpu_custom_call.1} parent=1 // pred_check_branch
      %94 = sbr.rel (0) target = $region37
    $region36: #{tpu_custom_call.1} parent=1 // pred_region
      _
    $region37: #{tpu_custom_call.1} parent=1 // pred_fallthru
      _
    // Predicated region
    $region38: #{tpu_custom_call.1} parent=1 // pred_check
      _
    $region39: #{tpu_custom_call.1} parent=1 // pred_check_branch
      %96 = sbr.rel (0) target = $region41
    $region40: #{tpu_custom_call.1} parent=1 // pred_region
      %97 = dma.done [#allocation5], 1024
    $region41: #{tpu_custom_call.1} parent=1 // pred_fallthru
      _
    // Predicated region
    $region42: #{tpu_custom_call.1} parent=1 // pred_check
      _
    $region43: #{tpu_custom_call.1} parent=1 // pred_check_branch
      %99 = sbr.rel (0) target = $region45
    $region44: #{tpu_custom_call.1} parent=1 // pred_region
      %100 = dma.done [#allocation8], 512
    $region45: #{tpu_custom_call.1} parent=1 // pred_fallthru
      _
    // Predicated region
    $region46: #{tpu_custom_call.1} parent=1 // pred_check
      _
    $region47: #{tpu_custom_call.1} parent=1 // pred_check_branch
      %102 = sbr.rel (0) target = $region49
    $region48: #{tpu_custom_call.1} parent=1 // pred_region
      %103 = dma.done [#allocation8], 8192
    $region49: #{tpu_custom_call.1} parent=1 // pred_fallthru
      _
    // Predicated region
    $region50: #{tpu_custom_call.1} parent=1 // pred_check
      _
    $region51: #{tpu_custom_call.1} parent=1 // pred_check_branch
      %105 = sbr.rel (0) target = $region53
    $region52: #{tpu_custom_call.1} parent=1 // pred_region
      %106 = dma.done [#allocation11], 8192
    $region53: #{tpu_custom_call.1} parent=1 // pred_fallthru
      _
    // Predicated region
    $region54: #{tpu_custom_call.1} parent=1 // pred_check
      _
    $region55: #{tpu_custom_call.1} parent=1 // pred_check_branch
      %108 = sbr.rel (0) target = $region57
    $region56: #{tpu_custom_call.1} parent=1 // pred_region
      %109 = dma.done [#allocation11], 8192
    $region57: #{tpu_custom_call.1} parent=1 // pred_fallthru
      _
    // Predicated region
    $region58: #{tpu_custom_call.1} parent=1 // pred_check
      _
    $region59: #{tpu_custom_call.1} parent=1 // pred_check_branch
      %111 = sbr.rel (0) target = $region61
    $region60: #{tpu_custom_call.1} parent=1 // pred_region
      %112 = dma.done [#allocation14], 2048
    $region61: #{tpu_custom_call.1} parent=1 // pred_fallthru
      _
    %v113 = vld [vmem:[#allocation9] sm:$0xff]
    %v114 = vld [vmem:[#allocation9 + $0x8] sm:$0xff]
    %v115 = vld [vmem:[#allocation9 + $0x10] sm:$0xff]
    %v116 = vld [vmem:[#allocation9 + $0x18] sm:$0xff]
    %v117 = vld [vmem:[#allocation9 + $0x20] sm:$0xff]
    %v118 = vld [vmem:[#allocation9 + $0x28] sm:$0xff]
    %v119 = vld [vmem:[#allocation9 + $0x30] sm:$0xff]
    %v120 = vld [vmem:[#allocation9 + $0x38] sm:$0xff]
    %v121 = vld [vmem:[#allocation9 + $0x40] sm:$0xff]
    %v122 = vld [vmem:[#allocation9 + $0x48] sm:$0xff]
    %v123 = vld [vmem:[#allocation9 + $0x50] sm:$0xff]
    %v124 = vld [vmem:[#allocation9 + $0x58] sm:$0xff]
    %v125 = vld [vmem:[#allocation9 + $0x60] sm:$0xff]
    %v126 = vld [vmem:[#allocation9 + $0x68] sm:$0xff]
    %v127 = vld [vmem:[#allocation9 + $0x70] sm:$0xff]
    %v128 = vld [vmem:[#allocation9 + $0x78] sm:$0xff]
    %v129 = vld [vmem:[#allocation9 + $0x80] sm:$0xff]
    %v130 = vld [vmem:[#allocation9 + $0x88] sm:$0xff]
    %v131 = vld [vmem:[#allocation9 + $0x90] sm:$0xff]
    %v132 = vld [vmem:[#allocation9 + $0x98] sm:$0xff]
    %v133 = vld [vmem:[#allocation9 + $0xa0] sm:$0xff]
    %v134 = vld [vmem:[#allocation9 + $0xa8] sm:$0xff]
    %v135 = vld [vmem:[#allocation9 + $0xb0] sm:$0xff]
    %v136 = vld [vmem:[#allocation9 + $0xb8] sm:$0xff]
    %v137 = vld [vmem:[#allocation9 + $0xc0] sm:$0xff]
    %v138 = vld [vmem:[#allocation9 + $0xc8] sm:$0xff]
    %v139 = vld [vmem:[#allocation9 + $0xd0] sm:$0xff]
    %v140 = vld [vmem:[#allocation9 + $0xd8] sm:$0xff]
    %v141 = vld [vmem:[#allocation9 + $0xe0] sm:$0xff]
    %v142 = vld [vmem:[#allocation9 + $0xe8] sm:$0xff]
    %v143 = vld [vmem:[#allocation9 + $0xf0] sm:$0xff]
    %v144 = vld [vmem:[#allocation9 + $0xf8] sm:$0xff]
    %v145 = vld [vmem:[#allocation9 + $0x100] sm:$0xff]
    %v146 = vld [vmem:[#allocation9 + $0x108] sm:$0xff]
    %v147 = vld [vmem:[#allocation9 + $0x110] sm:$0xff]
    %v148 = vld [vmem:[#allocation9 + $0x118] sm:$0xff]
    %v149 = vld [vmem:[#allocation9 + $0x120] sm:$0xff]
    %v150 = vld [vmem:[#allocation9 + $0x128] sm:$0xff]
    %v151 = vld [vmem:[#allocation9 + $0x130] sm:$0xff]
    %v152 = vld [vmem:[#allocation9 + $0x138] sm:$0xff]
    %v153 = vld [vmem:[#allocation9 + $0x140] sm:$0xff]
    %v154 = vld [vmem:[#allocation9 + $0x148] sm:$0xff]
    %v155 = vld [vmem:[#allocation9 + $0x150] sm:$0xff]
    %v156 = vld [vmem:[#allocation9 + $0x158] sm:$0xff]
    %v157 = vld [vmem:[#allocation9 + $0x160] sm:$0xff]
    %v158 = vld [vmem:[#allocation9 + $0x168] sm:$0xff]
    %v159 = vld [vmem:[#allocation9 + $0x170] sm:$0xff]
    %v160 = vld [vmem:[#allocation9 + $0x178] sm:$0xff]
    %v161 = vld [vmem:[#allocation9 + $0x180] sm:$0xff]
    %v162 = vld [vmem:[#allocation9 + $0x188] sm:$0xff]
    %v163 = vld [vmem:[#allocation9 + $0x190] sm:$0xff]
    %v164 = vld [vmem:[#allocation9 + $0x198] sm:$0xff]
    %v165 = vld [vmem:[#allocation9 + $0x1a0] sm:$0xff]
    %v166 = vld [vmem:[#allocation9 + $0x1a8] sm:$0xff]
    %v167 = vld [vmem:[#allocation9 + $0x1b0] sm:$0xff]
    %v168 = vld [vmem:[#allocation9 + $0x1b8] sm:$0xff]
    %v169 = vld [vmem:[#allocation9 + $0x1c0] sm:$0xff]
    %v170 = vld [vmem:[#allocation9 + $0x1c8] sm:$0xff]
    %v171 = vld [vmem:[#allocation9 + $0x1d0] sm:$0xff]
    %v172 = vld [vmem:[#allocation9 + $0x1d8] sm:$0xff]
    %v173 = vld [vmem:[#allocation9 + $0x1e0] sm:$0xff]
    %v174 = vld [vmem:[#allocation9 + $0x1e8] sm:$0xff]
    %v175 = vld [vmem:[#allocation9 + $0x1f0] sm:$0xff]
    %v176 = vld [vmem:[#allocation9 + $0x1f8] sm:$0xff]
    %v177 = vld [vmem:[%s3] sm:$0xf]
    %v178 = vld [vmem:[#allocation4] sm:$0xff]
    %v179 = vld [vmem:[#allocation4 + $0x8] sm:$0xff]
    %v180 = vld [vmem:[#allocation4 + $0x10] sm:$0xff]
    %v181 = vld [vmem:[#allocation4 + $0x18] sm:$0xff]
    %v182 = vld [vmem:[#allocation4 + $0x20] sm:$0xff]
    %v183 = vld [vmem:[#allocation4 + $0x28] sm:$0xff]
    %v184 = vld [vmem:[#allocation4 + $0x30] sm:$0xff]
    %v185 = vld [vmem:[#allocation4 + $0x38] sm:$0xff]
    %v186 = vld [vmem:[#allocation7] sm:$0xff]
    %v187 = vld [vmem:[#allocation7 + $0x8] sm:$0xff]
    %v188 = vld [vmem:[#allocation7 + $0x10] sm:$0xff]
    %v189 = vld [vmem:[#allocation7 + $0x18] sm:$0xff]
    %v191 = vlaneseq
    %v192 = vshrl.u32 %v191, 7
    %v193 = vsub.s32 0, %v192
    %v194 = vrot.slane %v177, %v193
    %v195 = vlaneseq
    %v196 = vshrl.u32 %v195, 7
    %v197 = vsub.s32 1, %v196
    %v198 = vrot.slane %v177, %v197
    %v199 = vlaneseq
    %v200 = vshrl.u32 %v199, 7
    %v201 = vsub.s32 2, %v200
    %v202 = vrot.slane %v177, %v201
    %v203 = vlaneseq
    %v204 = vshrl.u32 %v203, 7
    %v205 = vsub.s32 3, %v204
    %v206 = vrot.slane %v177, %v205
    %vm211 = vcmask 64512
    %v213 = vsel %vm211, %v178, 0
    %v216 = vsel %vm211, %v179, 0
    %v219 = vsel %vm211, %v180, 0
    %v222 = vsel %vm211, %v181, 0
    %v225 = vsel %vm211, %v182, 0
    %v228 = vsel %vm211, %v183, 0
    %v231 = vsel %vm211, %v184, 0
    %v234 = vsel %vm211, %v185, 0
    %236 = vmatprep.subr.mxu0 %v187
    %237 = vmatpush1.msra.mxu0 %v186
    %238 = vmatprep.subr.mxu0 0.0
    %239 = vmatpush1.msra.mxu0 0.0
    %240 = vmatprep.subr.mxu0 0.0
    %241 = vmatpush1.msra.mxu0 0.0
    %242 = vmatprep.subr.mxu0 0.0
    %243 = vmatpush1.msra.mxu0 0.0
    %244 = vmatprep.subr.mxu0 0.0
    %245 = vmatpush1.msra.mxu0 0.0
    %246 = vmatprep.subr.mxu0 0.0
    %247 = vmatpush1.msra.mxu0 0.0
    %248 = vmatprep.subr.mxu0 0.0
    %249 = vmatpush1.msra.mxu0 0.0
    %250 = vmatprep.subr.mxu0 0.0
    %251 = vmatpush1.msra.mxu0 0.0
    %252 = vmatprep.subr.mxu0 0.0
    %253 = vmatpush1.msra.mxu0 0.0
    %254 = vmatprep.subr.mxu0 0.0
    %255 = vmatpush1.msra.mxu0 0.0
    %256 = vmatprep.subr.mxu0 0.0
    %257 = vmatpush1.msra.mxu0 0.0
    %258 = vmatprep.subr.mxu0 0.0
    %259 = vmatpush1.msra.mxu0 0.0
    %260 = vmatprep.subr.mxu0 0.0
    %261 = vmatpush1.msra.mxu0 0.0
    %262 = vmatprep.subr.mxu0 0.0
    %263 = vmatpush1.msra.mxu0 0.0
    %264 = vmatprep.subr.mxu0 0.0
    %265 = vmatpush1.msra.mxu0 0.0
    %266 = vmatprep.subr.mxu0 0.0
    %267 = vmatpush1.msra.mxu0 0.0
    %268 = vmatprep.subr.mxu0 0.0
    %269 = vmatpush1.msra.mxu0 0.0
    %270 = vmatprep.subr.mxu0 0.0
    %271 = vmatpush1.msra.mxu0 0.0
    %272 = vmatprep.subr.mxu0 0.0
    %273 = vmatpush1.msra.mxu0 0.0
    %274 = vmatprep.subr.mxu0 0.0
    %275 = vmatpush1.msra.mxu0 0.0
    %276 = vmatprep.subr.mxu0 0.0
    %277 = vmatpush1.msra.mxu0 0.0
    %278 = vmatprep.subr.mxu0 0.0
    %279 = vmatpush1.msra.mxu0 0.0
    %280 = vmatprep.subr.mxu0 0.0
    %281 = vmatpush1.msra.mxu0 0.0
    %282 = vmatprep.subr.mxu0 0.0
    %283 = vmatpush1.msra.mxu0 0.0
    %284 = vmatprep.subr.mxu0 0.0
    %285 = vmatpush1.msra.mxu0 0.0
    %286 = vmatprep.subr.mxu0 0.0
    %287 = vmatpush1.msra.mxu0 0.0
    %288 = vmatprep.subr.mxu0 0.0
    %289 = vmatpush1.msra.mxu0 0.0
    %290 = vmatprep.subr.mxu0 0.0
    %291 = vmatpush1.msra.mxu0 0.0
    %292 = vmatprep.subr.mxu0 0.0
    %293 = vmatpush1.msra.mxu0 0.0
    %294 = vmatprep.subr.mxu0 0.0
    %295 = vmatpush1.msra.mxu0 0.0
    %296 = vmatprep.subr.mxu0 0.0
    %297 = vmatpush1.msra.mxu0 0.0
    %298 = vmatprep.subr.mxu0 0.0
    %299 = vmatpush1.msra.mxu0 0.0
    %300 = vmatprep.mubr.f32.mxu0 0.0
    %301 = vmatmul.mubr.f32.gmra.mrb[0].mxu0 %v213
    %v302 = vpop.f32.mrb[0].mxu0
    %v303 = vadd.f32 %v194, %v302
    %v304 = vpop.f32.mrb[0].mxu0
    %v305 = vadd.f32 %v198, %v304
    %306 = vmatprep.mubr.f32.mxu0 0.0
    %307 = vmatmul.mubr.f32.gmra.mrb[0].mxu0 %v216
    %v308 = vpop.f32.mrb[0].mxu0
    %v309 = vadd.f32 %v194, %v308
    %v310 = vpop.f32.mrb[0].mxu0
    %v311 = vadd.f32 %v198, %v310
    %312 = vmatprep.mubr.f32.mxu0 0.0
    %313 = vmatmul.mubr.f32.gmra.mrb[0].mxu0 %v219
    %v314 = vpop.f32.mrb[0].mxu0
    %v315 = vadd.f32 %v194, %v314
    %v316 = vpop.f32.mrb[0].mxu0
    %v317 = vadd.f32 %v198, %v316
    %318 = vmatprep.mubr.f32.mxu0 0.0
    %319 = vmatmul.mubr.f32.gmra.mrb[0].mxu0 %v222
    %v320 = vpop.f32.mrb[0].mxu0
    %v321 = vadd.f32 %v194, %v320
    %v322 = vpop.f32.mrb[0].mxu0
    %v323 = vadd.f32 %v198, %v322
    %324 = vmatprep.mubr.f32.mxu0 0.0
    %325 = vmatmul.mubr.f32.gmra.mrb[0].mxu0 %v225
    %v326 = vpop.f32.mrb[0].mxu0
    %v327 = vadd.f32 %v194, %v326
    %v328 = vpop.f32.mrb[0].mxu0
    %v329 = vadd.f32 %v198, %v328
    %330 = vmatprep.mubr.f32.mxu0 0.0
    %331 = vmatmul.mubr.f32.gmra.mrb[0].mxu0 %v228
    %v332 = vpop.f32.mrb[0].mxu0
    %v333 = vadd.f32 %v194, %v332
    %v334 = vpop.f32.mrb[0].mxu0
    %v335 = vadd.f32 %v198, %v334
    %336 = vmatprep.mubr.f32.mxu0 0.0
    %337 = vmatmul.mubr.f32.gmra.mrb[0].mxu0 %v231
    %v338 = vpop.f32.mrb[0].mxu0
    %v339 = vadd.f32 %v194, %v338
    %v340 = vpop.f32.mrb[0].mxu0
    %v341 = vadd.f32 %v198, %v340
    %342 = vmatprep.mubr.f32.mxu0 0.0
    %343 = vmatmul.mubr.f32.gmra.mrb[0].mxu0 %v234
    %v344 = vpop.f32.mrb[0].mxu0
    %v345 = vadd.f32 %v194, %v344
    %v346 = vpop.f32.mrb[0].mxu0
    %v347 = vadd.f32 %v198, %v346
    %348 = vdwg.mxu0
    %349 = vmatprep.subr.mxu0 %v189
    %350 = vmatpush1.msra.mxu0 %v188
    %351 = vmatprep.subr.mxu0 0.0
    %352 = vmatpush1.msra.mxu0 0.0
    %353 = vmatprep.subr.mxu0 0.0
    %354 = vmatpush1.msra.mxu0 0.0
    %355 = vmatprep.subr.mxu0 0.0
    %356 = vmatpush1.msra.mxu0 0.0
    %357 = vmatprep.subr.mxu0 0.0
    %358 = vmatpush1.msra.mxu0 0.0
    %359 = vmatprep.subr.mxu0 0.0
    %360 = vmatpush1.msra.mxu0 0.0
    %361 = vmatprep.subr.mxu0 0.0
    %362 = vmatpush1.msra.mxu0 0.0
    %363 = vmatprep.subr.mxu0 0.0
    %364 = vmatpush1.msra.mxu0 0.0
    %365 = vmatprep.subr.mxu0 0.0
    %366 = vmatpush1.msra.mxu0 0.0
    %367 = vmatprep.subr.mxu0 0.0
    %368 = vmatpush1.msra.mxu0 0.0
    %369 = vmatprep.subr.mxu0 0.0
    %370 = vmatpush1.msra.mxu0 0.0
    %371 = vmatprep.subr.mxu0 0.0
    %372 = vmatpush1.msra.mxu0 0.0
    %373 = vmatprep.subr.mxu0 0.0
    %374 = vmatpush1.msra.mxu0 0.0
    %375 = vmatprep.subr.mxu0 0.0
    %376 = vmatpush1.msra.mxu0 0.0
    %377 = vmatprep.subr.mxu0 0.0
    %378 = vmatpush1.msra.mxu0 0.0
    %379 = vmatprep.subr.mxu0 0.0
    %380 = vmatpush1.msra.mxu0 0.0
    %381 = vmatprep.subr.mxu0 0.0
    %382 = vmatpush1.msra.mxu0 0.0
    %383 = vmatprep.subr.mxu0 0.0
    %384 = vmatpush1.msra.mxu0 0.0
    %385 = vmatprep.subr.mxu0 0.0
    %386 = vmatpush1.msra.mxu0 0.0
    %387 = vmatprep.subr.mxu0 0.0
    %388 = vmatpush1.msra.mxu0 0.0
    %389 = vmatprep.subr.mxu0 0.0
    %390 = vmatpush1.msra.mxu0 0.0
    %391 = vmatprep.subr.mxu0 0.0
    %392 = vmatpush1.msra.mxu0 0.0
    %393 = vmatprep.subr.mxu0 0.0
    %394 = vmatpush1.msra.mxu0 0.0
    %395 = vmatprep.subr.mxu0 0.0
    %396 = vmatpush1.msra.mxu0 0.0
    %397 = vmatprep.subr.mxu0 0.0
    %398 = vmatpush1.msra.mxu0 0.0
    %399 = vmatprep.subr.mxu0 0.0
    %400 = vmatpush1.msra.mxu0 0.0
    %401 = vmatprep.subr.mxu0 0.0
    %402 = vmatpush1.msra.mxu0 0.0
    %403 = vmatprep.subr.mxu0 0.0
    %404 = vmatpush1.msra.mxu0 0.0
    %405 = vmatprep.subr.mxu0 0.0
    %406 = vmatpush1.msra.mxu0 0.0
    %407 = vmatprep.subr.mxu0 0.0
    %408 = vmatpush1.msra.mxu0 0.0
    %409 = vmatprep.subr.mxu0 0.0
    %410 = vmatpush1.msra.mxu0 0.0
    %411 = vmatprep.subr.mxu0 0.0
    %412 = vmatpush1.msra.mxu0 0.0
    %413 = vmatprep.mubr.f32.mxu0 0.0
    %414 = vmatmul.mubr.f32.gmra.mrb[0].mxu0 %v213
    %v415 = vpop.f32.mrb[0].mxu0
    %v416 = vadd.f32 %v202, %v415
    %v417 = vpop.f32.mrb[0].mxu0
    %v418 = vadd.f32 %v206, %v417
    %419 = vmatprep.mubr.f32.mxu0 0.0
    %420 = vmatmul.mubr.f32.gmra.mrb[0].mxu0 %v216
    %v421 = vpop.f32.mrb[0].mxu0
    %v422 = vadd.f32 %v202, %v421
    %v423 = vpop.f32.mrb[0].mxu0
    %v424 = vadd.f32 %v206, %v423
    %425 = vmatprep.mubr.f32.mxu0 0.0
    %426 = vmatmul.mubr.f32.gmra.mrb[0].mxu0 %v219
    %v427 = vpop.f32.mrb[0].mxu0
    %v428 = vadd.f32 %v202, %v427
    %v429 = vpop.f32.mrb[0].mxu0
    %v430 = vadd.f32 %v206, %v429
    %431 = vmatprep.mubr.f32.mxu0 0.0
    %432 = vmatmul.mubr.f32.gmra.mrb[0].mxu0 %v222
    %v433 = vpop.f32.mrb[0].mxu0
    %v434 = vadd.f32 %v202, %v433
    %v435 = vpop.f32.mrb[0].mxu0
    %v436 = vadd.f32 %v206, %v435
    %437 = vmatprep.mubr.f32.mxu0 0.0
    %438 = vmatmul.mubr.f32.gmra.mrb[0].mxu0 %v225
    %v439 = vpop.f32.mrb[0].mxu0
    %v440 = vadd.f32 %v202, %v439
    %v441 = vpop.f32.mrb[0].mxu0
    %v442 = vadd.f32 %v206, %v441
    %443 = vmatprep.mubr.f32.mxu0 0.0
    %444 = vmatmul.mubr.f32.gmra.mrb[0].mxu0 %v228
    %v445 = vpop.f32.mrb[0].mxu0
    %v446 = vadd.f32 %v202, %v445
    %v447 = vpop.f32.mrb[0].mxu0
    %v448 = vadd.f32 %v206, %v447
    %449 = vmatprep.mubr.f32.mxu0 0.0
    %450 = vmatmul.mubr.f32.gmra.mrb[0].mxu0 %v231
    %v451 = vpop.f32.mrb[0].mxu0
    %v452 = vadd.f32 %v202, %v451
    %v453 = vpop.f32.mrb[0].mxu0
    %v454 = vadd.f32 %v206, %v453
    %455 = vmatprep.mubr.f32.mxu0 0.0
    %456 = vmatmul.mubr.f32.gmra.mrb[0].mxu0 %v234
    %v457 = vpop.f32.mrb[0].mxu0
    %v458 = vadd.f32 %v202, %v457
    %v459 = vpop.f32.mrb[0].mxu0
    %v460 = vadd.f32 %v206, %v459
    %461 = vdwg.mxu0
    %462 = vst [vmem:[#allocation2] sm:$0xff] %v303
    %463 = vst [vmem:[#allocation2 + $0x8] sm:$0xff] %v305
    %464 = vst [vmem:[#allocation2 + $0x10] sm:$0xff] %v416
    %465 = vst [vmem:[#allocation2 + $0x18] sm:$0xff] %v418
    %466 = vst [vmem:[#allocation2 + $0x20] sm:$0xff] %v309
    %467 = vst [vmem:[#allocation2 + $0x28] sm:$0xff] %v311
    %468 = vst [vmem:[#allocation2 + $0x30] sm:$0xff] %v422
    %469 = vst [vmem:[#allocation2 + $0x38] sm:$0xff] %v424
    %470 = vst [vmem:[#allocation2 + $0x40] sm:$0xff] %v315
    %471 = vst [vmem:[#allocation2 + $0x48] sm:$0xff] %v317
    %472 = vst [vmem:[#allocation2 + $0x50] sm:$0xff] %v428
    %473 = vst [vmem:[#allocation2 + $0x58] sm:$0xff] %v430
    %474 = vst [vmem:[#allocation2 + $0x60] sm:$0xff] %v321
    %475 = vst [vmem:[#allocation2 + $0x68] sm:$0xff] %v323
    %476 = vst [vmem:[#allocation2 + $0x70] sm:$0xff] %v434
    %477 = vst [vmem:[#allocation2 + $0x78] sm:$0xff] %v436
    %478 = vst [vmem:[#allocation2 + $0x80] sm:$0xff] %v327
    %479 = vst [vmem:[#allocation2 + $0x88] sm:$0xff] %v329
    %480 = vst [vmem:[#allocation2 + $0x90] sm:$0xff] %v440
    %481 = vst [vmem:[#allocation2 + $0x98] sm:$0xff] %v442
    %482 = vst [vmem:[#allocation2 + $0xa0] sm:$0xff] %v333
    %483 = vst [vmem:[#allocation2 + $0xa8] sm:$0xff] %v335
    %484 = vst [vmem:[#allocation2 + $0xb0] sm:$0xff] %v446
    %485 = vst [vmem:[#allocation2 + $0xb8] sm:$0xff] %v448
    %486 = vst [vmem:[#allocation2 + $0xc0] sm:$0xff] %v339
    %487 = vst [vmem:[#allocation2 + $0xc8] sm:$0xff] %v341
    %488 = vst [vmem:[#allocation2 + $0xd0] sm:$0xff] %v452
    %489 = vst [vmem:[#allocation2 + $0xd8] sm:$0xff] %v454
    %490 = vst [vmem:[#allocation2 + $0xe0] sm:$0xff] %v345
    %491 = vst [vmem:[#allocation2 + $0xe8] sm:$0xff] %v347
    %492 = vst [vmem:[#allocation2 + $0xf0] sm:$0xff] %v458
    %493 = vst [vmem:[#allocation2 + $0xf8] sm:$0xff] %v460
    %v494 = vld [vmem:[#allocation2] sm:$0xff]
    %v495 = vld [vmem:[#allocation2 + $0x8] sm:$0xff]
    %v496 = vld [vmem:[#allocation2 + $0x10] sm:$0xff]
    %v497 = vld [vmem:[#allocation2 + $0x18] sm:$0xff]
    %498 = vmatprep.subr.mxu0 %v114
    %499 = vmatpush1.msra.mxu0 %v113
    %500 = vmatprep.subr.mxu0 %v118
    %501 = vmatpush1.msra.mxu0 %v117
    %502 = vmatprep.subr.mxu0 %v122
    %503 = vmatpush1.msra.mxu0 %v121
    %504 = vmatprep.subr.mxu0 %v126
    %505 = vmatpush1.msra.mxu0 %v125
    %506 = vmatprep.subr.mxu0 %v130
    %507 = vmatpush1.msra.mxu0 %v129
    %508 = vmatprep.subr.mxu0 %v134
    %509 = vmatpush1.msra.mxu0 %v133
    %510 = vmatprep.subr.mxu0 %v138
    %511 = vmatpush1.msra.mxu0 %v137
    %512 = vmatprep.subr.mxu0 %v142
    %513 = vmatpush1.msra.mxu0 %v141
    %514 = vmatprep.subr.mxu0 %v146
    %515 = vmatpush1.msra.mxu0 %v145
    %516 = vmatprep.subr.mxu0 %v150
    %517 = vmatpush1.msra.mxu0 %v149
    %518 = vmatprep.subr.mxu0 %v154
    %519 = vmatpush1.msra.mxu0 %v153
    %520 = vmatprep.subr.mxu0 %v158
    %521 = vmatpush1.msra.mxu0 %v157
    %522 = vmatprep.subr.mxu0 %v162
    %523 = vmatpush1.msra.mxu0 %v161
    %524 = vmatprep.subr.mxu0 %v166
    %525 = vmatpush1.msra.mxu0 %v165
    %526 = vmatprep.subr.mxu0 %v170
    %527 = vmatpush1.msra.mxu0 %v169
    %528 = vmatprep.subr.mxu0 %v174
    %529 = vmatpush1.msra.mxu0 %v173
    %530 = vmatprep.subr.mxu0 0.0
    %531 = vmatpush1.msra.mxu0 0.0
    %532 = vmatprep.subr.mxu0 0.0
    %533 = vmatpush1.msra.mxu0 0.0
    %534 = vmatprep.subr.mxu0 0.0
    %535 = vmatpush1.msra.mxu0 0.0
    %536 = vmatprep.subr.mxu0 0.0
    %537 = vmatpush1.msra.mxu0 0.0
    %538 = vmatprep.subr.mxu0 0.0
    %539 = vmatpush1.msra.mxu0 0.0
    %540 = vmatprep.subr.mxu0 0.0
    %541 = vmatpush1.msra.mxu0 0.0
    %542 = vmatprep.subr.mxu0 0.0
    %543 = vmatpush1.msra.mxu0 0.0
    %544 = vmatprep.subr.mxu0 0.0
    %545 = vmatpush1.msra.mxu0 0.0
    %546 = vmatprep.subr.mxu0 0.0
    %547 = vmatpush1.msra.mxu0 0.0
    %548 = vmatprep.subr.mxu0 0.0
    %549 = vmatpush1.msra.mxu0 0.0
    %550 = vmatprep.subr.mxu0 0.0
    %551 = vmatpush1.msra.mxu0 0.0
    %552 = vmatprep.subr.mxu0 0.0
    %553 = vmatpush1.msra.mxu0 0.0
    %554 = vmatprep.subr.mxu0 0.0
    %555 = vmatpush1.msra.mxu0 0.0
    %556 = vmatprep.subr.mxu0 0.0
    %557 = vmatpush1.msra.mxu0 0.0
    %558 = vmatprep.subr.mxu0 0.0
    %559 = vmatpush1.msra.mxu0 0.0
    %560 = vmatprep.subr.mxu0 0.0
    %561 = vmatpush1.msra.mxu0 0.0
    %562 = vmatprep.mubr.f32.mxu0 0.0
    %563 = vmatmul.mubr.f32.gmra.mrb[0].mxu0 0.0
    %v564 = vpop.f32.mrb[0].mxu0
    %v565 = vadd.f32 0.0, %v564
    %v566 = vpop.f32.mrb[0].mxu0
    %v567 = vadd.f32 0.0, %v566
    %568 = vdwg.mxu0
    %569 = vmatprep.subr.mxu0 %v116
    %570 = vmatpush1.msra.mxu0 %v115
    %571 = vmatprep.subr.mxu0 %v120
    %572 = vmatpush1.msra.mxu0 %v119
    %573 = vmatprep.subr.mxu0 %v124
    %574 = vmatpush1.msra.mxu0 %v123
    %575 = vmatprep.subr.mxu0 %v128
    %576 = vmatpush1.msra.mxu0 %v127
    %577 = vmatprep.subr.mxu0 %v132
    %578 = vmatpush1.msra.mxu0 %v131
    %579 = vmatprep.subr.mxu0 %v136
    %580 = vmatpush1.msra.mxu0 %v135
    %581 = vmatprep.subr.mxu0 %v140
    %582 = vmatpush1.msra.mxu0 %v139
    %583 = vmatprep.subr.mxu0 %v144
    %584 = vmatpush1.msra.mxu0 %v143
    %585 = vmatprep.subr.mxu0 %v148
    %586 = vmatpush1.msra.mxu0 %v147
    %587 = vmatprep.subr.mxu0 %v152
    %588 = vmatpush1.msra.mxu0 %v151
    %589 = vmatprep.subr.mxu0 %v156
    %590 = vmatpush1.msra.mxu0 %v155
    %591 = vmatprep.subr.mxu0 %v160
    %592 = vmatpush1.msra.mxu0 %v159
    %593 = vmatprep.subr.mxu0 %v164
    %594 = vmatpush1.msra.mxu0 %v163
    %595 = vmatprep.subr.mxu0 %v168
    %596 = vmatpush1.msra.mxu0 %v167
    %597 = vmatprep.subr.mxu0 %v172
    %598 = vmatpush1.msra.mxu0 %v171
    %599 = vmatprep.subr.mxu0 %v176
    %600 = vmatpush1.msra.mxu0 %v175
    %601 = vmatprep.subr.mxu0 0.0
    %602 = vmatpush1.msra.mxu0 0.0
    %603 = vmatprep.subr.mxu0 0.0
    %604 = vmatpush1.msra.mxu0 0.0
    %605 = vmatprep.subr.mxu0 0.0
    %606 = vmatpush1.msra.mxu0 0.0
    %607 = vmatprep.subr.mxu0 0.0
    %608 = vmatpush1.msra.mxu0 0.0
    %609 = vmatprep.subr.mxu0 0.0
    %610 = vmatpush1.msra.mxu0 0.0
    %611 = vmatprep.subr.mxu0 0.0
    %612 = vmatpush1.msra.mxu0 0.0
    %613 = vmatprep.subr.mxu0 0.0
    %614 = vmatpush1.msra.mxu0 0.0
    %615 = vmatprep.subr.mxu0 0.0
    %616 = vmatpush1.msra.mxu0 0.0
    %617 = vmatprep.subr.mxu0 0.0
    %618 = vmatpush1.msra.mxu0 0.0
    %619 = vmatprep.subr.mxu0 0.0
    %620 = vmatpush1.msra.mxu0 0.0
    %621 = vmatprep.subr.mxu0 0.0
    %622 = vmatpush1.msra.mxu0 0.0
    %623 = vmatprep.subr.mxu0 0.0
    %624 = vmatpush1.msra.mxu0 0.0
    %625 = vmatprep.subr.mxu0 0.0
    %626 = vmatpush1.msra.mxu0 0.0
    %627 = vmatprep.subr.mxu0 0.0
    %628 = vmatpush1.msra.mxu0 0.0
    %629 = vmatprep.subr.mxu0 0.0
    %630 = vmatpush1.msra.mxu0 0.0
    %631 = vmatprep.subr.mxu0 0.0
    %632 = vmatpush1.msra.mxu0 0.0
    %633 = vmatprep.mubr.f32.mxu0 0.0
    %634 = vmatmul.mubr.f32.gmra.mrb[0].mxu0 0.0
    %v635 = vpop.f32.mrb[0].mxu0
    %v636 = vadd.f32 0.0, %v635
    %v637 = vpop.f32.mrb[0].mxu0
    %v638 = vadd.f32 0.0, %v637
    %639 = vdwg.mxu0
    %v640 = vadd.f32 %v494, %v565
    %v641 = vadd.f32 %v495, %v567
    %v642 = vadd.f32 %v496, %v636
    %v643 = vadd.f32 %v497, %v638
    %v644 = vxor.u32 %v640, 2147483648
    %v645 = vxor.u32 %v641, 2147483648
    %v646 = vxor.u32 %v642, 2147483648
    %v647 = vmul.f32 %v644, 1.442695
    %v648 = vpow.pop %v647
    %v649 = vmul.f32 %v645, 1.442695
    %v650 = vpow.pop %v649
    %v651 = vmul.f32 %v646, 1.442695
    %v652 = vpow.pop %v651
    %v653 = vadd.f32 %v648, 1.0
    %v654 = vadd.f32 %v650, 1.0
    %v655 = vadd.f32 %v652, 1.0
    %v656 = vrcp.pop %v653
    %v657 = vmul.f32 1.0, %v656
    %v658 = vrcp.pop %v654
    %v659 = vmul.f32 1.0, %v658
    %v660 = vrcp.pop %v655
    %v661 = vmul.f32 1.0, %v660
    %v662 = vtanh.pop %v643
    %v663 = vmul.f32 %v659, 0.0
    %v664 = vmul.f32 %v657, %v662
    %v665 = vadd.f32 %v663, %v664
    %v666 = vtanh.pop %v665
    %v667 = vmul.f32 %v661, %v666
    %668 = vst [vmem:[#allocation3] sm:$0xff] %v667
    %s669 = scalar_lea.vmem [#allocation2], 32
    %v670 = vld [vmem:[%s669] sm:$0xff]
    %v671 = vld [vmem:[%s669 + $0x8] sm:$0xff]
    %v672 = vld [vmem:[%s669 + $0x10] sm:$0xff]
    %v673 = vld [vmem:[%s669 + $0x18] sm:$0xff]
    %674 = vmatprep.subr.mxu0 %v114
    %675 = vmatpush1.msra.mxu0 %v113
    %676 = vmatprep.subr.mxu0 %v118
    %677 = vmatpush1.msra.mxu0 %v117
    %678 = vmatprep.subr.mxu0 %v122
    %679 = vmatpush1.msra.mxu0 %v121
    %680 = vmatprep.subr.mxu0 %v126
    %681 = vmatpush1.msra.mxu0 %v125
    %682 = vmatprep.subr.mxu0 %v130
    %683 = vmatpush1.msra.mxu0 %v129
    %684 = vmatprep.subr.mxu0 %v134
    %685 = vmatpush1.msra.mxu0 %v133
    %686 = vmatprep.subr.mxu0 %v138
    %687 = vmatpush1.msra.mxu0 %v137
    %688 = vmatprep.subr.mxu0 %v142
    %689 = vmatpush1.msra.mxu0 %v141
    %690 = vmatprep.subr.mxu0 %v146
    %691 = vmatpush1.msra.mxu0 %v145
    %692 = vmatprep.subr.mxu0 %v150
    %693 = vmatpush1.msra.mxu0 %v149
    %694 = vmatprep.subr.mxu0 %v154
    %695 = vmatpush1.msra.mxu0 %v153
    %696 = vmatprep.subr.mxu0 %v158
    %697 = vmatpush1.msra.mxu0 %v157
    %698 = vmatprep.subr.mxu0 %v162
    %699 = vmatpush1.msra.mxu0 %v161
    %700 = vmatprep.subr.mxu0 %v166
    %701 = vmatpush1.msra.mxu0 %v165
    %702 = vmatprep.subr.mxu0 %v170
    %703 = vmatpush1.msra.mxu0 %v169
    %704 = vmatprep.subr.mxu0 %v174
    %705 = vmatpush1.msra.mxu0 %v173
    %706 = vmatprep.subr.mxu0 0.0
    %707 = vmatpush1.msra.mxu0 0.0
    %708 = vmatprep.subr.mxu0 0.0
    %709 = vmatpush1.msra.mxu0 0.0
    %710 = vmatprep.subr.mxu0 0.0
    %711 = vmatpush1.msra.mxu0 0.0
    %712 = vmatprep.subr.mxu0 0.0
    %713 = vmatpush1.msra.mxu0 0.0
    %714 = vmatprep.subr.mxu0 0.0
    %715 = vmatpush1.msra.mxu0 0.0
    %716 = vmatprep.subr.mxu0 0.0
    %717 = vmatpush1.msra.mxu0 0.0
    %718 = vmatprep.subr.mxu0 0.0
    %719 = vmatpush1.msra.mxu0 0.0
    %720 = vmatprep.subr.mxu0 0.0
    %721 = vmatpush1.msra.mxu0 0.0
    %722 = vmatprep.subr.mxu0 0.0
    %723 = vmatpush1.msra.mxu0 0.0
    %724 = vmatprep.subr.mxu0 0.0
    %725 = vmatpush1.msra.mxu0 0.0
    %726 = vmatprep.subr.mxu0 0.0
    %727 = vmatpush1.msra.mxu0 0.0
    %728 = vmatprep.subr.mxu0 0.0
    %729 = vmatpush1.msra.mxu0 0.0
    %730 = vmatprep.subr.mxu0 0.0
    %731 = vmatpush1.msra.mxu0 0.0
    %732 = vmatprep.subr.mxu0 0.0
    %733 = vmatpush1.msra.mxu0 0.0
    %734 = vmatprep.subr.mxu0 0.0
    %735 = vmatpush1.msra.mxu0 0.0
    %736 = vmatprep.subr.mxu0 0.0
    %737 = vmatpush1.msra.mxu0 0.0
    %738 = vmatprep.mubr.f32.mxu0 0.0
    %739 = vmatmul.mubr.f32.gmra.mrb[0].mxu0 %v667
    %v740 = vpop.f32.mrb[0].mxu0
    %v741 = vadd.f32 0.0, %v740
    %v742 = vpop.f32.mrb[0].mxu0
    %v743 = vadd.f32 0.0, %v742
    %744 = vdwg.mxu0
    %745 = vmatprep.subr.mxu0 %v116
    %746 = vmatpush1.msra.mxu0 %v115
    %747 = vmatprep.subr.mxu0 %v120
    %748 = vmatpush1.msra.mxu0 %v119
    %749 = vmatprep.subr.mxu0 %v124
    %750 = vmatpush1.msra.mxu0 %v123
    %751 = vmatprep.subr.mxu0 %v128
    %752 = vmatpush1.msra.mxu0 %v127
    %753 = vmatprep.subr.mxu0 %v132
    %754 = vmatpush1.msra.mxu0 %v131
    %755 = vmatprep.subr.mxu0 %v136
    %756 = vmatpush1.msra.mxu0 %v135
    %757 = vmatprep.subr.mxu0 %v140
    %758 = vmatpush1.msra.mxu0 %v139
    %759 = vmatprep.subr.mxu0 %v144
    %760 = vmatpush1.msra.mxu0 %v143
    %761 = vmatprep.subr.mxu0 %v148
    %762 = vmatpush1.msra.mxu0 %v147
    %763 = vmatprep.subr.mxu0 %v152
    %764 = vmatpush1.msra.mxu0 %v151
    %765 = vmatprep.subr.mxu0 %v156
    %766 = vmatpush1.msra.mxu0 %v155
    %767 = vmatprep.subr.mxu0 %v160
    %768 = vmatpush1.msra.mxu0 %v159
    %769 = vmatprep.subr.mxu0 %v164
    %770 = vmatpush1.msra.mxu0 %v163
    %771 = vmatprep.subr.mxu0 %v168
    %772 = vmatpush1.msra.mxu0 %v167
    %773 = vmatprep.subr.mxu0 %v172
    %774 = vmatpush1.msra.mxu0 %v171
    %775 = vmatprep.subr.mxu0 %v176
    %776 = vmatpush1.msra.mxu0 %v175
    %777 = vmatprep.subr.mxu0 0.0
    %778 = vmatpush1.msra.mxu0 0.0
    %779 = vmatprep.subr.mxu0 0.0
    %780 = vmatpush1.msra.mxu0 0.0
    %781 = vmatprep.subr.mxu0 0.0
    %782 = vmatpush1.msra.mxu0 0.0
    %783 = vmatprep.subr.mxu0 0.0
    %784 = vmatpush1.msra.mxu0 0.0
    %785 = vmatprep.subr.mxu0 0.0
    %786 = vmatpush1.msra.mxu0 0.0
    %787 = vmatprep.subr.mxu0 0.0
    %788 = vmatpush1.msra.mxu0 0.0
    %789 = vmatprep.subr.mxu0 0.0
    %790 = vmatpush1.msra.mxu0 0.0
    %791 = vmatprep.subr.mxu0 0.0
    %792 = vmatpush1.msra.mxu0 0.0
    %793 = vmatprep.subr.mxu0 0.0
    %794 = vmatpush1.msra.mxu0 0.0
    %795 = vmatprep.subr.mxu0 0.0
    %796 = vmatpush1.msra.mxu0 0.0
    %797 = vmatprep.subr.mxu0 0.0
    %798 = vmatpush1.msra.mxu0 0.0
    %799 = vmatprep.subr.mxu0 0.0
    %800 = vmatpush1.msra.mxu0 0.0
    %801 = vmatprep.subr.mxu0 0.0
    %802 = vmatpush1.msra.mxu0 0.0
    %803 = vmatprep.subr.mxu0 0.0
    %804 = vmatpush1.msra.mxu0 0.0
    %805 = vmatprep.subr.mxu0 0.0
    %806 = vmatpush1.msra.mxu0 0.0
    %807 = vmatprep.subr.mxu0 0.0
    %808 = vmatpush1.msra.mxu0 0.0
    %809 = vmatprep.mubr.f32.mxu0 0.0
    %810 = vmatmul.mubr.f32.gmra.mrb[0].mxu0 %v667
    %v811 = vpop.f32.mrb[0].mxu0
    %v812 = vadd.f32 0.0, %v811
    %v813 = vpop.f32.mrb[0].mxu0
    %v814 = vadd.f32 0.0, %v813
    %815 = vdwg.mxu0
    %v816 = vadd.f32 %v670, %v741
    %v817 = vadd.f32 %v671, %v743
    %v818 = vadd.f32 %v672, %v812
    %v819 = vadd.f32 %v673, %v814
    %v820 = vxor.u32 %v816, 2147483648
    %v821 = vxor.u32 %v817, 2147483648
    %v822 = vxor.u32 %v818, 2147483648
    %v823 = vmul.f32 %v820, 1.442695
    %v824 = vpow.pop %v823
    %v825 = vmul.f32 %v821, 1.442695
    %v826 = vpow.pop %v825
    %v827 = vmul.f32 %v822, 1.442695
    %v828 = vpow.pop %v827
    %v829 = vadd.f32 %v824, 1.0
    %v830 = vadd.f32 %v826, 1.0
    %v831 = vadd.f32 %v828, 1.0
    %v832 = vrcp.pop %v829
    %v833 = vmul.f32 1.0, %v832
    %v834 = vrcp.pop %v830
    %v835 = vmul.f32 1.0, %v834
    %v836 = vrcp.pop %v831
    %v837 = vmul.f32 1.0, %v836
    %v838 = vtanh.pop %v819
    %v839 = vmul.f32 %v835, %v665
    %v840 = vmul.f32 %v833, %v838
    %v841 = vadd.f32 %v839, %v840
    %v842 = vtanh.pop %v841
    %v843 = vmul.f32 %v837, %v842
    %s844 = scalar_lea.vmem [#allocation3], 8
    %845 = vst [vmem:[%s844] sm:$0xff] %v843
    %s846 = scalar_lea.vmem [#allocation2], 64
    %v847 = vld [vmem:[%s846] sm:$0xff]
    %v848 = vld [vmem:[%s846 + $0x8] sm:$0xff]
    %v849 = vld [vmem:[%s846 + $0x10] sm:$0xff]
    %v850 = vld [vmem:[%s846 + $0x18] sm:$0xff]
    %851 = vmatprep.subr.mxu0 %v114
    %852 = vmatpush1.msra.mxu0 %v113
    %853 = vmatprep.subr.mxu0 %v118
    %854 = vmatpush1.msra.mxu0 %v117
    %855 = vmatprep.subr.mxu0 %v122
    %856 = vmatpush1.msra.mxu0 %v121
    %857 = vmatprep.subr.mxu0 %v126
    %858 = vmatpush1.msra.mxu0 %v125
    %859 = vmatprep.subr.mxu0 %v130
    %860 = vmatpush1.msra.mxu0 %v129
    %861 = vmatprep.subr.mxu0 %v134
    %862 = vmatpush1.msra.mxu0 %v133
    %863 = vmatprep.subr.mxu0 %v138
    %864 = vmatpush1.msra.mxu0 %v137
    %865 = vmatprep.subr.mxu0 %v142
    %866 = vmatpush1.msra.mxu0 %v141
    %867 = vmatprep.subr.mxu0 %v146
    %868 = vmatpush1.msra.mxu0 %v145
    %869 = vmatprep.subr.mxu0 %v150
    %870 = vmatpush1.msra.mxu0 %v149
    %871 = vmatprep.subr.mxu0 %v154
    %872 = vmatpush1.msra.mxu0 %v153
    %873 = vmatprep.subr.mxu0 %v158
    %874 = vmatpush1.msra.mxu0 %v157
    %875 = vmatprep.subr.mxu0 %v162
    %876 = vmatpush1.msra.mxu0 %v161
    %877 = vmatprep.subr.mxu0 %v166
    %878 = vmatpush1.msra.mxu0 %v165
    %879 = vmatprep.subr.mxu0 %v170
    %880 = vmatpush1.msra.mxu0 %v169
    %881 = vmatprep.subr.mxu0 %v174
    %882 = vmatpush1.msra.mxu0 %v173
    %883 = vmatprep.subr.mxu0 0.0
    %884 = vmatpush1.msra.mxu0 0.0
    %885 = vmatprep.subr.mxu0 0.0
    %886 = vmatpush1.msra.mxu0 0.0
    %887 = vmatprep.subr.mxu0 0.0
    %888 = vmatpush1.msra.mxu0 0.0
    %889 = vmatprep.subr.mxu0 0.0
    %890 = vmatpush1.msra.mxu0 0.0
    %891 = vmatprep.subr.mxu0 0.0
    %892 = vmatpush1.msra.mxu0 0.0
    %893 = vmatprep.subr.mxu0 0.0
    %894 = vmatpush1.msra.mxu0 0.0
    %895 = vmatprep.subr.mxu0 0.0
    %896 = vmatpush1.msra.mxu0 0.0
    %897 = vmatprep.subr.mxu0 0.0
    %898 = vmatpush1.msra.mxu0 0.0
    %899 = vmatprep.subr.mxu0 0.0
    %900 = vmatpush1.msra.mxu0 0.0
    %901 = vmatprep.subr.mxu0 0.0
    %902 = vmatpush1.msra.mxu0 0.0
    %903 = vmatprep.subr.mxu0 0.0
    %904 = vmatpush1.msra.mxu0 0.0
    %905 = vmatprep.subr.mxu0 0.0
    %906 = vmatpush1.msra.mxu0 0.0
    %907 = vmatprep.subr.mxu0 0.0
    %908 = vmatpush1.msra.mxu0 0.0
    %909 = vmatprep.subr.mxu0 0.0
    %910 = vmatpush1.msra.mxu0 0.0
    %911 = vmatprep.subr.mxu0 0.0
    %912 = vmatpush1.msra.mxu0 0.0
    %913 = vmatprep.subr.mxu0 0.0
    %914 = vmatpush1.msra.mxu0 0.0
    %915 = vmatprep.mubr.f32.mxu0 0.0
    %916 = vmatmul.mubr.f32.gmra.mrb[0].mxu0 %v843
    %v917 = vpop.f32.mrb[0].mxu0
    %v918 = vadd.f32 0.0, %v917
    %v919 = vpop.f32.mrb[0].mxu0
    %v920 = vadd.f32 0.0, %v919
    %921 = vdwg.mxu0
    %922 = vmatprep.subr.mxu0 %v116
    %923 = vmatpush1.msra.mxu0 %v115
    %924 = vmatprep.subr.mxu0 %v120
    %925 = vmatpush1.msra.mxu0 %v119
    %926 = vmatprep.subr.mxu0 %v124
    %927 = vmatpush1.msra.mxu0 %v123
    %928 = vmatprep.subr.mxu0 %v128
    %929 = vmatpush1.msra.mxu0 %v127
    %930 = vmatprep.subr.mxu0 %v132
    %931 = vmatpush1.msra.mxu0 %v131
    %932 = vmatprep.subr.mxu0 %v136
    %933 = vmatpush1.msra.mxu0 %v135
    %934 = vmatprep.subr.mxu0 %v140
    %935 = vmatpush1.msra.mxu0 %v139
    %936 = vmatprep.subr.mxu0 %v144
    %937 = vmatpush1.msra.mxu0 %v143
    %938 = vmatprep.subr.mxu0 %v148
    %939 = vmatpush1.msra.mxu0 %v147
    %940 = vmatprep.subr.mxu0 %v152
    %941 = vmatpush1.msra.mxu0 %v151
    %942 = vmatprep.subr.mxu0 %v156
    %943 = vmatpush1.msra.mxu0 %v155
    %944 = vmatprep.subr.mxu0 %v160
    %945 = vmatpush1.msra.mxu0 %v159
    %946 = vmatprep.subr.mxu0 %v164
    %947 = vmatpush1.msra.mxu0 %v163
    %948 = vmatprep.subr.mxu0 %v168
    %949 = vmatpush1.msra.mxu0 %v167
    %950 = vmatprep.subr.mxu0 %v172
    %951 = vmatpush1.msra.mxu0 %v171
    %952 = vmatprep.subr.mxu0 %v176
    %953 = vmatpush1.msra.mxu0 %v175
    %954 = vmatprep.subr.mxu0 0.0
    %955 = vmatpush1.msra.mxu0 0.0
    %956 = vmatprep.subr.mxu0 0.0
    %957 = vmatpush1.msra.mxu0 0.0
    %958 = vmatprep.subr.mxu0 0.0
    %959 = vmatpush1.msra.mxu0 0.0
    %960 = vmatprep.subr.mxu0 0.0
    %961 = vmatpush1.msra.mxu0 0.0
    %962 = vmatprep.subr.mxu0 0.0
    %963 = vmatpush1.msra.mxu0 0.0
    %964 = vmatprep.subr.mxu0 0.0
    %965 = vmatpush1.msra.mxu0 0.0
    %966 = vmatprep.subr.mxu0 0.0
    %967 = vmatpush1.msra.mxu0 0.0
    %968 = vmatprep.subr.mxu0 0.0
    %969 = vmatpush1.msra.mxu0 0.0
    %970 = vmatprep.subr.mxu0 0.0
    %971 = vmatpush1.msra.mxu0 0.0
    %972 = vmatprep.subr.mxu0 0.0
    %973 = vmatpush1.msra.mxu0 0.0
    %974 = vmatprep.subr.mxu0 0.0
    %975 = vmatpush1.msra.mxu0 0.0
    %976 = vmatprep.subr.mxu0 0.0
    %977 = vmatpush1.msra.mxu0 0.0
    %978 = vmatprep.subr.mxu0 0.0
    %979 = vmatpush1.msra.mxu0 0.0
    %980 = vmatprep.subr.mxu0 0.0
    %981 = vmatpush1.msra.mxu0 0.0
    %982 = vmatprep.subr.mxu0 0.0
    %983 = vmatpush1.msra.mxu0 0.0
    %984 = vmatprep.subr.mxu0 0.0
    %985 = vmatpush1.msra.mxu0 0.0
    %986 = vmatprep.mubr.f32.mxu0 0.0
    %987 = vmatmul.mubr.f32.gmra.mrb[0].mxu0 %v843
    %v988 = vpop.f32.mrb[0].mxu0
    %v989 = vadd.f32 0.0, %v988
    %v990 = vpop.f32.mrb[0].mxu0
    %v991 = vadd.f32 0.0, %v990
    %992 = vdwg.mxu0
    %v993 = vadd.f32 %v847, %v918
    %v994 = vadd.f32 %v848, %v920
    %v995 = vadd.f32 %v849, %v989
    %v996 = vadd.f32 %v850, %v991
    %v997 = vxor.u32 %v993, 2147483648
    %v998 = vxor.u32 %v994, 2147483648
    %v999 = vxor.u32 %v995, 2147483648
    %v1000 = vmul.f32 %v997, 1.442695
    %v1001 = vpow.pop %v1000
    %v1002 = vmul.f32 %v998, 1.442695
    %v1003 = vpow.pop %v1002
    %v1004 = vmul.f32 %v999, 1.442695
    %v1005 = vpow.pop %v1004
    %v1006 = vadd.f32 %v1001, 1.0
    %v1007 = vadd.f32 %v1003, 1.0
    %v1008 = vadd.f32 %v1005, 1.0
    %v1009 = vrcp.pop %v1006
    %v1010 = vmul.f32 1.0, %v1009
    %v1011 = vrcp.pop %v1007
    %v1012 = vmul.f32 1.0, %v1011
    %v1013 = vrcp.pop %v1008
    %v1014 = vmul.f32 1.0, %v1013
    %v1015 = vtanh.pop %v996
    %v1016 = vmul.f32 %v1012, %v841
    %v1017 = vmul.f32 %v1010, %v1015
    %v1018 = vadd.f32 %v1016, %v1017
    %v1019 = vtanh.pop %v1018
    %v1020 = vmul.f32 %v1014, %v1019
    %s1021 = scalar_lea.vmem [#allocation3], 16
    %1022 = vst [vmem:[%s1021] sm:$0xff] %v1020
    %s1023 = scalar_lea.vmem [#allocation2], 96
    %v1024 = vld [vmem:[%s1023] sm:$0xff]
    %v1025 = vld [vmem:[%s1023 + $0x8] sm:$0xff]
    %v1026 = vld [vmem:[%s1023 + $0x10] sm:$0xff]
    %v1027 = vld [vmem:[%s1023 + $0x18] sm:$0xff]
    %1028 = vmatprep.subr.mxu0 %v114
    %1029 = vmatpush1.msra.mxu0 %v113
    %1030 = vmatprep.subr.mxu0 %v118
    %1031 = vmatpush1.msra.mxu0 %v117
    %1032 = vmatprep.subr.mxu0 %v122
    %1033 = vmatpush1.msra.mxu0 %v121
    %1034 = vmatprep.subr.mxu0 %v126
    %1035 = vmatpush1.msra.mxu0 %v125
    %1036 = vmatprep.subr.mxu0 %v130
    %1037 = vmatpush1.msra.mxu0 %v129
    %1038 = vmatprep.subr.mxu0 %v134
    %1039 = vmatpush1.msra.mxu0 %v133
    %1040 = vmatprep.subr.mxu0 %v138
    %1041 = vmatpush1.msra.mxu0 %v137
    %1042 = vmatprep.subr.mxu0 %v142
    %1043 = vmatpush1.msra.mxu0 %v141
    %1044 = vmatprep.subr.mxu0 %v146
    %1045 = vmatpush1.msra.mxu0 %v145
    %1046 = vmatprep.subr.mxu0 %v150
    %1047 = vmatpush1.msra.mxu0 %v149
    %1048 = vmatprep.subr.mxu0 %v154
    %1049 = vmatpush1.msra.mxu0 %v153
    %1050 = vmatprep.subr.mxu0 %v158
    %1051 = vmatpush1.msra.mxu0 %v157
    %1052 = vmatprep.subr.mxu0 %v162
    %1053 = vmatpush1.msra.mxu0 %v161
    %1054 = vmatprep.subr.mxu0 %v166
    %1055 = vmatpush1.msra.mxu0 %v165
    %1056 = vmatprep.subr.mxu0 %v170
    %1057 = vmatpush1.msra.mxu0 %v169
    %1058 = vmatprep.subr.mxu0 %v174
    %1059 = vmatpush1.msra.mxu0 %v173
    %1060 = vmatprep.subr.mxu0 0.0
    %1061 = vmatpush1.msra.mxu0 0.0
    %1062 = vmatprep.subr.mxu0 0.0
    %1063 = vmatpush1.msra.mxu0 0.0
    %1064 = vmatprep.subr.mxu0 0.0
    %1065 = vmatpush1.msra.mxu0 0.0
    %1066 = vmatprep.subr.mxu0 0.0
    %1067 = vmatpush1.msra.mxu0 0.0
    %1068 = vmatprep.subr.mxu0 0.0
    %1069 = vmatpush1.msra.mxu0 0.0
    %1070 = vmatprep.subr.mxu0 0.0
    %1071 = vmatpush1.msra.mxu0 0.0
    %1072 = vmatprep.subr.mxu0 0.0
    %1073 = vmatpush1.msra.mxu0 0.0
    %1074 = vmatprep.subr.mxu0 0.0
    %1075 = vmatpush1.msra.mxu0 0.0
    %1076 = vmatprep.subr.mxu0 0.0
    %1077 = vmatpush1.msra.mxu0 0.0
    %1078 = vmatprep.subr.mxu0 0.0
    %1079 = vmatpush1.msra.mxu0 0.0
    %1080 = vmatprep.subr.mxu0 0.0
    %1081 = vmatpush1.msra.mxu0 0.0
    %1082 = vmatprep.subr.mxu0 0.0
    %1083 = vmatpush1.msra.mxu0 0.0
    %1084 = vmatprep.subr.mxu0 0.0
    %1085 = vmatpush1.msra.mxu0 0.0
    %1086 = vmatprep.subr.mxu0 0.0
    %1087 = vmatpush1.msra.mxu0 0.0
    %1088 = vmatprep.subr.mxu0 0.0
    %1089 = vmatpush1.msra.mxu0 0.0
    %1090 = vmatprep.subr.mxu0 0.0
    %1091 = vmatpush1.msra.mxu0 0.0
    %1092 = vmatprep.mubr.f32.mxu0 0.0
    %1093 = vmatmul.mubr.f32.gmra.mrb[0].mxu0 %v1020
    %v1094 = vpop.f32.mrb[0].mxu0
    %v1095 = vadd.f32 0.0, %v1094
    %v1096 = vpop.f32.mrb[0].mxu0
    %v1097 = vadd.f32 0.0, %v1096
    %1098 = vdwg.mxu0
    %1099 = vmatprep.subr.mxu0 %v116
    %1100 = vmatpush1.msra.mxu0 %v115
    %1101 = vmatprep.subr.mxu0 %v120
    %1102 = vmatpush1.msra.mxu0 %v119
    %1103 = vmatprep.subr.mxu0 %v124
    %1104 = vmatpush1.msra.mxu0 %v123
    %1105 = vmatprep.subr.mxu0 %v128
    %1106 = vmatpush1.msra.mxu0 %v127
    %1107 = vmatprep.subr.mxu0 %v132
    %1108 = vmatpush1.msra.mxu0 %v131
    %1109 = vmatprep.subr.mxu0 %v136
    %1110 = vmatpush1.msra.mxu0 %v135
    %1111 = vmatprep.subr.mxu0 %v140
    %1112 = vmatpush1.msra.mxu0 %v139
    %1113 = vmatprep.subr.mxu0 %v144
    %1114 = vmatpush1.msra.mxu0 %v143
    %1115 = vmatprep.subr.mxu0 %v148
    %1116 = vmatpush1.msra.mxu0 %v147
    %1117 = vmatprep.subr.mxu0 %v152
    %1118 = vmatpush1.msra.mxu0 %v151
    %1119 = vmatprep.subr.mxu0 %v156
    %1120 = vmatpush1.msra.mxu0 %v155
    %1121 = vmatprep.subr.mxu0 %v160
    %1122 = vmatpush1.msra.mxu0 %v159
    %1123 = vmatprep.subr.mxu0 %v164
    %1124 = vmatpush1.msra.mxu0 %v163
    %1125 = vmatprep.subr.mxu0 %v168
    %1126 = vmatpush1.msra.mxu0 %v167
    %1127 = vmatprep.subr.mxu0 %v172
    %1128 = vmatpush1.msra.mxu0 %v171
    %1129 = vmatprep.subr.mxu0 %v176
    %1130 = vmatpush1.msra.mxu0 %v175
    %1131 = vmatprep.subr.mxu0 0.0
    %1132 = vmatpush1.msra.mxu0 0.0
    %1133 = vmatprep.subr.mxu0 0.0
    %1134 = vmatpush1.msra.mxu0 0.0
    %1135 = vmatprep.subr.mxu0 0.0
    %1136 = vmatpush1.msra.mxu0 0.0
    %1137 = vmatprep.subr.mxu0 0.0
    %1138 = vmatpush1.msra.mxu0 0.0
    %1139 = vmatprep.subr.mxu0 0.0
    %1140 = vmatpush1.msra.mxu0 0.0
    %1141 = vmatprep.subr.mxu0 0.0
    %1142 = vmatpush1.msra.mxu0 0.0
    %1143 = vmatprep.subr.mxu0 0.0
    %1144 = vmatpush1.msra.mxu0 0.0
    %1145 = vmatprep.subr.mxu0 0.0
    %1146 = vmatpush1.msra.mxu0 0.0
    %1147 = vmatprep.subr.mxu0 0.0
    %1148 = vmatpush1.msra.mxu0 0.0
    %1149 = vmatprep.subr.mxu0 0.0
    %1150 = vmatpush1.msra.mxu0 0.0
    %1151 = vmatprep.subr.mxu0 0.0
    %1152 = vmatpush1.msra.mxu0 0.0
    %1153 = vmatprep.subr.mxu0 0.0
    %1154 = vmatpush1.msra.mxu0 0.0
    %1155 = vmatprep.subr.mxu0 0.0
    %1156 = vmatpush1.msra.mxu0 0.0
    %1157 = vmatprep.subr.mxu0 0.0
    %1158 = vmatpush1.msra.mxu0 0.0
    %1159 = vmatprep.subr.mxu0 0.0
    %1160 = vmatpush1.msra.mxu0 0.0
    %1161 = vmatprep.subr.mxu0 0.0
    %1162 = vmatpush1.msra.mxu0 0.0
    %1163 = vmatprep.mubr.f32.mxu0 0.0
    %1164 = vmatmul.mubr.f32.gmra.mrb[0].mxu0 %v1020
    %v1165 = vpop.f32.mrb[0].mxu0
    %v1166 = vadd.f32 0.0, %v1165
    %v1167 = vpop.f32.mrb[0].mxu0
    %v1168 = vadd.f32 0.0, %v1167
    %1169 = vdwg.mxu0
    %v1170 = vadd.f32 %v1024, %v1095
    %v1171 = vadd.f32 %v1025, %v1097
    %v1172 = vadd.f32 %v1026, %v1166
    %v1173 = vadd.f32 %v1027, %v1168
    %v1174 = vxor.u32 %v1170, 2147483648
    %v1175 = vxor.u32 %v1171, 2147483648
    %v1176 = vxor.u32 %v1172, 2147483648
    %v1177 = vmul.f32 %v1174, 1.442695
    %v1178 = vpow.pop %v1177
    %v1179 = vmul.f32 %v1175, 1.442695
    %v1180 = vpow.pop %v1179
    %v1181 = vmul.f32 %v1176, 1.442695
    %v1182 = vpow.pop %v1181
    %v1183 = vadd.f32 %v1178, 1.0
    %v1184 = vadd.f32 %v1180, 1.0
    %v1185 = vadd.f32 %v1182, 1.0
    %v1186 = vrcp.pop %v1183
    %v1187 = vmul.f32 1.0, %v1186
    %v1188 = vrcp.pop %v1184
    %v1189 = vmul.f32 1.0, %v1188
    %v1190 = vrcp.pop %v1185
    %v1191 = vmul.f32 1.0, %v1190
    %v1192 = vtanh.pop %v1173
    %v1193 = vmul.f32 %v1189, %v1018
    %v1194 = vmul.f32 %v1187, %v1192
    %v1195 = vadd.f32 %v1193, %v1194
    %v1196 = vtanh.pop %v1195
    %v1197 = vmul.f32 %v1191, %v1196
    %s1198 = scalar_lea.vmem [#allocation3], 24
    %1199 = vst [vmem:[%s1198] sm:$0xff] %v1197
    %s1200 = scalar_lea.vmem [#allocation2], 128
    %v1201 = vld [vmem:[%s1200] sm:$0xff]
    %v1202 = vld [vmem:[%s1200 + $0x8] sm:$0xff]
    %v1203 = vld [vmem:[%s1200 + $0x10] sm:$0xff]
    %v1204 = vld [vmem:[%s1200 + $0x18] sm:$0xff]
    %1205 = vmatprep.subr.mxu0 %v114
    %1206 = vmatpush1.msra.mxu0 %v113
    %1207 = vmatprep.subr.mxu0 %v118
    %1208 = vmatpush1.msra.mxu0 %v117
    %1209 = vmatprep.subr.mxu0 %v122
    %1210 = vmatpush1.msra.mxu0 %v121
    %1211 = vmatprep.subr.mxu0 %v126
    %1212 = vmatpush1.msra.mxu0 %v125
    %1213 = vmatprep.subr.mxu0 %v130
    %1214 = vmatpush1.msra.mxu0 %v129
    %1215 = vmatprep.subr.mxu0 %v134
    %1216 = vmatpush1.msra.mxu0 %v133
    %1217 = vmatprep.subr.mxu0 %v138
    %1218 = vmatpush1.msra.mxu0 %v137
    %1219 = vmatprep.subr.mxu0 %v142
    %1220 = vmatpush1.msra.mxu0 %v141
    %1221 = vmatprep.subr.mxu0 %v146
    %1222 = vmatpush1.msra.mxu0 %v145
    %1223 = vmatprep.subr.mxu0 %v150
    %1224 = vmatpush1.msra.mxu0 %v149
    %1225 = vmatprep.subr.mxu0 %v154
    %1226 = vmatpush1.msra.mxu0 %v153
    %1227 = vmatprep.subr.mxu0 %v158
    %1228 = vmatpush1.msra.mxu0 %v157
    %1229 = vmatprep.subr.mxu0 %v162
    %1230 = vmatpush1.msra.mxu0 %v161
    %1231 = vmatprep.subr.mxu0 %v166
    %1232 = vmatpush1.msra.mxu0 %v165
    %1233 = vmatprep.subr.mxu0 %v170
    %1234 = vmatpush1.msra.mxu0 %v169
    %1235 = vmatprep.subr.mxu0 %v174
    %1236 = vmatpush1.msra.mxu0 %v173
    %1237 = vmatprep.subr.mxu0 0.0
    %1238 = vmatpush1.msra.mxu0 0.0
    %1239 = vmatprep.subr.mxu0 0.0
    %1240 = vmatpush1.msra.mxu0 0.0
    %1241 = vmatprep.subr.mxu0 0.0
    %1242 = vmatpush1.msra.mxu0 0.0
    %1243 = vmatprep.subr.mxu0 0.0
    %1244 = vmatpush1.msra.mxu0 0.0
    %1245 = vmatprep.subr.mxu0 0.0
    %1246 = vmatpush1.msra.mxu0 0.0
    %1247 = vmatprep.subr.mxu0 0.0
    %1248 = vmatpush1.msra.mxu0 0.0
    %1249 = vmatprep.subr.mxu0 0.0
    %1250 = vmatpush1.msra.mxu0 0.0
    %1251 = vmatprep.subr.mxu0 0.0
    %1252 = vmatpush1.msra.mxu0 0.0
    %1253 = vmatprep.subr.mxu0 0.0
    %1254 = vmatpush1.msra.mxu0 0.0
    %1255 = vmatprep.subr.mxu0 0.0
    %1256 = vmatpush1.msra.mxu0 0.0
    %1257 = vmatprep.subr.mxu0 0.0
    %1258 = vmatpush1.msra.mxu0 0.0
    %1259 = vmatprep.subr.mxu0 0.0
    %1260 = vmatpush1.msra.mxu0 0.0
    %1261 = vmatprep.subr.mxu0 0.0
    %1262 = vmatpush1.msra.mxu0 0.0
    %1263 = vmatprep.subr.mxu0 0.0
    %1264 = vmatpush1.msra.mxu0 0.0
    %1265 = vmatprep.subr.mxu0 0.0
    %1266 = vmatpush1.msra.mxu0 0.0
    %1267 = vmatprep.subr.mxu0 0.0
    %1268 = vmatpush1.msra.mxu0 0.0
    %1269 = vmatprep.mubr.f32.mxu0 0.0
    %1270 = vmatmul.mubr.f32.gmra.mrb[0].mxu0 %v1197
    %v1271 = vpop.f32.mrb[0].mxu0
    %v1272 = vadd.f32 0.0, %v1271
    %v1273 = vpop.f32.mrb[0].mxu0
    %v1274 = vadd.f32 0.0, %v1273
    %1275 = vdwg.mxu0
    %1276 = vmatprep.subr.mxu0 %v116
    %1277 = vmatpush1.msra.mxu0 %v115
    %1278 = vmatprep.subr.mxu0 %v120
    %1279 = vmatpush1.msra.mxu0 %v119
    %1280 = vmatprep.subr.mxu0 %v124
    %1281 = vmatpush1.msra.mxu0 %v123
    %1282 = vmatprep.subr.mxu0 %v128
    %1283 = vmatpush1.msra.mxu0 %v127
    %1284 = vmatprep.subr.mxu0 %v132
    %1285 = vmatpush1.msra.mxu0 %v131
    %1286 = vmatprep.subr.mxu0 %v136
    %1287 = vmatpush1.msra.mxu0 %v135
    %1288 = vmatprep.subr.mxu0 %v140
    %1289 = vmatpush1.msra.mxu0 %v139
    %1290 = vmatprep.subr.mxu0 %v144
    %1291 = vmatpush1.msra.mxu0 %v143
    %1292 = vmatprep.subr.mxu0 %v148
    %1293 = vmatpush1.msra.mxu0 %v147
    %1294 = vmatprep.subr.mxu0 %v152
    %1295 = vmatpush1.msra.mxu0 %v151
    %1296 = vmatprep.subr.mxu0 %v156
    %1297 = vmatpush1.msra.mxu0 %v155
    %1298 = vmatprep.subr.mxu0 %v160
    %1299 = vmatpush1.msra.mxu0 %v159
    %1300 = vmatprep.subr.mxu0 %v164
    %1301 = vmatpush1.msra.mxu0 %v163
    %1302 = vmatprep.subr.mxu0 %v168
    %1303 = vmatpush1.msra.mxu0 %v167
    %1304 = vmatprep.subr.mxu0 %v172
    %1305 = vmatpush1.msra.mxu0 %v171
    %1306 = vmatprep.subr.mxu0 %v176
    %1307 = vmatpush1.msra.mxu0 %v175
    %1308 = vmatprep.subr.mxu0 0.0
    %1309 = vmatpush1.msra.mxu0 0.0
    %1310 = vmatprep.subr.mxu0 0.0
    %1311 = vmatpush1.msra.mxu0 0.0
    %1312 = vmatprep.subr.mxu0 0.0
    %1313 = vmatpush1.msra.mxu0 0.0
    %1314 = vmatprep.subr.mxu0 0.0
    %1315 = vmatpush1.msra.mxu0 0.0
    %1316 = vmatprep.subr.mxu0 0.0
    %1317 = vmatpush1.msra.mxu0 0.0
    %1318 = vmatprep.subr.mxu0 0.0
    %1319 = vmatpush1.msra.mxu0 0.0
    %1320 = vmatprep.subr.mxu0 0.0
    %1321 = vmatpush1.msra.mxu0 0.0
    %1322 = vmatprep.subr.mxu0 0.0
    %1323 = vmatpush1.msra.mxu0 0.0
    %1324 = vmatprep.subr.mxu0 0.0
    %1325 = vmatpush1.msra.mxu0 0.0
    %1326 = vmatprep.subr.mxu0 0.0
    %1327 = vmatpush1.msra.mxu0 0.0
    %1328 = vmatprep.subr.mxu0 0.0
    %1329 = vmatpush1.msra.mxu0 0.0
    %1330 = vmatprep.subr.mxu0 0.0
    %1331 = vmatpush1.msra.mxu0 0.0
    %1332 = vmatprep.subr.mxu0 0.0
    %1333 = vmatpush1.msra.mxu0 0.0
    %1334 = vmatprep.subr.mxu0 0.0
    %1335 = vmatpush1.msra.mxu0 0.0
    %1336 = vmatprep.subr.mxu0 0.0
    %1337 = vmatpush1.msra.mxu0 0.0
    %1338 = vmatprep.subr.mxu0 0.0
    %1339 = vmatpush1.msra.mxu0 0.0
    %1340 = vmatprep.mubr.f32.mxu0 0.0
    %1341 = vmatmul.mubr.f32.gmra.mrb[0].mxu0 %v1197
    %v1342 = vpop.f32.mrb[0].mxu0
    %v1343 = vadd.f32 0.0, %v1342
    %v1344 = vpop.f32.mrb[0].mxu0
    %v1345 = vadd.f32 0.0, %v1344
    %1346 = vdwg.mxu0
    %v1347 = vadd.f32 %v1201, %v1272
    %v1348 = vadd.f32 %v1202, %v1274
    %v1349 = vadd.f32 %v1203, %v1343
    %v1350 = vadd.f32 %v1204, %v1345
    %v1351 = vxor.u32 %v1347, 2147483648
    %v1352 = vxor.u32 %v1348, 2147483648
    %v1353 = vxor.u32 %v1349, 2147483648
    %v1354 = vmul.f32 %v1351, 1.442695
    %v1355 = vpow.pop %v1354
    %v1356 = vmul.f32 %v1352, 1.442695
    %v1357 = vpow.pop %v1356
    %v1358 = vmul.f32 %v1353, 1.442695
    %v1359 = vpow.pop %v1358
    %v1360 = vadd.f32 %v1355, 1.0
    %v1361 = vadd.f32 %v1357, 1.0
    %v1362 = vadd.f32 %v1359, 1.0
    %v1363 = vrcp.pop %v1360
    %v1364 = vmul.f32 1.0, %v1363
    %v1365 = vrcp.pop %v1361
    %v1366 = vmul.f32 1.0, %v1365
    %v1367 = vrcp.pop %v1362
    %v1368 = vmul.f32 1.0, %v1367
    %v1369 = vtanh.pop %v1350
    %v1370 = vmul.f32 %v1366, %v1195
    %v1371 = vmul.f32 %v1364, %v1369
    %v1372 = vadd.f32 %v1370, %v1371
    %v1373 = vtanh.pop %v1372
    %v1374 = vmul.f32 %v1368, %v1373
    %s1375 = scalar_lea.vmem [#allocation3], 32
    %1376 = vst [vmem:[%s1375] sm:$0xff] %v1374
    %s1377 = scalar_lea.vmem [#allocation2], 160
    %v1378 = vld [vmem:[%s1377] sm:$0xff]
    %v1379 = vld [vmem:[%s1377 + $0x8] sm:$0xff]
    %v1380 = vld [vmem:[%s1377 + $0x10] sm:$0xff]
    %v1381 = vld [vmem:[%s1377 + $0x18] sm:$0xff]
    %1382 = vmatprep.subr.mxu0 %v114
    %1383 = vmatpush1.msra.mxu0 %v113
    %1384 = vmatprep.subr.mxu0 %v118
    %1385 = vmatpush1.msra.mxu0 %v117
    %1386 = vmatprep.subr.mxu0 %v122
    %1387 = vmatpush1.msra.mxu0 %v121
    %1388 = vmatprep.subr.mxu0 %v126
    %1389 = vmatpush1.msra.mxu0 %v125
    %1390 = vmatprep.subr.mxu0 %v130
    %1391 = vmatpush1.msra.mxu0 %v129
    %1392 = vmatprep.subr.mxu0 %v134
    %1393 = vmatpush1.msra.mxu0 %v133
    %1394 = vmatprep.subr.mxu0 %v138
    %1395 = vmatpush1.msra.mxu0 %v137
    %1396 = vmatprep.subr.mxu0 %v142
    %1397 = vmatpush1.msra.mxu0 %v141
    %1398 = vmatprep.subr.mxu0 %v146
    %1399 = vmatpush1.msra.mxu0 %v145
    %1400 = vmatprep.subr.mxu0 %v150
    %1401 = vmatpush1.msra.mxu0 %v149
    %1402 = vmatprep.subr.mxu0 %v154
    %1403 = vmatpush1.msra.mxu0 %v153
    %1404 = vmatprep.subr.mxu0 %v158
    %1405 = vmatpush1.msra.mxu0 %v157
    %1406 = vmatprep.subr.mxu0 %v162
    %1407 = vmatpush1.msra.mxu0 %v161
    %1408 = vmatprep.subr.mxu0 %v166
    %1409 = vmatpush1.msra.mxu0 %v165
    %1410 = vmatprep.subr.mxu0 %v170
    %1411 = vmatpush1.msra.mxu0 %v169
    %1412 = vmatprep.subr.mxu0 %v174
    %1413 = vmatpush1.msra.mxu0 %v173
    %1414 = vmatprep.subr.mxu0 0.0
    %1415 = vmatpush1.msra.mxu0 0.0
    %1416 = vmatprep.subr.mxu0 0.0
    %1417 = vmatpush1.msra.mxu0 0.0
    %1418 = vmatprep.subr.mxu0 0.0
    %1419 = vmatpush1.msra.mxu0 0.0
    %1420 = vmatprep.subr.mxu0 0.0
    %1421 = vmatpush1.msra.mxu0 0.0
    %1422 = vmatprep.subr.mxu0 0.0
    %1423 = vmatpush1.msra.mxu0 0.0
    %1424 = vmatprep.subr.mxu0 0.0
    %1425 = vmatpush1.msra.mxu0 0.0
    %1426 = vmatprep.subr.mxu0 0.0
    %1427 = vmatpush1.msra.mxu0 0.0
    %1428 = vmatprep.subr.mxu0 0.0
    %1429 = vmatpush1.msra.mxu0 0.0
    %1430 = vmatprep.subr.mxu0 0.0
    %1431 = vmatpush1.msra.mxu0 0.0
    %1432 = vmatprep.subr.mxu0 0.0
    %1433 = vmatpush1.msra.mxu0 0.0
    %1434 = vmatprep.subr.mxu0 0.0
    %1435 = vmatpush1.msra.mxu0 0.0
    %1436 = vmatprep.subr.mxu0 0.0
    %1437 = vmatpush1.msra.mxu0 0.0
    %1438 = vmatprep.subr.mxu0 0.0
    %1439 = vmatpush1.msra.mxu0 0.0
    %1440 = vmatprep.subr.mxu0 0.0
    %1441 = vmatpush1.msra.mxu0 0.0
    %1442 = vmatprep.subr.mxu0 0.0
    %1443 = vmatpush1.msra.mxu0 0.0
    %1444 = vmatprep.subr.mxu0 0.0
    %1445 = vmatpush1.msra.mxu0 0.0
    %1446 = vmatprep.mubr.f32.mxu0 0.0
    %1447 = vmatmul.mubr.f32.gmra.mrb[0].mxu0 %v1374
    %v1448 = vpop.f32.mrb[0].mxu0
    %v1449 = vadd.f32 0.0, %v1448
    %v1450 = vpop.f32.mrb[0].mxu0
    %v1451 = vadd.f32 0.0, %v1450
    %1452 = vdwg.mxu0
    %1453 = vmatprep.subr.mxu0 %v116
    %1454 = vmatpush1.msra.mxu0 %v115
    %1455 = vmatprep.subr.mxu0 %v120
    %1456 = vmatpush1.msra.mxu0 %v119
    %1457 = vmatprep.subr.mxu0 %v124
    %1458 = vmatpush1.msra.mxu0 %v123
    %1459 = vmatprep.subr.mxu0 %v128
    %1460 = vmatpush1.msra.mxu0 %v127
    %1461 = vmatprep.subr.mxu0 %v132
    %1462 = vmatpush1.msra.mxu0 %v131
    %1463 = vmatprep.subr.mxu0 %v136
    %1464 = vmatpush1.msra.mxu0 %v135
    %1465 = vmatprep.subr.mxu0 %v140
    %1466 = vmatpush1.msra.mxu0 %v139
    %1467 = vmatprep.subr.mxu0 %v144
    %1468 = vmatpush1.msra.mxu0 %v143
    %1469 = vmatprep.subr.mxu0 %v148
    %1470 = vmatpush1.msra.mxu0 %v147
    %1471 = vmatprep.subr.mxu0 %v152
    %1472 = vmatpush1.msra.mxu0 %v151
    %1473 = vmatprep.subr.mxu0 %v156
    %1474 = vmatpush1.msra.mxu0 %v155
    %1475 = vmatprep.subr.mxu0 %v160
    %1476 = vmatpush1.msra.mxu0 %v159
    %1477 = vmatprep.subr.mxu0 %v164
    %1478 = vmatpush1.msra.mxu0 %v163
    %1479 = vmatprep.subr.mxu0 %v168
    %1480 = vmatpush1.msra.mxu0 %v167
    %1481 = vmatprep.subr.mxu0 %v172
    %1482 = vmatpush1.msra.mxu0 %v171
    %1483 = vmatprep.subr.mxu0 %v176
    %1484 = vmatpush1.msra.mxu0 %v175
    %1485 = vmatprep.subr.mxu0 0.0
    %1486 = vmatpush1.msra.mxu0 0.0
    %1487 = vmatprep.subr.mxu0 0.0
    %1488 = vmatpush1.msra.mxu0 0.0
    %1489 = vmatprep.subr.mxu0 0.0
    %1490 = vmatpush1.msra.mxu0 0.0
    %1491 = vmatprep.subr.mxu0 0.0
    %1492 = vmatpush1.msra.mxu0 0.0
    %1493 = vmatprep.subr.mxu0 0.0
    %1494 = vmatpush1.msra.mxu0 0.0
    %1495 = vmatprep.subr.mxu0 0.0
    %1496 = vmatpush1.msra.mxu0 0.0
    %1497 = vmatprep.subr.mxu0 0.0
    %1498 = vmatpush1.msra.mxu0 0.0
    %1499 = vmatprep.subr.mxu0 0.0
    %1500 = vmatpush1.msra.mxu0 0.0
    %1501 = vmatprep.subr.mxu0 0.0
    %1502 = vmatpush1.msra.mxu0 0.0
    %1503 = vmatprep.subr.mxu0 0.0
    %1504 = vmatpush1.msra.mxu0 0.0
    %1505 = vmatprep.subr.mxu0 0.0
    %1506 = vmatpush1.msra.mxu0 0.0
    %1507 = vmatprep.subr.mxu0 0.0
    %1508 = vmatpush1.msra.mxu0 0.0
    %1509 = vmatprep.subr.mxu0 0.0
    %1510 = vmatpush1.msra.mxu0 0.0
    %1511 = vmatprep.subr.mxu0 0.0
    %1512 = vmatpush1.msra.mxu0 0.0
    %1513 = vmatprep.subr.mxu0 0.0
    %1514 = vmatpush1.msra.mxu0 0.0
    %1515 = vmatprep.subr.mxu0 0.0
    %1516 = vmatpush1.msra.mxu0 0.0
    %1517 = vmatprep.mubr.f32.mxu0 0.0
    %1518 = vmatmul.mubr.f32.gmra.mrb[0].mxu0 %v1374
    %v1519 = vpop.f32.mrb[0].mxu0
    %v1520 = vadd.f32 0.0, %v1519
    %v1521 = vpop.f32.mrb[0].mxu0
    %v1522 = vadd.f32 0.0, %v1521
    %1523 = vdwg.mxu0
    %v1524 = vadd.f32 %v1378, %v1449
    %v1525 = vadd.f32 %v1379, %v1451
    %v1526 = vadd.f32 %v1380, %v1520
    %v1527 = vadd.f32 %v1381, %v1522
    %v1528 = vxor.u32 %v1524, 2147483648
    %v1529 = vxor.u32 %v1525, 2147483648
    %v1530 = vxor.u32 %v1526, 2147483648
    %v1531 = vmul.f32 %v1528, 1.442695
    %v1532 = vpow.pop %v1531
    %v1533 = vmul.f32 %v1529, 1.442695
    %v1534 = vpow.pop %v1533
    %v1535 = vmul.f32 %v1530, 1.442695
    %v1536 = vpow.pop %v1535
    %v1537 = vadd.f32 %v1532, 1.0
    %v1538 = vadd.f32 %v1534, 1.0
    %v1539 = vadd.f32 %v1536, 1.0
    %v1540 = vrcp.pop %v1537
    %v1541 = vmul.f32 1.0, %v1540
    %v1542 = vrcp.pop %v1538
    %v1543 = vmul.f32 1.0, %v1542
    %v1544 = vrcp.pop %v1539
    %v1545 = vmul.f32 1.0, %v1544
    %v1546 = vtanh.pop %v1527
    %v1547 = vmul.f32 %v1543, %v1372
    %v1548 = vmul.f32 %v1541, %v1546
    %v1549 = vadd.f32 %v1547, %v1548
    %v1550 = vtanh.pop %v1549
    %v1551 = vmul.f32 %v1545, %v1550
    %s1552 = scalar_lea.vmem [#allocation3], 40
    %1553 = vst [vmem:[%s1552] sm:$0xff] %v1551
    %s1554 = scalar_lea.vmem [#allocation2], 192
    %v1555 = vld [vmem:[%s1554] sm:$0xff]
    %v1556 = vld [vmem:[%s1554 + $0x8] sm:$0xff]
    %v1557 = vld [vmem:[%s1554 + $0x10] sm:$0xff]
    %v1558 = vld [vmem:[%s1554 + $0x18] sm:$0xff]
    %1559 = vmatprep.subr.mxu0 %v114
    %1560 = vmatpush1.msra.mxu0 %v113
    %1561 = vmatprep.subr.mxu0 %v118
    %1562 = vmatpush1.msra.mxu0 %v117
    %1563 = vmatprep.subr.mxu0 %v122
    %1564 = vmatpush1.msra.mxu0 %v121
    %1565 = vmatprep.subr.mxu0 %v126
    %1566 = vmatpush1.msra.mxu0 %v125
    %1567 = vmatprep.subr.mxu0 %v130
    %1568 = vmatpush1.msra.mxu0 %v129
    %1569 = vmatprep.subr.mxu0 %v134
    %1570 = vmatpush1.msra.mxu0 %v133
    %1571 = vmatprep.subr.mxu0 %v138
    %1572 = vmatpush1.msra.mxu0 %v137
    %1573 = vmatprep.subr.mxu0 %v142
    %1574 = vmatpush1.msra.mxu0 %v141
    %1575 = vmatprep.subr.mxu0 %v146
    %1576 = vmatpush1.msra.mxu0 %v145
    %1577 = vmatprep.subr.mxu0 %v150
    %1578 = vmatpush1.msra.mxu0 %v149
    %1579 = vmatprep.subr.mxu0 %v154
    %1580 = vmatpush1.msra.mxu0 %v153
    %1581 = vmatprep.subr.mxu0 %v158
    %1582 = vmatpush1.msra.mxu0 %v157
    %1583 = vmatprep.subr.mxu0 %v162
    %1584 = vmatpush1.msra.mxu0 %v161
    %1585 = vmatprep.subr.mxu0 %v166
    %1586 = vmatpush1.msra.mxu0 %v165
    %1587 = vmatprep.subr.mxu0 %v170
    %1588 = vmatpush1.msra.mxu0 %v169
    %1589 = vmatprep.subr.mxu0 %v174
    %1590 = vmatpush1.msra.mxu0 %v173
    %1591 = vmatprep.subr.mxu0 0.0
    %1592 = vmatpush1.msra.mxu0 0.0
    %1593 = vmatprep.subr.mxu0 0.0
    %1594 = vmatpush1.msra.mxu0 0.0
    %1595 = vmatprep.subr.mxu0 0.0
    %1596 = vmatpush1.msra.mxu0 0.0
    %1597 = vmatprep.subr.mxu0 0.0
    %1598 = vmatpush1.msra.mxu0 0.0
    %1599 = vmatprep.subr.mxu0 0.0
    %1600 = vmatpush1.msra.mxu0 0.0
    %1601 = vmatprep.subr.mxu0 0.0
    %1602 = vmatpush1.msra.mxu0 0.0
    %1603 = vmatprep.subr.mxu0 0.0
    %1604 = vmatpush1.msra.mxu0 0.0
    %1605 = vmatprep.subr.mxu0 0.0
    %1606 = vmatpush1.msra.mxu0 0.0
    %1607 = vmatprep.subr.mxu0 0.0
    %1608 = vmatpush1.msra.mxu0 0.0
    %1609 = vmatprep.subr.mxu0 0.0
    %1610 = vmatpush1.msra.mxu0 0.0
    %1611 = vmatprep.subr.mxu0 0.0
    %1612 = vmatpush1.msra.mxu0 0.0
    %1613 = vmatprep.subr.mxu0 0.0
    %1614 = vmatpush1.msra.mxu0 0.0
    %1615 = vmatprep.subr.mxu0 0.0
    %1616 = vmatpush1.msra.mxu0 0.0
    %1617 = vmatprep.subr.mxu0 0.0
    %1618 = vmatpush1.msra.mxu0 0.0
    %1619 = vmatprep.subr.mxu0 0.0
    %1620 = vmatpush1.msra.mxu0 0.0
    %1621 = vmatprep.subr.mxu0 0.0
    %1622 = vmatpush1.msra.mxu0 0.0
    %1623 = vmatprep.mubr.f32.mxu0 0.0
    %1624 = vmatmul.mubr.f32.gmra.mrb[0].mxu0 %v1551
    %v1625 = vpop.f32.mrb[0].mxu0
    %v1626 = vadd.f32 0.0, %v1625
    %v1627 = vpop.f32.mrb[0].mxu0
    %v1628 = vadd.f32 0.0, %v1627
    %1629 = vdwg.mxu0
    %1630 = vmatprep.subr.mxu0 %v116
    %1631 = vmatpush1.msra.mxu0 %v115
    %1632 = vmatprep.subr.mxu0 %v120
    %1633 = vmatpush1.msra.mxu0 %v119
    %1634 = vmatprep.subr.mxu0 %v124
    %1635 = vmatpush1.msra.mxu0 %v123
    %1636 = vmatprep.subr.mxu0 %v128
    %1637 = vmatpush1.msra.mxu0 %v127
    %1638 = vmatprep.subr.mxu0 %v132
    %1639 = vmatpush1.msra.mxu0 %v131
    %1640 = vmatprep.subr.mxu0 %v136
    %1641 = vmatpush1.msra.mxu0 %v135
    %1642 = vmatprep.subr.mxu0 %v140
    %1643 = vmatpush1.msra.mxu0 %v139
    %1644 = vmatprep.subr.mxu0 %v144
    %1645 = vmatpush1.msra.mxu0 %v143
    %1646 = vmatprep.subr.mxu0 %v148
    %1647 = vmatpush1.msra.mxu0 %v147
    %1648 = vmatprep.subr.mxu0 %v152
    %1649 = vmatpush1.msra.mxu0 %v151
    %1650 = vmatprep.subr.mxu0 %v156
    %1651 = vmatpush1.msra.mxu0 %v155
    %1652 = vmatprep.subr.mxu0 %v160
    %1653 = vmatpush1.msra.mxu0 %v159
    %1654 = vmatprep.subr.mxu0 %v164
    %1655 = vmatpush1.msra.mxu0 %v163
    %1656 = vmatprep.subr.mxu0 %v168
    %1657 = vmatpush1.msra.mxu0 %v167
    %1658 = vmatprep.subr.mxu0 %v172
    %1659 = vmatpush1.msra.mxu0 %v171
    %1660 = vmatprep.subr.mxu0 %v176
    %1661 = vmatpush1.msra.mxu0 %v175
    %1662 = vmatprep.subr.mxu0 0.0
    %1663 = vmatpush1.msra.mxu0 0.0
    %1664 = vmatprep.subr.mxu0 0.0
    %1665 = vmatpush1.msra.mxu0 0.0
    %1666 = vmatprep.subr.mxu0 0.0
    %1667 = vmatpush1.msra.mxu0 0.0
    %1668 = vmatprep.subr.mxu0 0.0
    %1669 = vmatpush1.msra.mxu0 0.0
    %1670 = vmatprep.subr.mxu0 0.0
    %1671 = vmatpush1.msra.mxu0 0.0
    %1672 = vmatprep.subr.mxu0 0.0
    %1673 = vmatpush1.msra.mxu0 0.0
    %1674 = vmatprep.subr.mxu0 0.0
    %1675 = vmatpush1.msra.mxu0 0.0
    %1676 = vmatprep.subr.mxu0 0.0
    %1677 = vmatpush1.msra.mxu0 0.0
    %1678 = vmatprep.subr.mxu0 0.0
    %1679 = vmatpush1.msra.mxu0 0.0
    %1680 = vmatprep.subr.mxu0 0.0
    %1681 = vmatpush1.msra.mxu0 0.0
    %1682 = vmatprep.subr.mxu0 0.0
    %1683 = vmatpush1.msra.mxu0 0.0
    %1684 = vmatprep.subr.mxu0 0.0
    %1685 = vmatpush1.msra.mxu0 0.0
    %1686 = vmatprep.subr.mxu0 0.0
    %1687 = vmatpush1.msra.mxu0 0.0
    %1688 = vmatprep.subr.mxu0 0.0
    %1689 = vmatpush1.msra.mxu0 0.0
    %1690 = vmatprep.subr.mxu0 0.0
    %1691 = vmatpush1.msra.mxu0 0.0
    %1692 = vmatprep.subr.mxu0 0.0
    %1693 = vmatpush1.msra.mxu0 0.0
    %1694 = vmatprep.mubr.f32.mxu0 0.0
    %1695 = vmatmul.mubr.f32.gmra.mrb[0].mxu0 %v1551
    %v1696 = vpop.f32.mrb[0].mxu0
    %v1697 = vadd.f32 0.0, %v1696
    %v1698 = vpop.f32.mrb[0].mxu0
    %v1699 = vadd.f32 0.0, %v1698
    %1700 = vdwg.mxu0
    %v1701 = vadd.f32 %v1555, %v1626
    %v1702 = vadd.f32 %v1556, %v1628
    %v1703 = vadd.f32 %v1557, %v1697
    %v1704 = vadd.f32 %v1558, %v1699
    %v1705 = vxor.u32 %v1701, 2147483648
    %v1706 = vxor.u32 %v1702, 2147483648
    %v1707 = vxor.u32 %v1703, 2147483648
    %v1708 = vmul.f32 %v1705, 1.442695
    %v1709 = vpow.pop %v1708
    %v1710 = vmul.f32 %v1706, 1.442695
    %v1711 = vpow.pop %v1710
    %v1712 = vmul.f32 %v1707, 1.442695
    %v1713 = vpow.pop %v1712
    %v1714 = vadd.f32 %v1709, 1.0
    %v1715 = vadd.f32 %v1711, 1.0
    %v1716 = vadd.f32 %v1713, 1.0
    %v1717 = vrcp.pop %v1714
    %v1718 = vmul.f32 1.0, %v1717
    %v1719 = vrcp.pop %v1715
    %v1720 = vmul.f32 1.0, %v1719
    %v1721 = vrcp.pop %v1716
    %v1722 = vmul.f32 1.0, %v1721
    %v1723 = vtanh.pop %v1704
    %v1724 = vmul.f32 %v1720, %v1549
    %v1725 = vmul.f32 %v1718, %v1723
    %v1726 = vadd.f32 %v1724, %v1725
    %v1727 = vtanh.pop %v1726
    %v1728 = vmul.f32 %v1722, %v1727
    %s1729 = scalar_lea.vmem [#allocation3], 48
    %1730 = vst [vmem:[%s1729] sm:$0xff] %v1728
    %s1731 = scalar_lea.vmem [#allocation2], 224
    %v1732 = vld [vmem:[%s1731] sm:$0xff]
    %v1733 = vld [vmem:[%s1731 + $0x8] sm:$0xff]
    %v1734 = vld [vmem:[%s1731 + $0x10] sm:$0xff]
    %v1735 = vld [vmem:[%s1731 + $0x18] sm:$0xff]
    %1736 = vmatprep.subr.mxu0 %v114
    %1737 = vmatpush1.msra.mxu0 %v113
    %1738 = vmatprep.subr.mxu0 %v118
    %1739 = vmatpush1.msra.mxu0 %v117
    %1740 = vmatprep.subr.mxu0 %v122
    %1741 = vmatpush1.msra.mxu0 %v121
    %1742 = vmatprep.subr.mxu0 %v126
    %1743 = vmatpush1.msra.mxu0 %v125
    %1744 = vmatprep.subr.mxu0 %v130
    %1745 = vmatpush1.msra.mxu0 %v129
    %1746 = vmatprep.subr.mxu0 %v134
    %1747 = vmatpush1.msra.mxu0 %v133
    %1748 = vmatprep.subr.mxu0 %v138
    %1749 = vmatpush1.msra.mxu0 %v137
    %1750 = vmatprep.subr.mxu0 %v142
    %1751 = vmatpush1.msra.mxu0 %v141
    %1752 = vmatprep.subr.mxu0 %v146
    %1753 = vmatpush1.msra.mxu0 %v145
    %1754 = vmatprep.subr.mxu0 %v150
    %1755 = vmatpush1.msra.mxu0 %v149
    %1756 = vmatprep.subr.mxu0 %v154
    %1757 = vmatpush1.msra.mxu0 %v153
    %1758 = vmatprep.subr.mxu0 %v158
    %1759 = vmatpush1.msra.mxu0 %v157
    %1760 = vmatprep.subr.mxu0 %v162
    %1761 = vmatpush1.msra.mxu0 %v161
    %1762 = vmatprep.subr.mxu0 %v166
    %1763 = vmatpush1.msra.mxu0 %v165
    %1764 = vmatprep.subr.mxu0 %v170
    %1765 = vmatpush1.msra.mxu0 %v169
    %1766 = vmatprep.subr.mxu0 %v174
    %1767 = vmatpush1.msra.mxu0 %v173
    %1768 = vmatprep.subr.mxu0 0.0
    %1769 = vmatpush1.msra.mxu0 0.0
    %1770 = vmatprep.subr.mxu0 0.0
    %1771 = vmatpush1.msra.mxu0 0.0
    %1772 = vmatprep.subr.mxu0 0.0
    %1773 = vmatpush1.msra.mxu0 0.0
    %1774 = vmatprep.subr.mxu0 0.0
    %1775 = vmatpush1.msra.mxu0 0.0
    %1776 = vmatprep.subr.mxu0 0.0
    %1777 = vmatpush1.msra.mxu0 0.0
    %1778 = vmatprep.subr.mxu0 0.0
    %1779 = vmatpush1.msra.mxu0 0.0
    %1780 = vmatprep.subr.mxu0 0.0
    %1781 = vmatpush1.msra.mxu0 0.0
    %1782 = vmatprep.subr.mxu0 0.0
    %1783 = vmatpush1.msra.mxu0 0.0
    %1784 = vmatprep.subr.mxu0 0.0
    %1785 = vmatpush1.msra.mxu0 0.0
    %1786 = vmatprep.subr.mxu0 0.0
    %1787 = vmatpush1.msra.mxu0 0.0
    %1788 = vmatprep.subr.mxu0 0.0
    %1789 = vmatpush1.msra.mxu0 0.0
    %1790 = vmatprep.subr.mxu0 0.0
    %1791 = vmatpush1.msra.mxu0 0.0
    %1792 = vmatprep.subr.mxu0 0.0
    %1793 = vmatpush1.msra.mxu0 0.0
    %1794 = vmatprep.subr.mxu0 0.0
    %1795 = vmatpush1.msra.mxu0 0.0
    %1796 = vmatprep.subr.mxu0 0.0
    %1797 = vmatpush1.msra.mxu0 0.0
    %1798 = vmatprep.subr.mxu0 0.0
    %1799 = vmatpush1.msra.mxu0 0.0
    %1800 = vmatprep.mubr.f32.mxu0 0.0
    %1801 = vmatmul.mubr.f32.gmra.mrb[0].mxu0 %v1728
    %v1802 = vpop.f32.mrb[0].mxu0
    %v1803 = vadd.f32 0.0, %v1802
    %v1804 = vpop.f32.mrb[0].mxu0
    %v1805 = vadd.f32 0.0, %v1804
    %1806 = vdwg.mxu0
    %1807 = vmatprep.subr.mxu0 %v116
    %1808 = vmatpush1.msra.mxu0 %v115
    %1809 = vmatprep.subr.mxu0 %v120
    %1810 = vmatpush1.msra.mxu0 %v119
    %1811 = vmatprep.subr.mxu0 %v124
    %1812 = vmatpush1.msra.mxu0 %v123
    %1813 = vmatprep.subr.mxu0 %v128
    %1814 = vmatpush1.msra.mxu0 %v127
    %1815 = vmatprep.subr.mxu0 %v132
    %1816 = vmatpush1.msra.mxu0 %v131
    %1817 = vmatprep.subr.mxu0 %v136
    %1818 = vmatpush1.msra.mxu0 %v135
    %1819 = vmatprep.subr.mxu0 %v140
    %1820 = vmatpush1.msra.mxu0 %v139
    %1821 = vmatprep.subr.mxu0 %v144
    %1822 = vmatpush1.msra.mxu0 %v143
    %1823 = vmatprep.subr.mxu0 %v148
    %1824 = vmatpush1.msra.mxu0 %v147
    %1825 = vmatprep.subr.mxu0 %v152
    %1826 = vmatpush1.msra.mxu0 %v151
    %1827 = vmatprep.subr.mxu0 %v156
    %1828 = vmatpush1.msra.mxu0 %v155
    %1829 = vmatprep.subr.mxu0 %v160
    %1830 = vmatpush1.msra.mxu0 %v159
    %1831 = vmatprep.subr.mxu0 %v164
    %1832 = vmatpush1.msra.mxu0 %v163
    %1833 = vmatprep.subr.mxu0 %v168
    %1834 = vmatpush1.msra.mxu0 %v167
    %1835 = vmatprep.subr.mxu0 %v172
    %1836 = vmatpush1.msra.mxu0 %v171
    %1837 = vmatprep.subr.mxu0 %v176
    %1838 = vmatpush1.msra.mxu0 %v175
    %1839 = vmatprep.subr.mxu0 0.0
    %1840 = vmatpush1.msra.mxu0 0.0
    %1841 = vmatprep.subr.mxu0 0.0
    %1842 = vmatpush1.msra.mxu0 0.0
    %1843 = vmatprep.subr.mxu0 0.0
    %1844 = vmatpush1.msra.mxu0 0.0
    %1845 = vmatprep.subr.mxu0 0.0
    %1846 = vmatpush1.msra.mxu0 0.0
    %1847 = vmatprep.subr.mxu0 0.0
    %1848 = vmatpush1.msra.mxu0 0.0
    %1849 = vmatprep.subr.mxu0 0.0
    %1850 = vmatpush1.msra.mxu0 0.0
    %1851 = vmatprep.subr.mxu0 0.0
    %1852 = vmatpush1.msra.mxu0 0.0
    %1853 = vmatprep.subr.mxu0 0.0
    %1854 = vmatpush1.msra.mxu0 0.0
    %1855 = vmatprep.subr.mxu0 0.0
    %1856 = vmatpush1.msra.mxu0 0.0
    %1857 = vmatprep.subr.mxu0 0.0
    %1858 = vmatpush1.msra.mxu0 0.0
    %1859 = vmatprep.subr.mxu0 0.0
    %1860 = vmatpush1.msra.mxu0 0.0
    %1861 = vmatprep.subr.mxu0 0.0
    %1862 = vmatpush1.msra.mxu0 0.0
    %1863 = vmatprep.subr.mxu0 0.0
    %1864 = vmatpush1.msra.mxu0 0.0
    %1865 = vmatprep.subr.mxu0 0.0
    %1866 = vmatpush1.msra.mxu0 0.0
    %1867 = vmatprep.subr.mxu0 0.0
    %1868 = vmatpush1.msra.mxu0 0.0
    %1869 = vmatprep.subr.mxu0 0.0
    %1870 = vmatpush1.msra.mxu0 0.0
    %1871 = vmatprep.mubr.f32.mxu0 0.0
    %1872 = vmatmul.mubr.f32.gmra.mrb[0].mxu0 %v1728
    %v1873 = vpop.f32.mrb[0].mxu0
    %v1874 = vadd.f32 0.0, %v1873
    %v1875 = vpop.f32.mrb[0].mxu0
    %v1876 = vadd.f32 0.0, %v1875
    %1877 = vdwg.mxu0
    %v1878 = vadd.f32 %v1732, %v1803
    %v1879 = vadd.f32 %v1733, %v1805
    %v1880 = vadd.f32 %v1734, %v1874
    %v1881 = vadd.f32 %v1735, %v1876
    %v1882 = vxor.u32 %v1878, 2147483648
    %v1883 = vxor.u32 %v1879, 2147483648
    %v1884 = vxor.u32 %v1880, 2147483648
    %v1885 = vmul.f32 %v1882, 1.442695
    %v1886 = vpow.pop %v1885
    %v1887 = vmul.f32 %v1883, 1.442695
    %v1888 = vpow.pop %v1887
    %v1889 = vmul.f32 %v1884, 1.442695
    %v1890 = vpow.pop %v1889
    %v1891 = vadd.f32 %v1886, 1.0
    %v1892 = vadd.f32 %v1888, 1.0
    %v1893 = vadd.f32 %v1890, 1.0
    %v1894 = vrcp.pop %v1891
    %v1895 = vmul.f32 1.0, %v1894
    %v1896 = vrcp.pop %v1892
    %v1897 = vmul.f32 1.0, %v1896
    %v1898 = vrcp.pop %v1893
    %v1899 = vmul.f32 1.0, %v1898
    %v1900 = vtanh.pop %v1881
    %v1901 = vmul.f32 %v1897, %v1726
    %v1902 = vmul.f32 %v1895, %v1900
    %v1903 = vadd.f32 %v1901, %v1902
    %v1904 = vtanh.pop %v1903
    %v1905 = vmul.f32 %v1899, %v1904
    %s1906 = scalar_lea.vmem [#allocation3], 56
    %1907 = vst [vmem:[%s1906] sm:$0xff] %v1905
    %v1908 = vld [vmem:[#allocation12] sm:$0xff]
    %v1909 = vld [vmem:[#allocation12 + $0x8] sm:$0xff]
    %v1910 = vld [vmem:[#allocation12 + $0x10] sm:$0xff]
    %v1911 = vld [vmem:[#allocation12 + $0x18] sm:$0xff]
    %v1912 = vld [vmem:[#allocation12 + $0x20] sm:$0xff]
    %v1913 = vld [vmem:[#allocation12 + $0x28] sm:$0xff]
    %v1914 = vld [vmem:[#allocation12 + $0x30] sm:$0xff]
    %v1915 = vld [vmem:[#allocation12 + $0x38] sm:$0xff]
    %v1916 = vld [vmem:[#allocation12 + $0x40] sm:$0xff]
    %v1917 = vld [vmem:[#allocation12 + $0x48] sm:$0xff]
    %v1918 = vld [vmem:[#allocation12 + $0x50] sm:$0xff]
    %v1919 = vld [vmem:[#allocation12 + $0x58] sm:$0xff]
    %v1920 = vld [vmem:[#allocation12 + $0x60] sm:$0xff]
    %v1921 = vld [vmem:[#allocation12 + $0x68] sm:$0xff]
    %v1922 = vld [vmem:[#allocation12 + $0x70] sm:$0xff]
    %v1923 = vld [vmem:[#allocation12 + $0x78] sm:$0xff]
    %v1924 = vld [vmem:[#allocation12 + $0x80] sm:$0xff]
    %v1925 = vld [vmem:[#allocation12 + $0x88] sm:$0xff]
    %v1926 = vld [vmem:[#allocation12 + $0x90] sm:$0xff]
    %v1927 = vld [vmem:[#allocation12 + $0x98] sm:$0xff]
    %v1928 = vld [vmem:[#allocation12 + $0xa0] sm:$0xff]
    %v1929 = vld [vmem:[#allocation12 + $0xa8] sm:$0xff]
    %v1930 = vld [vmem:[#allocation12 + $0xb0] sm:$0xff]
    %v1931 = vld [vmem:[#allocation12 + $0xb8] sm:$0xff]
    %v1932 = vld [vmem:[#allocation12 + $0xc0] sm:$0xff]
    %v1933 = vld [vmem:[#allocation12 + $0xc8] sm:$0xff]
    %v1934 = vld [vmem:[#allocation12 + $0xd0] sm:$0xff]
    %v1935 = vld [vmem:[#allocation12 + $0xd8] sm:$0xff]
    %v1936 = vld [vmem:[#allocation12 + $0xe0] sm:$0xff]
    %v1937 = vld [vmem:[#allocation12 + $0xe8] sm:$0xff]
    %v1938 = vld [vmem:[#allocation12 + $0xf0] sm:$0xff]
    %v1939 = vld [vmem:[#allocation12 + $0xf8] sm:$0xff]
    %v1940 = vld [vmem:[#allocation12 + $0x100] sm:$0xff]
    %v1941 = vld [vmem:[#allocation12 + $0x108] sm:$0xff]
    %v1942 = vld [vmem:[#allocation12 + $0x110] sm:$0xff]
    %v1943 = vld [vmem:[#allocation12 + $0x118] sm:$0xff]
    %v1944 = vld [vmem:[#allocation12 + $0x120] sm:$0xff]
    %v1945 = vld [vmem:[#allocation12 + $0x128] sm:$0xff]
    %v1946 = vld [vmem:[#allocation12 + $0x130] sm:$0xff]
    %v1947 = vld [vmem:[#allocation12 + $0x138] sm:$0xff]
    %v1948 = vld [vmem:[#allocation12 + $0x140] sm:$0xff]
    %v1949 = vld [vmem:[#allocation12 + $0x148] sm:$0xff]
    %v1950 = vld [vmem:[#allocation12 + $0x150] sm:$0xff]
    %v1951 = vld [vmem:[#allocation12 + $0x158] sm:$0xff]
    %v1952 = vld [vmem:[#allocation12 + $0x160] sm:$0xff]
    %v1953 = vld [vmem:[#allocation12 + $0x168] sm:$0xff]
    %v1954 = vld [vmem:[#allocation12 + $0x170] sm:$0xff]
    %v1955 = vld [vmem:[#allocation12 + $0x178] sm:$0xff]
    %v1956 = vld [vmem:[#allocation12 + $0x180] sm:$0xff]
    %v1957 = vld [vmem:[#allocation12 + $0x188] sm:$0xff]
    %v1958 = vld [vmem:[#allocation12 + $0x190] sm:$0xff]
    %v1959 = vld [vmem:[#allocation12 + $0x198] sm:$0xff]
    %v1960 = vld [vmem:[#allocation12 + $0x1a0] sm:$0xff]
    %v1961 = vld [vmem:[#allocation12 + $0x1a8] sm:$0xff]
    %v1962 = vld [vmem:[#allocation12 + $0x1b0] sm:$0xff]
    %v1963 = vld [vmem:[#allocation12 + $0x1b8] sm:$0xff]
    %v1964 = vld [vmem:[#allocation12 + $0x1c0] sm:$0xff]
    %v1965 = vld [vmem:[#allocation12 + $0x1c8] sm:$0xff]
    %v1966 = vld [vmem:[#allocation12 + $0x1d0] sm:$0xff]
    %v1967 = vld [vmem:[#allocation12 + $0x1d8] sm:$0xff]
    %v1968 = vld [vmem:[#allocation12 + $0x1e0] sm:$0xff]
    %v1969 = vld [vmem:[#allocation12 + $0x1e8] sm:$0xff]
    %v1970 = vld [vmem:[#allocation12 + $0x1f0] sm:$0xff]
    %v1971 = vld [vmem:[#allocation12 + $0x1f8] sm:$0xff]
    %v1972 = vld [vmem:[%s6] sm:$0xf]
    %v1973 = vld [vmem:[#allocation3] sm:$0xff]
    %v1974 = vld [vmem:[#allocation3 + $0x8] sm:$0xff]
    %v1975 = vld [vmem:[#allocation3 + $0x10] sm:$0xff]
    %v1976 = vld [vmem:[#allocation3 + $0x18] sm:$0xff]
    %v1977 = vld [vmem:[#allocation3 + $0x20] sm:$0xff]
    %v1978 = vld [vmem:[#allocation3 + $0x28] sm:$0xff]
    %v1979 = vld [vmem:[#allocation3 + $0x30] sm:$0xff]
    %v1980 = vld [vmem:[#allocation3 + $0x38] sm:$0xff]
    %v1981 = vld [vmem:[#allocation10] sm:$0xff]
    %v1982 = vld [vmem:[#allocation10 + $0x8] sm:$0xff]
    %v1983 = vld [vmem:[#allocation10 + $0x10] sm:$0xff]
    %v1984 = vld [vmem:[#allocation10 + $0x18] sm:$0xff]
    %v1985 = vld [vmem:[#allocation10 + $0x20] sm:$0xff]
    %v1986 = vld [vmem:[#allocation10 + $0x28] sm:$0xff]
    %v1987 = vld [vmem:[#allocation10 + $0x30] sm:$0xff]
    %v1988 = vld [vmem:[#allocation10 + $0x38] sm:$0xff]
    %v1989 = vld [vmem:[#allocation10 + $0x40] sm:$0xff]
    %v1990 = vld [vmem:[#allocation10 + $0x48] sm:$0xff]
    %v1991 = vld [vmem:[#allocation10 + $0x50] sm:$0xff]
    %v1992 = vld [vmem:[#allocation10 + $0x58] sm:$0xff]
    %v1993 = vld [vmem:[#allocation10 + $0x60] sm:$0xff]
    %v1994 = vld [vmem:[#allocation10 + $0x68] sm:$0xff]
    %v1995 = vld [vmem:[#allocation10 + $0x70] sm:$0xff]
    %v1996 = vld [vmem:[#allocation10 + $0x78] sm:$0xff]
    %v1997 = vld [vmem:[#allocation10 + $0x80] sm:$0xff]
    %v1998 = vld [vmem:[#allocation10 + $0x88] sm:$0xff]
    %v1999 = vld [vmem:[#allocation10 + $0x90] sm:$0xff]
    %v2000 = vld [vmem:[#allocation10 + $0x98] sm:$0xff]
    %v2001 = vld [vmem:[#allocation10 + $0xa0] sm:$0xff]
    %v2002 = vld [vmem:[#allocation10 + $0xa8] sm:$0xff]
    %v2003 = vld [vmem:[#allocation10 + $0xb0] sm:$0xff]
    %v2004 = vld [vmem:[#allocation10 + $0xb8] sm:$0xff]
    %v2005 = vld [vmem:[#allocation10 + $0xc0] sm:$0xff]
    %v2006 = vld [vmem:[#allocation10 + $0xc8] sm:$0xff]
    %v2007 = vld [vmem:[#allocation10 + $0xd0] sm:$0xff]
    %v2008 = vld [vmem:[#allocation10 + $0xd8] sm:$0xff]
    %v2009 = vld [vmem:[#allocation10 + $0xe0] sm:$0xff]
    %v2010 = vld [vmem:[#allocation10 + $0xe8] sm:$0xff]
    %v2011 = vld [vmem:[#allocation10 + $0xf0] sm:$0xff]
    %v2012 = vld [vmem:[#allocation10 + $0xf8] sm:$0xff]
    %v2013 = vld [vmem:[#allocation10 + $0x100] sm:$0xff]
    %v2014 = vld [vmem:[#allocation10 + $0x108] sm:$0xff]
    %v2015 = vld [vmem:[#allocation10 + $0x110] sm:$0xff]
    %v2016 = vld [vmem:[#allocation10 + $0x118] sm:$0xff]
    %v2017 = vld [vmem:[#allocation10 + $0x120] sm:$0xff]
    %v2018 = vld [vmem:[#allocation10 + $0x128] sm:$0xff]
    %v2019 = vld [vmem:[#allocation10 + $0x130] sm:$0xff]
    %v2020 = vld [vmem:[#allocation10 + $0x138] sm:$0xff]
    %v2021 = vld [vmem:[#allocation10 + $0x140] sm:$0xff]
    %v2022 = vld [vmem:[#allocation10 + $0x148] sm:$0xff]
    %v2023 = vld [vmem:[#allocation10 + $0x150] sm:$0xff]
    %v2024 = vld [vmem:[#allocation10 + $0x158] sm:$0xff]
    %v2025 = vld [vmem:[#allocation10 + $0x160] sm:$0xff]
    %v2026 = vld [vmem:[#allocation10 + $0x168] sm:$0xff]
    %v2027 = vld [vmem:[#allocation10 + $0x170] sm:$0xff]
    %v2028 = vld [vmem:[#allocation10 + $0x178] sm:$0xff]
    %v2029 = vld [vmem:[#allocation10 + $0x180] sm:$0xff]
    %v2030 = vld [vmem:[#allocation10 + $0x188] sm:$0xff]
    %v2031 = vld [vmem:[#allocation10 + $0x190] sm:$0xff]
    %v2032 = vld [vmem:[#allocation10 + $0x198] sm:$0xff]
    %v2033 = vld [vmem:[#allocation10 + $0x1a0] sm:$0xff]
    %v2034 = vld [vmem:[#allocation10 + $0x1a8] sm:$0xff]
    %v2035 = vld [vmem:[#allocation10 + $0x1b0] sm:$0xff]
    %v2036 = vld [vmem:[#allocation10 + $0x1b8] sm:$0xff]
    %v2037 = vld [vmem:[#allocation10 + $0x1c0] sm:$0xff]
    %v2038 = vld [vmem:[#allocation10 + $0x1c8] sm:$0xff]
    %v2039 = vld [vmem:[#allocation10 + $0x1d0] sm:$0xff]
    %v2040 = vld [vmem:[#allocation10 + $0x1d8] sm:$0xff]
    %v2041 = vld [vmem:[#allocation10 + $0x1e0] sm:$0xff]
    %v2042 = vld [vmem:[#allocation10 + $0x1e8] sm:$0xff]
    %v2043 = vld [vmem:[#allocation10 + $0x1f0] sm:$0xff]
    %v2044 = vld [vmem:[#allocation10 + $0x1f8] sm:$0xff]
    %v2046 = vlaneseq
    %v2047 = vshrl.u32 %v2046, 7
    %v2048 = vsub.s32 0, %v2047
    %v2049 = vrot.slane %v1972, %v2048
    %v2050 = vlaneseq
    %v2051 = vshrl.u32 %v2050, 7
    %v2052 = vsub.s32 1, %v2051
    %v2053 = vrot.slane %v1972, %v2052
    %v2054 = vlaneseq
    %v2055 = vshrl.u32 %v2054, 7
    %v2056 = vsub.s32 2, %v2055
    %v2057 = vrot.slane %v1972, %v2056
    %v2058 = vlaneseq
    %v2059 = vshrl.u32 %v2058, 7
    %v2060 = vsub.s32 3, %v2059
    %v2061 = vrot.slane %v1972, %v2060
    %2066 = vmatprep.subr.mxu0 %v1982
    %2067 = vmatpush1.msra.mxu0 %v1981
    %2068 = vmatprep.subr.mxu0 %v1986
    %2069 = vmatpush1.msra.mxu0 %v1985
    %2070 = vmatprep.subr.mxu0 %v1990
    %2071 = vmatpush1.msra.mxu0 %v1989
    %2072 = vmatprep.subr.mxu0 %v1994
    %2073 = vmatpush1.msra.mxu0 %v1993
    %2074 = vmatprep.subr.mxu0 %v1998
    %2075 = vmatpush1.msra.mxu0 %v1997
    %2076 = vmatprep.subr.mxu0 %v2002
    %2077 = vmatpush1.msra.mxu0 %v2001
    %2078 = vmatprep.subr.mxu0 %v2006
    %2079 = vmatpush1.msra.mxu0 %v2005
    %2080 = vmatprep.subr.mxu0 %v2010
    %2081 = vmatpush1.msra.mxu0 %v2009
    %2082 = vmatprep.subr.mxu0 %v2014
    %2083 = vmatpush1.msra.mxu0 %v2013
    %2084 = vmatprep.subr.mxu0 %v2018
    %2085 = vmatpush1.msra.mxu0 %v2017
    %2086 = vmatprep.subr.mxu0 %v2022
    %2087 = vmatpush1.msra.mxu0 %v2021
    %2088 = vmatprep.subr.mxu0 %v2026
    %2089 = vmatpush1.msra.mxu0 %v2025
    %2090 = vmatprep.subr.mxu0 %v2030
    %2091 = vmatpush1.msra.mxu0 %v2029
    %2092 = vmatprep.subr.mxu0 %v2034
    %2093 = vmatpush1.msra.mxu0 %v2033
    %2094 = vmatprep.subr.mxu0 %v2038
    %2095 = vmatpush1.msra.mxu0 %v2037
    %2096 = vmatprep.subr.mxu0 %v2042
    %2097 = vmatpush1.msra.mxu0 %v2041
    %2098 = vmatprep.subr.mxu0 0.0
    %2099 = vmatpush1.msra.mxu0 0.0
    %2100 = vmatprep.subr.mxu0 0.0
    %2101 = vmatpush1.msra.mxu0 0.0
    %2102 = vmatprep.subr.mxu0 0.0
    %2103 = vmatpush1.msra.mxu0 0.0
    %2104 = vmatprep.subr.mxu0 0.0
    %2105 = vmatpush1.msra.mxu0 0.0
    %2106 = vmatprep.subr.mxu0 0.0
    %2107 = vmatpush1.msra.mxu0 0.0
    %2108 = vmatprep.subr.mxu0 0.0
    %2109 = vmatpush1.msra.mxu0 0.0
    %2110 = vmatprep.subr.mxu0 0.0
    %2111 = vmatpush1.msra.mxu0 0.0
    %2112 = vmatprep.subr.mxu0 0.0
    %2113 = vmatpush1.msra.mxu0 0.0
    %2114 = vmatprep.subr.mxu0 0.0
    %2115 = vmatpush1.msra.mxu0 0.0
    %2116 = vmatprep.subr.mxu0 0.0
    %2117 = vmatpush1.msra.mxu0 0.0
    %2118 = vmatprep.subr.mxu0 0.0
    %2119 = vmatpush1.msra.mxu0 0.0
    %2120 = vmatprep.subr.mxu0 0.0
    %2121 = vmatpush1.msra.mxu0 0.0
    %2122 = vmatprep.subr.mxu0 0.0
    %2123 = vmatpush1.msra.mxu0 0.0
    %2124 = vmatprep.subr.mxu0 0.0
    %2125 = vmatpush1.msra.mxu0 0.0
    %2126 = vmatprep.subr.mxu0 0.0
    %2127 = vmatpush1.msra.mxu0 0.0
    %2128 = vmatprep.subr.mxu0 0.0
    %2129 = vmatpush1.msra.mxu0 0.0
    %2130 = vmatprep.mubr.f32.mxu0 0.0
    %2131 = vmatmul.mubr.f32.gmra.mrb[0].mxu0 %v1973
    %v2132 = vpop.f32.mrb[0].mxu0
    %v2133 = vadd.f32 %v2049, %v2132
    %v2134 = vpop.f32.mrb[0].mxu0
    %v2135 = vadd.f32 %v2053, %v2134
    %2136 = vmatprep.mubr.f32.mxu0 0.0
    %2137 = vmatmul.mubr.f32.gmra.mrb[0].mxu0 %v1974
    %v2138 = vpop.f32.mrb[0].mxu0
    %v2139 = vadd.f32 %v2049, %v2138
    %v2140 = vpop.f32.mrb[0].mxu0
    %v2141 = vadd.f32 %v2053, %v2140
    %2142 = vmatprep.mubr.f32.mxu0 0.0
    %2143 = vmatmul.mubr.f32.gmra.mrb[0].mxu0 %v1975
    %v2144 = vpop.f32.mrb[0].mxu0
    %v2145 = vadd.f32 %v2049, %v2144
    %v2146 = vpop.f32.mrb[0].mxu0
    %v2147 = vadd.f32 %v2053, %v2146
    %2148 = vmatprep.mubr.f32.mxu0 0.0
    %2149 = vmatmul.mubr.f32.gmra.mrb[0].mxu0 %v1976
    %v2150 = vpop.f32.mrb[0].mxu0
    %v2151 = vadd.f32 %v2049, %v2150
    %v2152 = vpop.f32.mrb[0].mxu0
    %v2153 = vadd.f32 %v2053, %v2152
    %2154 = vmatprep.mubr.f32.mxu0 0.0
    %2155 = vmatmul.mubr.f32.gmra.mrb[0].mxu0 %v1977
    %v2156 = vpop.f32.mrb[0].mxu0
    %v2157 = vadd.f32 %v2049, %v2156
    %v2158 = vpop.f32.mrb[0].mxu0
    %v2159 = vadd.f32 %v2053, %v2158
    %2160 = vmatprep.mubr.f32.mxu0 0.0
    %2161 = vmatmul.mubr.f32.gmra.mrb[0].mxu0 %v1978
    %v2162 = vpop.f32.mrb[0].mxu0
    %v2163 = vadd.f32 %v2049, %v2162
    %v2164 = vpop.f32.mrb[0].mxu0
    %v2165 = vadd.f32 %v2053, %v2164
    %2166 = vmatprep.mubr.f32.mxu0 0.0
    %2167 = vmatmul.mubr.f32.gmra.mrb[0].mxu0 %v1979
    %v2168 = vpop.f32.mrb[0].mxu0
    %v2169 = vadd.f32 %v2049, %v2168
    %v2170 = vpop.f32.mrb[0].mxu0
    %v2171 = vadd.f32 %v2053, %v2170
    %2172 = vmatprep.mubr.f32.mxu0 0.0
    %2173 = vmatmul.mubr.f32.gmra.mrb[0].mxu0 %v1980
    %v2174 = vpop.f32.mrb[0].mxu0
    %v2175 = vadd.f32 %v2049, %v2174
    %v2176 = vpop.f32.mrb[0].mxu0
    %v2177 = vadd.f32 %v2053, %v2176
    %2178 = vdwg.mxu0
    %2179 = vmatprep.subr.mxu0 %v1984
    %2180 = vmatpush1.msra.mxu0 %v1983
    %2181 = vmatprep.subr.mxu0 %v1988
    %2182 = vmatpush1.msra.mxu0 %v1987
    %2183 = vmatprep.subr.mxu0 %v1992
    %2184 = vmatpush1.msra.mxu0 %v1991
    %2185 = vmatprep.subr.mxu0 %v1996
    %2186 = vmatpush1.msra.mxu0 %v1995
    %2187 = vmatprep.subr.mxu0 %v2000
    %2188 = vmatpush1.msra.mxu0 %v1999
    %2189 = vmatprep.subr.mxu0 %v2004
    %2190 = vmatpush1.msra.mxu0 %v2003
    %2191 = vmatprep.subr.mxu0 %v2008
    %2192 = vmatpush1.msra.mxu0 %v2007
    %2193 = vmatprep.subr.mxu0 %v2012
    %2194 = vmatpush1.msra.mxu0 %v2011
    %2195 = vmatprep.subr.mxu0 %v2016
    %2196 = vmatpush1.msra.mxu0 %v2015
    %2197 = vmatprep.subr.mxu0 %v2020
    %2198 = vmatpush1.msra.mxu0 %v2019
    %2199 = vmatprep.subr.mxu0 %v2024
    %2200 = vmatpush1.msra.mxu0 %v2023
    %2201 = vmatprep.subr.mxu0 %v2028
    %2202 = vmatpush1.msra.mxu0 %v2027
    %2203 = vmatprep.subr.mxu0 %v2032
    %2204 = vmatpush1.msra.mxu0 %v2031
    %2205 = vmatprep.subr.mxu0 %v2036
    %2206 = vmatpush1.msra.mxu0 %v2035
    %2207 = vmatprep.subr.mxu0 %v2040
    %2208 = vmatpush1.msra.mxu0 %v2039
    %2209 = vmatprep.subr.mxu0 %v2044
    %2210 = vmatpush1.msra.mxu0 %v2043
    %2211 = vmatprep.subr.mxu0 0.0
    %2212 = vmatpush1.msra.mxu0 0.0
    %2213 = vmatprep.subr.mxu0 0.0
    %2214 = vmatpush1.msra.mxu0 0.0
    %2215 = vmatprep.subr.mxu0 0.0
    %2216 = vmatpush1.msra.mxu0 0.0
    %2217 = vmatprep.subr.mxu0 0.0
    %2218 = vmatpush1.msra.mxu0 0.0
    %2219 = vmatprep.subr.mxu0 0.0
    %2220 = vmatpush1.msra.mxu0 0.0
    %2221 = vmatprep.subr.mxu0 0.0
    %2222 = vmatpush1.msra.mxu0 0.0
    %2223 = vmatprep.subr.mxu0 0.0
    %2224 = vmatpush1.msra.mxu0 0.0
    %2225 = vmatprep.subr.mxu0 0.0
    %2226 = vmatpush1.msra.mxu0 0.0
    %2227 = vmatprep.subr.mxu0 0.0
    %2228 = vmatpush1.msra.mxu0 0.0
    %2229 = vmatprep.subr.mxu0 0.0
    %2230 = vmatpush1.msra.mxu0 0.0
    %2231 = vmatprep.subr.mxu0 0.0
    %2232 = vmatpush1.msra.mxu0 0.0
    %2233 = vmatprep.subr.mxu0 0.0
    %2234 = vmatpush1.msra.mxu0 0.0
    %2235 = vmatprep.subr.mxu0 0.0
    %2236 = vmatpush1.msra.mxu0 0.0
    %2237 = vmatprep.subr.mxu0 0.0
    %2238 = vmatpush1.msra.mxu0 0.0
    %2239 = vmatprep.subr.mxu0 0.0
    %2240 = vmatpush1.msra.mxu0 0.0
    %2241 = vmatprep.subr.mxu0 0.0
    %2242 = vmatpush1.msra.mxu0 0.0
    %2243 = vmatprep.mubr.f32.mxu0 0.0
    %2244 = vmatmul.mubr.f32.gmra.mrb[0].mxu0 %v1973
    %v2245 = vpop.f32.mrb[0].mxu0
    %v2246 = vadd.f32 %v2057, %v2245
    %v2247 = vpop.f32.mrb[0].mxu0
    %v2248 = vadd.f32 %v2061, %v2247
    %2249 = vmatprep.mubr.f32.mxu0 0.0
    %2250 = vmatmul.mubr.f32.gmra.mrb[0].mxu0 %v1974
    %v2251 = vpop.f32.mrb[0].mxu0
    %v2252 = vadd.f32 %v2057, %v2251
    %v2253 = vpop.f32.mrb[0].mxu0
    %v2254 = vadd.f32 %v2061, %v2253
    %2255 = vmatprep.mubr.f32.mxu0 0.0
    %2256 = vmatmul.mubr.f32.gmra.mrb[0].mxu0 %v1975
    %v2257 = vpop.f32.mrb[0].mxu0
    %v2258 = vadd.f32 %v2057, %v2257
    %v2259 = vpop.f32.mrb[0].mxu0
    %v2260 = vadd.f32 %v2061, %v2259
    %2261 = vmatprep.mubr.f32.mxu0 0.0
    %2262 = vmatmul.mubr.f32.gmra.mrb[0].mxu0 %v1976
    %v2263 = vpop.f32.mrb[0].mxu0
    %v2264 = vadd.f32 %v2057, %v2263
    %v2265 = vpop.f32.mrb[0].mxu0
    %v2266 = vadd.f32 %v2061, %v2265
    %2267 = vmatprep.mubr.f32.mxu0 0.0
    %2268 = vmatmul.mubr.f32.gmra.mrb[0].mxu0 %v1977
    %v2269 = vpop.f32.mrb[0].mxu0
    %v2270 = vadd.f32 %v2057, %v2269
    %v2271 = vpop.f32.mrb[0].mxu0
    %v2272 = vadd.f32 %v2061, %v2271
    %2273 = vmatprep.mubr.f32.mxu0 0.0
    %2274 = vmatmul.mubr.f32.gmra.mrb[0].mxu0 %v1978
    %v2275 = vpop.f32.mrb[0].mxu0
    %v2276 = vadd.f32 %v2057, %v2275
    %v2277 = vpop.f32.mrb[0].mxu0
    %v2278 = vadd.f32 %v2061, %v2277
    %2279 = vmatprep.mubr.f32.mxu0 0.0
    %2280 = vmatmul.mubr.f32.gmra.mrb[0].mxu0 %v1979
    %v2281 = vpop.f32.mrb[0].mxu0
    %v2282 = vadd.f32 %v2057, %v2281
    %v2283 = vpop.f32.mrb[0].mxu0
    %v2284 = vadd.f32 %v2061, %v2283
    %2285 = vmatprep.mubr.f32.mxu0 0.0
    %2286 = vmatmul.mubr.f32.gmra.mrb[0].mxu0 %v1980
    %v2287 = vpop.f32.mrb[0].mxu0
    %v2288 = vadd.f32 %v2057, %v2287
    %v2289 = vpop.f32.mrb[0].mxu0
    %v2290 = vadd.f32 %v2061, %v2289
    %2291 = vdwg.mxu0
    %2292 = vst [vmem:[#allocation2] sm:$0xff] %v2133
    %2293 = vst [vmem:[#allocation2 + $0x8] sm:$0xff] %v2135
    %2294 = vst [vmem:[#allocation2 + $0x10] sm:$0xff] %v2246
    %2295 = vst [vmem:[#allocation2 + $0x18] sm:$0xff] %v2248
    %2296 = vst [vmem:[#allocation2 + $0x20] sm:$0xff] %v2139
    %2297 = vst [vmem:[#allocation2 + $0x28] sm:$0xff] %v2141
    %2298 = vst [vmem:[#allocation2 + $0x30] sm:$0xff] %v2252
    %2299 = vst [vmem:[#allocation2 + $0x38] sm:$0xff] %v2254
    %2300 = vst [vmem:[#allocation2 + $0x40] sm:$0xff] %v2145
    %2301 = vst [vmem:[#allocation2 + $0x48] sm:$0xff] %v2147
    %2302 = vst [vmem:[#allocation2 + $0x50] sm:$0xff] %v2258
    %2303 = vst [vmem:[#allocation2 + $0x58] sm:$0xff] %v2260
    %2304 = vst [vmem:[#allocation2 + $0x60] sm:$0xff] %v2151
    %2305 = vst [vmem:[#allocation2 + $0x68] sm:$0xff] %v2153
    %2306 = vst [vmem:[#allocation2 + $0x70] sm:$0xff] %v2264
    %2307 = vst [vmem:[#allocation2 + $0x78] sm:$0xff] %v2266
    %2308 = vst [vmem:[#allocation2 + $0x80] sm:$0xff] %v2157
    %2309 = vst [vmem:[#allocation2 + $0x88] sm:$0xff] %v2159
    %2310 = vst [vmem:[#allocation2 + $0x90] sm:$0xff] %v2270
    %2311 = vst [vmem:[#allocation2 + $0x98] sm:$0xff] %v2272
    %2312 = vst [vmem:[#allocation2 + $0xa0] sm:$0xff] %v2163
    %2313 = vst [vmem:[#allocation2 + $0xa8] sm:$0xff] %v2165
    %2314 = vst [vmem:[#allocation2 + $0xb0] sm:$0xff] %v2276
    %2315 = vst [vmem:[#allocation2 + $0xb8] sm:$0xff] %v2278
    %2316 = vst [vmem:[#allocation2 + $0xc0] sm:$0xff] %v2169
    %2317 = vst [vmem:[#allocation2 + $0xc8] sm:$0xff] %v2171
    %2318 = vst [vmem:[#allocation2 + $0xd0] sm:$0xff] %v2282
    %2319 = vst [vmem:[#allocation2 + $0xd8] sm:$0xff] %v2284
    %2320 = vst [vmem:[#allocation2 + $0xe0] sm:$0xff] %v2175
    %2321 = vst [vmem:[#allocation2 + $0xe8] sm:$0xff] %v2177
    %2322 = vst [vmem:[#allocation2 + $0xf0] sm:$0xff] %v2288
    %2323 = vst [vmem:[#allocation2 + $0xf8] sm:$0xff] %v2290
    %v2324 = vld [vmem:[#allocation2] sm:$0xff]
    %v2325 = vld [vmem:[#allocation2 + $0x8] sm:$0xff]
    %v2326 = vld [vmem:[#allocation2 + $0x10] sm:$0xff]
    %v2327 = vld [vmem:[#allocation2 + $0x18] sm:$0xff]
    %2328 = vmatprep.subr.mxu0 %v1909
    %2329 = vmatpush1.msra.mxu0 %v1908
    %2330 = vmatprep.subr.mxu0 %v1913
    %2331 = vmatpush1.msra.mxu0 %v1912
    %2332 = vmatprep.subr.mxu0 %v1917
    %2333 = vmatpush1.msra.mxu0 %v1916
    %2334 = vmatprep.subr.mxu0 %v1921
    %2335 = vmatpush1.msra.mxu0 %v1920
    %2336 = vmatprep.subr.mxu0 %v1925
    %2337 = vmatpush1.msra.mxu0 %v1924
    %2338 = vmatprep.subr.mxu0 %v1929
    %2339 = vmatpush1.msra.mxu0 %v1928
    %2340 = vmatprep.subr.mxu0 %v1933
    %2341 = vmatpush1.msra.mxu0 %v1932
    %2342 = vmatprep.subr.mxu0 %v1937
    %2343 = vmatpush1.msra.mxu0 %v1936
    %2344 = vmatprep.subr.mxu0 %v1941
    %2345 = vmatpush1.msra.mxu0 %v1940
    %2346 = vmatprep.subr.mxu0 %v1945
    %2347 = vmatpush1.msra.mxu0 %v1944
    %2348 = vmatprep.subr.mxu0 %v1949
    %2349 = vmatpush1.msra.mxu0 %v1948
    %2350 = vmatprep.subr.mxu0 %v1953
    %2351 = vmatpush1.msra.mxu0 %v1952
    %2352 = vmatprep.subr.mxu0 %v1957
    %2353 = vmatpush1.msra.mxu0 %v1956
    %2354 = vmatprep.subr.mxu0 %v1961
    %2355 = vmatpush1.msra.mxu0 %v1960
    %2356 = vmatprep.subr.mxu0 %v1965
    %2357 = vmatpush1.msra.mxu0 %v1964
    %2358 = vmatprep.subr.mxu0 %v1969
    %2359 = vmatpush1.msra.mxu0 %v1968
    %2360 = vmatprep.subr.mxu0 0.0
    %2361 = vmatpush1.msra.mxu0 0.0
    %2362 = vmatprep.subr.mxu0 0.0
    %2363 = vmatpush1.msra.mxu0 0.0
    %2364 = vmatprep.subr.mxu0 0.0
    %2365 = vmatpush1.msra.mxu0 0.0
    %2366 = vmatprep.subr.mxu0 0.0
    %2367 = vmatpush1.msra.mxu0 0.0
    %2368 = vmatprep.subr.mxu0 0.0
    %2369 = vmatpush1.msra.mxu0 0.0
    %2370 = vmatprep.subr.mxu0 0.0
    %2371 = vmatpush1.msra.mxu0 0.0
    %2372 = vmatprep.subr.mxu0 0.0
    %2373 = vmatpush1.msra.mxu0 0.0
    %2374 = vmatprep.subr.mxu0 0.0
    %2375 = vmatpush1.msra.mxu0 0.0
    %2376 = vmatprep.subr.mxu0 0.0
    %2377 = vmatpush1.msra.mxu0 0.0
    %2378 = vmatprep.subr.mxu0 0.0
    %2379 = vmatpush1.msra.mxu0 0.0
    %2380 = vmatprep.subr.mxu0 0.0
    %2381 = vmatpush1.msra.mxu0 0.0
    %2382 = vmatprep.subr.mxu0 0.0
    %2383 = vmatpush1.msra.mxu0 0.0
    %2384 = vmatprep.subr.mxu0 0.0
    %2385 = vmatpush1.msra.mxu0 0.0
    %2386 = vmatprep.subr.mxu0 0.0
    %2387 = vmatpush1.msra.mxu0 0.0
    %2388 = vmatprep.subr.mxu0 0.0
    %2389 = vmatpush1.msra.mxu0 0.0
    %2390 = vmatprep.subr.mxu0 0.0
    %2391 = vmatpush1.msra.mxu0 0.0
    %2392 = vmatprep.mubr.f32.mxu0 0.0
    %2393 = vmatmul.mubr.f32.gmra.mrb[0].mxu0 0.0
    %v2394 = vpop.f32.mrb[0].mxu0
    %v2395 = vadd.f32 0.0, %v2394
    %v2396 = vpop.f32.mrb[0].mxu0
    %v2397 = vadd.f32 0.0, %v2396
    %2398 = vdwg.mxu0
    %2399 = vmatprep.subr.mxu0 %v1911
    %2400 = vmatpush1.msra.mxu0 %v1910
    %2401 = vmatprep.subr.mxu0 %v1915
    %2402 = vmatpush1.msra.mxu0 %v1914
    %2403 = vmatprep.subr.mxu0 %v1919
    %2404 = vmatpush1.msra.mxu0 %v1918
    %2405 = vmatprep.subr.mxu0 %v1923
    %2406 = vmatpush1.msra.mxu0 %v1922
    %2407 = vmatprep.subr.mxu0 %v1927
    %2408 = vmatpush1.msra.mxu0 %v1926
    %2409 = vmatprep.subr.mxu0 %v1931
    %2410 = vmatpush1.msra.mxu0 %v1930
    %2411 = vmatprep.subr.mxu0 %v1935
    %2412 = vmatpush1.msra.mxu0 %v1934
    %2413 = vmatprep.subr.mxu0 %v1939
    %2414 = vmatpush1.msra.mxu0 %v1938
    %2415 = vmatprep.subr.mxu0 %v1943
    %2416 = vmatpush1.msra.mxu0 %v1942
    %2417 = vmatprep.subr.mxu0 %v1947
    %2418 = vmatpush1.msra.mxu0 %v1946
    %2419 = vmatprep.subr.mxu0 %v1951
    %2420 = vmatpush1.msra.mxu0 %v1950
    %2421 = vmatprep.subr.mxu0 %v1955
    %2422 = vmatpush1.msra.mxu0 %v1954
    %2423 = vmatprep.subr.mxu0 %v1959
    %2424 = vmatpush1.msra.mxu0 %v1958
    %2425 = vmatprep.subr.mxu0 %v1963
    %2426 = vmatpush1.msra.mxu0 %v1962
    %2427 = vmatprep.subr.mxu0 %v1967
    %2428 = vmatpush1.msra.mxu0 %v1966
    %2429 = vmatprep.subr.mxu0 %v1971
    %2430 = vmatpush1.msra.mxu0 %v1970
    %2431 = vmatprep.subr.mxu0 0.0
    %2432 = vmatpush1.msra.mxu0 0.0
    %2433 = vmatprep.subr.mxu0 0.0
    %2434 = vmatpush1.msra.mxu0 0.0
    %2435 = vmatprep.subr.mxu0 0.0
    %2436 = vmatpush1.msra.mxu0 0.0
    %2437 = vmatprep.subr.mxu0 0.0
    %2438 = vmatpush1.msra.mxu0 0.0
    %2439 = vmatprep.subr.mxu0 0.0
    %2440 = vmatpush1.msra.mxu0 0.0
    %2441 = vmatprep.subr.mxu0 0.0
    %2442 = vmatpush1.msra.mxu0 0.0
    %2443 = vmatprep.subr.mxu0 0.0
    %2444 = vmatpush1.msra.mxu0 0.0
    %2445 = vmatprep.subr.mxu0 0.0
    %2446 = vmatpush1.msra.mxu0 0.0
    %2447 = vmatprep.subr.mxu0 0.0
    %2448 = vmatpush1.msra.mxu0 0.0
    %2449 = vmatprep.subr.mxu0 0.0
    %2450 = vmatpush1.msra.mxu0 0.0
    %2451 = vmatprep.subr.mxu0 0.0
    %2452 = vmatpush1.msra.mxu0 0.0
    %2453 = vmatprep.subr.mxu0 0.0
    %2454 = vmatpush1.msra.mxu0 0.0
    %2455 = vmatprep.subr.mxu0 0.0
    %2456 = vmatpush1.msra.mxu0 0.0
    %2457 = vmatprep.subr.mxu0 0.0
    %2458 = vmatpush1.msra.mxu0 0.0
    %2459 = vmatprep.subr.mxu0 0.0
    %2460 = vmatpush1.msra.mxu0 0.0
    %2461 = vmatprep.subr.mxu0 0.0
    %2462 = vmatpush1.msra.mxu0 0.0
    %2463 = vmatprep.mubr.f32.mxu0 0.0
    %2464 = vmatmul.mubr.f32.gmra.mrb[0].mxu0 0.0
    %v2465 = vpop.f32.mrb[0].mxu0
    %v2466 = vadd.f32 0.0, %v2465
    %v2467 = vpop.f32.mrb[0].mxu0
    %v2468 = vadd.f32 0.0, %v2467
    %2469 = vdwg.mxu0
    %v2470 = vadd.f32 %v2324, %v2395
    %v2471 = vadd.f32 %v2325, %v2397
    %v2472 = vadd.f32 %v2326, %v2466
    %v2473 = vadd.f32 %v2327, %v2468
    %v2474 = vxor.u32 %v2470, 2147483648
    %v2475 = vxor.u32 %v2471, 2147483648
    %v2476 = vxor.u32 %v2472, 2147483648
    %v2477 = vmul.f32 %v2474, 1.442695
    %v2478 = vpow.pop %v2477
    %v2479 = vmul.f32 %v2475, 1.442695
    %v2480 = vpow.pop %v2479
    %v2481 = vmul.f32 %v2476, 1.442695
    %v2482 = vpow.pop %v2481
    %v2483 = vadd.f32 %v2478, 1.0
    %v2484 = vadd.f32 %v2480, 1.0
    %v2485 = vadd.f32 %v2482, 1.0
    %v2486 = vrcp.pop %v2483
    %v2487 = vmul.f32 1.0, %v2486
    %v2488 = vrcp.pop %v2484
    %v2489 = vmul.f32 1.0, %v2488
    %v2490 = vrcp.pop %v2485
    %v2491 = vmul.f32 1.0, %v2490
    %v2492 = vtanh.pop %v2473
    %v2493 = vmul.f32 %v2489, 0.0
    %v2494 = vmul.f32 %v2487, %v2492
    %v2495 = vadd.f32 %v2493, %v2494
    %v2496 = vtanh.pop %v2495
    %v2497 = vmul.f32 %v2491, %v2496
    %v2498 = vld [vmem:[%s669] sm:$0xff]
    %v2499 = vld [vmem:[%s669 + $0x8] sm:$0xff]
    %v2500 = vld [vmem:[%s669 + $0x10] sm:$0xff]
    %v2501 = vld [vmem:[%s669 + $0x18] sm:$0xff]
    %2502 = vmatprep.subr.mxu0 %v1909
    %2503 = vmatpush1.msra.mxu0 %v1908
    %2504 = vmatprep.subr.mxu0 %v1913
    %2505 = vmatpush1.msra.mxu0 %v1912
    %2506 = vmatprep.subr.mxu0 %v1917
    %2507 = vmatpush1.msra.mxu0 %v1916
    %2508 = vmatprep.subr.mxu0 %v1921
    %2509 = vmatpush1.msra.mxu0 %v1920
    %2510 = vmatprep.subr.mxu0 %v1925
    %2511 = vmatpush1.msra.mxu0 %v1924
    %2512 = vmatprep.subr.mxu0 %v1929
    %2513 = vmatpush1.msra.mxu0 %v1928
    %2514 = vmatprep.subr.mxu0 %v1933
    %2515 = vmatpush1.msra.mxu0 %v1932
    %2516 = vmatprep.subr.mxu0 %v1937
    %2517 = vmatpush1.msra.mxu0 %v1936
    %2518 = vmatprep.subr.mxu0 %v1941
    %2519 = vmatpush1.msra.mxu0 %v1940
    %2520 = vmatprep.subr.mxu0 %v1945
    %2521 = vmatpush1.msra.mxu0 %v1944
    %2522 = vmatprep.subr.mxu0 %v1949
    %2523 = vmatpush1.msra.mxu0 %v1948
    %2524 = vmatprep.subr.mxu0 %v1953
    %2525 = vmatpush1.msra.mxu0 %v1952
    %2526 = vmatprep.subr.mxu0 %v1957
    %2527 = vmatpush1.msra.mxu0 %v1956
    %2528 = vmatprep.subr.mxu0 %v1961
    %2529 = vmatpush1.msra.mxu0 %v1960
    %2530 = vmatprep.subr.mxu0 %v1965
    %2531 = vmatpush1.msra.mxu0 %v1964
    %2532 = vmatprep.subr.mxu0 %v1969
    %2533 = vmatpush1.msra.mxu0 %v1968
    %2534 = vmatprep.subr.mxu0 0.0
    %2535 = vmatpush1.msra.mxu0 0.0
    %2536 = vmatprep.subr.mxu0 0.0
    %2537 = vmatpush1.msra.mxu0 0.0
    %2538 = vmatprep.subr.mxu0 0.0
    %2539 = vmatpush1.msra.mxu0 0.0
    %2540 = vmatprep.subr.mxu0 0.0
    %2541 = vmatpush1.msra.mxu0 0.0
    %2542 = vmatprep.subr.mxu0 0.0
    %2543 = vmatpush1.msra.mxu0 0.0
    %2544 = vmatprep.subr.mxu0 0.0
    %2545 = vmatpush1.msra.mxu0 0.0
    %2546 = vmatprep.subr.mxu0 0.0
    %2547 = vmatpush1.msra.mxu0 0.0
    %2548 = vmatprep.subr.mxu0 0.0
    %2549 = vmatpush1.msra.mxu0 0.0
    %2550 = vmatprep.subr.mxu0 0.0
    %2551 = vmatpush1.msra.mxu0 0.0
    %2552 = vmatprep.subr.mxu0 0.0
    %2553 = vmatpush1.msra.mxu0 0.0
    %2554 = vmatprep.subr.mxu0 0.0
    %2555 = vmatpush1.msra.mxu0 0.0
    %2556 = vmatprep.subr.mxu0 0.0
    %2557 = vmatpush1.msra.mxu0 0.0
    %2558 = vmatprep.subr.mxu0 0.0
    %2559 = vmatpush1.msra.mxu0 0.0
    %2560 = vmatprep.subr.mxu0 0.0
    %2561 = vmatpush1.msra.mxu0 0.0
    %2562 = vmatprep.subr.mxu0 0.0
    %2563 = vmatpush1.msra.mxu0 0.0
    %2564 = vmatprep.subr.mxu0 0.0
    %2565 = vmatpush1.msra.mxu0 0.0
    %2566 = vmatprep.mubr.f32.mxu0 0.0
    %2567 = vmatmul.mubr.f32.gmra.mrb[0].mxu0 %v2497
    %v2568 = vpop.f32.mrb[0].mxu0
    %v2569 = vadd.f32 0.0, %v2568
    %v2570 = vpop.f32.mrb[0].mxu0
    %v2571 = vadd.f32 0.0, %v2570
    %2572 = vdwg.mxu0
    %2573 = vmatprep.subr.mxu0 %v1911
    %2574 = vmatpush1.msra.mxu0 %v1910
    %2575 = vmatprep.subr.mxu0 %v1915
    %2576 = vmatpush1.msra.mxu0 %v1914
    %2577 = vmatprep.subr.mxu0 %v1919
    %2578 = vmatpush1.msra.mxu0 %v1918
    %2579 = vmatprep.subr.mxu0 %v1923
    %2580 = vmatpush1.msra.mxu0 %v1922
    %2581 = vmatprep.subr.mxu0 %v1927
    %2582 = vmatpush1.msra.mxu0 %v1926
    %2583 = vmatprep.subr.mxu0 %v1931
    %2584 = vmatpush1.msra.mxu0 %v1930
    %2585 = vmatprep.subr.mxu0 %v1935
    %2586 = vmatpush1.msra.mxu0 %v1934
    %2587 = vmatprep.subr.mxu0 %v1939
    %2588 = vmatpush1.msra.mxu0 %v1938
    %2589 = vmatprep.subr.mxu0 %v1943
    %2590 = vmatpush1.msra.mxu0 %v1942
    %2591 = vmatprep.subr.mxu0 %v1947
    %2592 = vmatpush1.msra.mxu0 %v1946
    %2593 = vmatprep.subr.mxu0 %v1951
    %2594 = vmatpush1.msra.mxu0 %v1950
    %2595 = vmatprep.subr.mxu0 %v1955
    %2596 = vmatpush1.msra.mxu0 %v1954
    %2597 = vmatprep.subr.mxu0 %v1959
    %2598 = vmatpush1.msra.mxu0 %v1958
    %2599 = vmatprep.subr.mxu0 %v1963
    %2600 = vmatpush1.msra.mxu0 %v1962
    %2601 = vmatprep.subr.mxu0 %v1967
    %2602 = vmatpush1.msra.mxu0 %v1966
    %2603 = vmatprep.subr.mxu0 %v1971
    %2604 = vmatpush1.msra.mxu0 %v1970
    %2605 = vmatprep.subr.mxu0 0.0
    %2606 = vmatpush1.msra.mxu0 0.0
    %2607 = vmatprep.subr.mxu0 0.0
    %2608 = vmatpush1.msra.mxu0 0.0
    %2609 = vmatprep.subr.mxu0 0.0
    %2610 = vmatpush1.msra.mxu0 0.0
    %2611 = vmatprep.subr.mxu0 0.0
    %2612 = vmatpush1.msra.mxu0 0.0
    %2613 = vmatprep.subr.mxu0 0.0
    %2614 = vmatpush1.msra.mxu0 0.0
    %2615 = vmatprep.subr.mxu0 0.0
    %2616 = vmatpush1.msra.mxu0 0.0
    %2617 = vmatprep.subr.mxu0 0.0
    %2618 = vmatpush1.msra.mxu0 0.0
    %2619 = vmatprep.subr.mxu0 0.0
    %2620 = vmatpush1.msra.mxu0 0.0
    %2621 = vmatprep.subr.mxu0 0.0
    %2622 = vmatpush1.msra.mxu0 0.0
    %2623 = vmatprep.subr.mxu0 0.0
    %2624 = vmatpush1.msra.mxu0 0.0
    %2625 = vmatprep.subr.mxu0 0.0
    %2626 = vmatpush1.msra.mxu0 0.0
    %2627 = vmatprep.subr.mxu0 0.0
    %2628 = vmatpush1.msra.mxu0 0.0
    %2629 = vmatprep.subr.mxu0 0.0
    %2630 = vmatpush1.msra.mxu0 0.0
    %2631 = vmatprep.subr.mxu0 0.0
    %2632 = vmatpush1.msra.mxu0 0.0
    %2633 = vmatprep.subr.mxu0 0.0
    %2634 = vmatpush1.msra.mxu0 0.0
    %2635 = vmatprep.subr.mxu0 0.0
    %2636 = vmatpush1.msra.mxu0 0.0
    %2637 = vmatprep.mubr.f32.mxu0 0.0
    %2638 = vmatmul.mubr.f32.gmra.mrb[0].mxu0 %v2497
    %v2639 = vpop.f32.mrb[0].mxu0
    %v2640 = vadd.f32 0.0, %v2639
    %v2641 = vpop.f32.mrb[0].mxu0
    %v2642 = vadd.f32 0.0, %v2641
    %2643 = vdwg.mxu0
    %v2644 = vadd.f32 %v2498, %v2569
    %v2645 = vadd.f32 %v2499, %v2571
    %v2646 = vadd.f32 %v2500, %v2640
    %v2647 = vadd.f32 %v2501, %v2642
    %v2648 = vxor.u32 %v2644, 2147483648
    %v2649 = vxor.u32 %v2645, 2147483648
    %v2650 = vxor.u32 %v2646, 2147483648
    %v2651 = vmul.f32 %v2648, 1.442695
    %v2652 = vpow.pop %v2651
    %v2653 = vmul.f32 %v2649, 1.442695
    %v2654 = vpow.pop %v2653
    %v2655 = vmul.f32 %v2650, 1.442695
    %v2656 = vpow.pop %v2655
    %v2657 = vadd.f32 %v2652, 1.0
    %v2658 = vadd.f32 %v2654, 1.0
    %v2659 = vadd.f32 %v2656, 1.0
    %v2660 = vrcp.pop %v2657
    %v2661 = vmul.f32 1.0, %v2660
    %v2662 = vrcp.pop %v2658
    %v2663 = vmul.f32 1.0, %v2662
    %v2664 = vrcp.pop %v2659
    %v2665 = vmul.f32 1.0, %v2664
    %v2666 = vtanh.pop %v2647
    %v2667 = vmul.f32 %v2663, %v2495
    %v2668 = vmul.f32 %v2661, %v2666
    %v2669 = vadd.f32 %v2667, %v2668
    %v2670 = vtanh.pop %v2669
    %v2671 = vmul.f32 %v2665, %v2670
    %v2672 = vld [vmem:[%s846] sm:$0xff]
    %v2673 = vld [vmem:[%s846 + $0x8] sm:$0xff]
    %v2674 = vld [vmem:[%s846 + $0x10] sm:$0xff]
    %v2675 = vld [vmem:[%s846 + $0x18] sm:$0xff]
    %2676 = vmatprep.subr.mxu0 %v1909
    %2677 = vmatpush1.msra.mxu0 %v1908
    %2678 = vmatprep.subr.mxu0 %v1913
    %2679 = vmatpush1.msra.mxu0 %v1912
    %2680 = vmatprep.subr.mxu0 %v1917
    %2681 = vmatpush1.msra.mxu0 %v1916
    %2682 = vmatprep.subr.mxu0 %v1921
    %2683 = vmatpush1.msra.mxu0 %v1920
    %2684 = vmatprep.subr.mxu0 %v1925
    %2685 = vmatpush1.msra.mxu0 %v1924
    %2686 = vmatprep.subr.mxu0 %v1929
    %2687 = vmatpush1.msra.mxu0 %v1928
    %2688 = vmatprep.subr.mxu0 %v1933
    %2689 = vmatpush1.msra.mxu0 %v1932
    %2690 = vmatprep.subr.mxu0 %v1937
    %2691 = vmatpush1.msra.mxu0 %v1936
    %2692 = vmatprep.subr.mxu0 %v1941
    %2693 = vmatpush1.msra.mxu0 %v1940
    %2694 = vmatprep.subr.mxu0 %v1945
    %2695 = vmatpush1.msra.mxu0 %v1944
    %2696 = vmatprep.subr.mxu0 %v1949
    %2697 = vmatpush1.msra.mxu0 %v1948
    %2698 = vmatprep.subr.mxu0 %v1953
    %2699 = vmatpush1.msra.mxu0 %v1952
    %2700 = vmatprep.subr.mxu0 %v1957
    %2701 = vmatpush1.msra.mxu0 %v1956
    %2702 = vmatprep.subr.mxu0 %v1961
    %2703 = vmatpush1.msra.mxu0 %v1960
    %2704 = vmatprep.subr.mxu0 %v1965
    %2705 = vmatpush1.msra.mxu0 %v1964
    %2706 = vmatprep.subr.mxu0 %v1969
    %2707 = vmatpush1.msra.mxu0 %v1968
    %2708 = vmatprep.subr.mxu0 0.0
    %2709 = vmatpush1.msra.mxu0 0.0
    %2710 = vmatprep.subr.mxu0 0.0
    %2711 = vmatpush1.msra.mxu0 0.0
    %2712 = vmatprep.subr.mxu0 0.0
    %2713 = vmatpush1.msra.mxu0 0.0
    %2714 = vmatprep.subr.mxu0 0.0
    %2715 = vmatpush1.msra.mxu0 0.0
    %2716 = vmatprep.subr.mxu0 0.0
    %2717 = vmatpush1.msra.mxu0 0.0
    %2718 = vmatprep.subr.mxu0 0.0
    %2719 = vmatpush1.msra.mxu0 0.0
    %2720 = vmatprep.subr.mxu0 0.0
    %2721 = vmatpush1.msra.mxu0 0.0
    %2722 = vmatprep.subr.mxu0 0.0
    %2723 = vmatpush1.msra.mxu0 0.0
    %2724 = vmatprep.subr.mxu0 0.0
    %2725 = vmatpush1.msra.mxu0 0.0
    %2726 = vmatprep.subr.mxu0 0.0
    %2727 = vmatpush1.msra.mxu0 0.0
    %2728 = vmatprep.subr.mxu0 0.0
    %2729 = vmatpush1.msra.mxu0 0.0
    %2730 = vmatprep.subr.mxu0 0.0
    %2731 = vmatpush1.msra.mxu0 0.0
    %2732 = vmatprep.subr.mxu0 0.0
    %2733 = vmatpush1.msra.mxu0 0.0
    %2734 = vmatprep.subr.mxu0 0.0
    %2735 = vmatpush1.msra.mxu0 0.0
    %2736 = vmatprep.subr.mxu0 0.0
    %2737 = vmatpush1.msra.mxu0 0.0
    %2738 = vmatprep.subr.mxu0 0.0
    %2739 = vmatpush1.msra.mxu0 0.0
    %2740 = vmatprep.mubr.f32.mxu0 0.0
    %2741 = vmatmul.mubr.f32.gmra.mrb[0].mxu0 %v2671
    %v2742 = vpop.f32.mrb[0].mxu0
    %v2743 = vadd.f32 0.0, %v2742
    %v2744 = vpop.f32.mrb[0].mxu0
    %v2745 = vadd.f32 0.0, %v2744
    %2746 = vdwg.mxu0
    %2747 = vmatprep.subr.mxu0 %v1911
    %2748 = vmatpush1.msra.mxu0 %v1910
    %2749 = vmatprep.subr.mxu0 %v1915
    %2750 = vmatpush1.msra.mxu0 %v1914
    %2751 = vmatprep.subr.mxu0 %v1919
    %2752 = vmatpush1.msra.mxu0 %v1918
    %2753 = vmatprep.subr.mxu0 %v1923
    %2754 = vmatpush1.msra.mxu0 %v1922
    %2755 = vmatprep.subr.mxu0 %v1927
    %2756 = vmatpush1.msra.mxu0 %v1926
    %2757 = vmatprep.subr.mxu0 %v1931
    %2758 = vmatpush1.msra.mxu0 %v1930
    %2759 = vmatprep.subr.mxu0 %v1935
    %2760 = vmatpush1.msra.mxu0 %v1934
    %2761 = vmatprep.subr.mxu0 %v1939
    %2762 = vmatpush1.msra.mxu0 %v1938
    %2763 = vmatprep.subr.mxu0 %v1943
    %2764 = vmatpush1.msra.mxu0 %v1942
    %2765 = vmatprep.subr.mxu0 %v1947
    %2766 = vmatpush1.msra.mxu0 %v1946
    %2767 = vmatprep.subr.mxu0 %v1951
    %2768 = vmatpush1.msra.mxu0 %v1950
    %2769 = vmatprep.subr.mxu0 %v1955
    %2770 = vmatpush1.msra.mxu0 %v1954
    %2771 = vmatprep.subr.mxu0 %v1959
    %2772 = vmatpush1.msra.mxu0 %v1958
    %2773 = vmatprep.subr.mxu0 %v1963
    %2774 = vmatpush1.msra.mxu0 %v1962
    %2775 = vmatprep.subr.mxu0 %v1967
    %2776 = vmatpush1.msra.mxu0 %v1966
    %2777 = vmatprep.subr.mxu0 %v1971
    %2778 = vmatpush1.msra.mxu0 %v1970
    %2779 = vmatprep.subr.mxu0 0.0
    %2780 = vmatpush1.msra.mxu0 0.0
    %2781 = vmatprep.subr.mxu0 0.0
    %2782 = vmatpush1.msra.mxu0 0.0
    %2783 = vmatprep.subr.mxu0 0.0
    %2784 = vmatpush1.msra.mxu0 0.0
    %2785 = vmatprep.subr.mxu0 0.0
    %2786 = vmatpush1.msra.mxu0 0.0
    %2787 = vmatprep.subr.mxu0 0.0
    %2788 = vmatpush1.msra.mxu0 0.0
    %2789 = vmatprep.subr.mxu0 0.0
    %2790 = vmatpush1.msra.mxu0 0.0
    %2791 = vmatprep.subr.mxu0 0.0
    %2792 = vmatpush1.msra.mxu0 0.0
    %2793 = vmatprep.subr.mxu0 0.0
    %2794 = vmatpush1.msra.mxu0 0.0
    %2795 = vmatprep.subr.mxu0 0.0
    %2796 = vmatpush1.msra.mxu0 0.0
    %2797 = vmatprep.subr.mxu0 0.0
    %2798 = vmatpush1.msra.mxu0 0.0
    %2799 = vmatprep.subr.mxu0 0.0
    %2800 = vmatpush1.msra.mxu0 0.0
    %2801 = vmatprep.subr.mxu0 0.0
    %2802 = vmatpush1.msra.mxu0 0.0
    %2803 = vmatprep.subr.mxu0 0.0
    %2804 = vmatpush1.msra.mxu0 0.0
    %2805 = vmatprep.subr.mxu0 0.0
    %2806 = vmatpush1.msra.mxu0 0.0
    %2807 = vmatprep.subr.mxu0 0.0
    %2808 = vmatpush1.msra.mxu0 0.0
    %2809 = vmatprep.subr.mxu0 0.0
    %2810 = vmatpush1.msra.mxu0 0.0
    %2811 = vmatprep.mubr.f32.mxu0 0.0
    %2812 = vmatmul.mubr.f32.gmra.mrb[0].mxu0 %v2671
    %v2813 = vpop.f32.mrb[0].mxu0
    %v2814 = vadd.f32 0.0, %v2813
    %v2815 = vpop.f32.mrb[0].mxu0
    %v2816 = vadd.f32 0.0, %v2815
    %2817 = vdwg.mxu0
    %v2818 = vadd.f32 %v2672, %v2743
    %v2819 = vadd.f32 %v2673, %v2745
    %v2820 = vadd.f32 %v2674, %v2814
    %v2821 = vadd.f32 %v2675, %v2816
    %v2822 = vxor.u32 %v2818, 2147483648
    %v2823 = vxor.u32 %v2819, 2147483648
    %v2824 = vxor.u32 %v2820, 2147483648
    %v2825 = vmul.f32 %v2822, 1.442695
    %v2826 = vpow.pop %v2825
    %v2827 = vmul.f32 %v2823, 1.442695
    %v2828 = vpow.pop %v2827
    %v2829 = vmul.f32 %v2824, 1.442695
    %v2830 = vpow.pop %v2829
    %v2831 = vadd.f32 %v2826, 1.0
    %v2832 = vadd.f32 %v2828, 1.0
    %v2833 = vadd.f32 %v2830, 1.0
    %v2834 = vrcp.pop %v2831
    %v2835 = vmul.f32 1.0, %v2834
    %v2836 = vrcp.pop %v2832
    %v2837 = vmul.f32 1.0, %v2836
    %v2838 = vrcp.pop %v2833
    %v2839 = vmul.f32 1.0, %v2838
    %v2840 = vtanh.pop %v2821
    %v2841 = vmul.f32 %v2837, %v2669
    %v2842 = vmul.f32 %v2835, %v2840
    %v2843 = vadd.f32 %v2841, %v2842
    %v2844 = vtanh.pop %v2843
    %v2845 = vmul.f32 %v2839, %v2844
    %v2846 = vld [vmem:[%s1023] sm:$0xff]
    %v2847 = vld [vmem:[%s1023 + $0x8] sm:$0xff]
    %v2848 = vld [vmem:[%s1023 + $0x10] sm:$0xff]
    %v2849 = vld [vmem:[%s1023 + $0x18] sm:$0xff]
    %2850 = vmatprep.subr.mxu0 %v1909
    %2851 = vmatpush1.msra.mxu0 %v1908
    %2852 = vmatprep.subr.mxu0 %v1913
    %2853 = vmatpush1.msra.mxu0 %v1912
    %2854 = vmatprep.subr.mxu0 %v1917
    %2855 = vmatpush1.msra.mxu0 %v1916
    %2856 = vmatprep.subr.mxu0 %v1921
    %2857 = vmatpush1.msra.mxu0 %v1920
    %2858 = vmatprep.subr.mxu0 %v1925
    %2859 = vmatpush1.msra.mxu0 %v1924
    %2860 = vmatprep.subr.mxu0 %v1929
    %2861 = vmatpush1.msra.mxu0 %v1928
    %2862 = vmatprep.subr.mxu0 %v1933
    %2863 = vmatpush1.msra.mxu0 %v1932
    %2864 = vmatprep.subr.mxu0 %v1937
    %2865 = vmatpush1.msra.mxu0 %v1936
    %2866 = vmatprep.subr.mxu0 %v1941
    %2867 = vmatpush1.msra.mxu0 %v1940
    %2868 = vmatprep.subr.mxu0 %v1945
    %2869 = vmatpush1.msra.mxu0 %v1944
    %2870 = vmatprep.subr.mxu0 %v1949
    %2871 = vmatpush1.msra.mxu0 %v1948
    %2872 = vmatprep.subr.mxu0 %v1953
    %2873 = vmatpush1.msra.mxu0 %v1952
    %2874 = vmatprep.subr.mxu0 %v1957
    %2875 = vmatpush1.msra.mxu0 %v1956
    %2876 = vmatprep.subr.mxu0 %v1961
    %2877 = vmatpush1.msra.mxu0 %v1960
    %2878 = vmatprep.subr.mxu0 %v1965
    %2879 = vmatpush1.msra.mxu0 %v1964
    %2880 = vmatprep.subr.mxu0 %v1969
    %2881 = vmatpush1.msra.mxu0 %v1968
    %2882 = vmatprep.subr.mxu0 0.0
    %2883 = vmatpush1.msra.mxu0 0.0
    %2884 = vmatprep.subr.mxu0 0.0
    %2885 = vmatpush1.msra.mxu0 0.0
    %2886 = vmatprep.subr.mxu0 0.0
    %2887 = vmatpush1.msra.mxu0 0.0
    %2888 = vmatprep.subr.mxu0 0.0
    %2889 = vmatpush1.msra.mxu0 0.0
    %2890 = vmatprep.subr.mxu0 0.0
    %2891 = vmatpush1.msra.mxu0 0.0
    %2892 = vmatprep.subr.mxu0 0.0
    %2893 = vmatpush1.msra.mxu0 0.0
    %2894 = vmatprep.subr.mxu0 0.0
    %2895 = vmatpush1.msra.mxu0 0.0
    %2896 = vmatprep.subr.mxu0 0.0
    %2897 = vmatpush1.msra.mxu0 0.0
    %2898 = vmatprep.subr.mxu0 0.0
    %2899 = vmatpush1.msra.mxu0 0.0
    %2900 = vmatprep.subr.mxu0 0.0
    %2901 = vmatpush1.msra.mxu0 0.0
    %2902 = vmatprep.subr.mxu0 0.0
    %2903 = vmatpush1.msra.mxu0 0.0
    %2904 = vmatprep.subr.mxu0 0.0
    %2905 = vmatpush1.msra.mxu0 0.0
    %2906 = vmatprep.subr.mxu0 0.0
    %2907 = vmatpush1.msra.mxu0 0.0
    %2908 = vmatprep.subr.mxu0 0.0
    %2909 = vmatpush1.msra.mxu0 0.0
    %2910 = vmatprep.subr.mxu0 0.0
    %2911 = vmatpush1.msra.mxu0 0.0
    %2912 = vmatprep.subr.mxu0 0.0
    %2913 = vmatpush1.msra.mxu0 0.0
    %2914 = vmatprep.mubr.f32.mxu0 0.0
    %2915 = vmatmul.mubr.f32.gmra.mrb[0].mxu0 %v2845
    %v2916 = vpop.f32.mrb[0].mxu0
    %v2917 = vadd.f32 0.0, %v2916
    %v2918 = vpop.f32.mrb[0].mxu0
    %v2919 = vadd.f32 0.0, %v2918
    %2920 = vdwg.mxu0
    %2921 = vmatprep.subr.mxu0 %v1911
    %2922 = vmatpush1.msra.mxu0 %v1910
    %2923 = vmatprep.subr.mxu0 %v1915
    %2924 = vmatpush1.msra.mxu0 %v1914
    %2925 = vmatprep.subr.mxu0 %v1919
    %2926 = vmatpush1.msra.mxu0 %v1918
    %2927 = vmatprep.subr.mxu0 %v1923
    %2928 = vmatpush1.msra.mxu0 %v1922
    %2929 = vmatprep.subr.mxu0 %v1927
    %2930 = vmatpush1.msra.mxu0 %v1926
    %2931 = vmatprep.subr.mxu0 %v1931
    %2932 = vmatpush1.msra.mxu0 %v1930
    %2933 = vmatprep.subr.mxu0 %v1935
    %2934 = vmatpush1.msra.mxu0 %v1934
    %2935 = vmatprep.subr.mxu0 %v1939
    %2936 = vmatpush1.msra.mxu0 %v1938
    %2937 = vmatprep.subr.mxu0 %v1943
    %2938 = vmatpush1.msra.mxu0 %v1942
    %2939 = vmatprep.subr.mxu0 %v1947
    %2940 = vmatpush1.msra.mxu0 %v1946
    %2941 = vmatprep.subr.mxu0 %v1951
    %2942 = vmatpush1.msra.mxu0 %v1950
    %2943 = vmatprep.subr.mxu0 %v1955
    %2944 = vmatpush1.msra.mxu0 %v1954
    %2945 = vmatprep.subr.mxu0 %v1959
    %2946 = vmatpush1.msra.mxu0 %v1958
    %2947 = vmatprep.subr.mxu0 %v1963
    %2948 = vmatpush1.msra.mxu0 %v1962
    %2949 = vmatprep.subr.mxu0 %v1967
    %2950 = vmatpush1.msra.mxu0 %v1966
    %2951 = vmatprep.subr.mxu0 %v1971
    %2952 = vmatpush1.msra.mxu0 %v1970
    %2953 = vmatprep.subr.mxu0 0.0
    %2954 = vmatpush1.msra.mxu0 0.0
    %2955 = vmatprep.subr.mxu0 0.0
    %2956 = vmatpush1.msra.mxu0 0.0
    %2957 = vmatprep.subr.mxu0 0.0
    %2958 = vmatpush1.msra.mxu0 0.0
    %2959 = vmatprep.subr.mxu0 0.0
    %2960 = vmatpush1.msra.mxu0 0.0
    %2961 = vmatprep.subr.mxu0 0.0
    %2962 = vmatpush1.msra.mxu0 0.0
    %2963 = vmatprep.subr.mxu0 0.0
    %2964 = vmatpush1.msra.mxu0 0.0
    %2965 = vmatprep.subr.mxu0 0.0
    %2966 = vmatpush1.msra.mxu0 0.0
    %2967 = vmatprep.subr.mxu0 0.0
    %2968 = vmatpush1.msra.mxu0 0.0
    %2969 = vmatprep.subr.mxu0 0.0
    %2970 = vmatpush1.msra.mxu0 0.0
    %2971 = vmatprep.subr.mxu0 0.0
    %2972 = vmatpush1.msra.mxu0 0.0
    %2973 = vmatprep.subr.mxu0 0.0
    %2974 = vmatpush1.msra.mxu0 0.0
    %2975 = vmatprep.subr.mxu0 0.0
    %2976 = vmatpush1.msra.mxu0 0.0
    %2977 = vmatprep.subr.mxu0 0.0
    %2978 = vmatpush1.msra.mxu0 0.0
    %2979 = vmatprep.subr.mxu0 0.0
    %2980 = vmatpush1.msra.mxu0 0.0
    %2981 = vmatprep.subr.mxu0 0.0
    %2982 = vmatpush1.msra.mxu0 0.0
    %2983 = vmatprep.subr.mxu0 0.0
    %2984 = vmatpush1.msra.mxu0 0.0
    %2985 = vmatprep.mubr.f32.mxu0 0.0
    %2986 = vmatmul.mubr.f32.gmra.mrb[0].mxu0 %v2845
    %v2987 = vpop.f32.mrb[0].mxu0
    %v2988 = vadd.f32 0.0, %v2987
    %v2989 = vpop.f32.mrb[0].mxu0
    %v2990 = vadd.f32 0.0, %v2989
    %2991 = vdwg.mxu0
    %v2992 = vadd.f32 %v2846, %v2917
    %v2993 = vadd.f32 %v2847, %v2919
    %v2994 = vadd.f32 %v2848, %v2988
    %v2995 = vadd.f32 %v2849, %v2990
    %v2996 = vxor.u32 %v2992, 2147483648
    %v2997 = vxor.u32 %v2993, 2147483648
    %v2998 = vxor.u32 %v2994, 2147483648
    %v2999 = vmul.f32 %v2996, 1.442695
    %v3000 = vpow.pop %v2999
    %v3001 = vmul.f32 %v2997, 1.442695
    %v3002 = vpow.pop %v3001
    %v3003 = vmul.f32 %v2998, 1.442695
    %v3004 = vpow.pop %v3003
    %v3005 = vadd.f32 %v3000, 1.0
    %v3006 = vadd.f32 %v3002, 1.0
    %v3007 = vadd.f32 %v3004, 1.0
    %v3008 = vrcp.pop %v3005
    %v3009 = vmul.f32 1.0, %v3008
    %v3010 = vrcp.pop %v3006
    %v3011 = vmul.f32 1.0, %v3010
    %v3012 = vrcp.pop %v3007
    %v3013 = vmul.f32 1.0, %v3012
    %v3014 = vtanh.pop %v2995
    %v3015 = vmul.f32 %v3011, %v2843
    %v3016 = vmul.f32 %v3009, %v3014
    %v3017 = vadd.f32 %v3015, %v3016
    %v3018 = vtanh.pop %v3017
    %v3019 = vmul.f32 %v3013, %v3018
    %v3020 = vld [vmem:[%s1200] sm:$0xff]
    %v3021 = vld [vmem:[%s1200 + $0x8] sm:$0xff]
    %v3022 = vld [vmem:[%s1200 + $0x10] sm:$0xff]
    %v3023 = vld [vmem:[%s1200 + $0x18] sm:$0xff]
    %3024 = vmatprep.subr.mxu0 %v1909
    %3025 = vmatpush1.msra.mxu0 %v1908
    %3026 = vmatprep.subr.mxu0 %v1913
    %3027 = vmatpush1.msra.mxu0 %v1912
    %3028 = vmatprep.subr.mxu0 %v1917
    %3029 = vmatpush1.msra.mxu0 %v1916
    %3030 = vmatprep.subr.mxu0 %v1921
    %3031 = vmatpush1.msra.mxu0 %v1920
    %3032 = vmatprep.subr.mxu0 %v1925
    %3033 = vmatpush1.msra.mxu0 %v1924
    %3034 = vmatprep.subr.mxu0 %v1929
    %3035 = vmatpush1.msra.mxu0 %v1928
    %3036 = vmatprep.subr.mxu0 %v1933
    %3037 = vmatpush1.msra.mxu0 %v1932
    %3038 = vmatprep.subr.mxu0 %v1937
    %3039 = vmatpush1.msra.mxu0 %v1936
    %3040 = vmatprep.subr.mxu0 %v1941
    %3041 = vmatpush1.msra.mxu0 %v1940
    %3042 = vmatprep.subr.mxu0 %v1945
    %3043 = vmatpush1.msra.mxu0 %v1944
    %3044 = vmatprep.subr.mxu0 %v1949
    %3045 = vmatpush1.msra.mxu0 %v1948
    %3046 = vmatprep.subr.mxu0 %v1953
    %3047 = vmatpush1.msra.mxu0 %v1952
    %3048 = vmatprep.subr.mxu0 %v1957
    %3049 = vmatpush1.msra.mxu0 %v1956
    %3050 = vmatprep.subr.mxu0 %v1961
    %3051 = vmatpush1.msra.mxu0 %v1960
    %3052 = vmatprep.subr.mxu0 %v1965
    %3053 = vmatpush1.msra.mxu0 %v1964
    %3054 = vmatprep.subr.mxu0 %v1969
    %3055 = vmatpush1.msra.mxu0 %v1968
    %3056 = vmatprep.subr.mxu0 0.0
    %3057 = vmatpush1.msra.mxu0 0.0
    %3058 = vmatprep.subr.mxu0 0.0
    %3059 = vmatpush1.msra.mxu0 0.0
    %3060 = vmatprep.subr.mxu0 0.0
    %3061 = vmatpush1.msra.mxu0 0.0
    %3062 = vmatprep.subr.mxu0 0.0
    %3063 = vmatpush1.msra.mxu0 0.0
    %3064 = vmatprep.subr.mxu0 0.0
    %3065 = vmatpush1.msra.mxu0 0.0
    %3066 = vmatprep.subr.mxu0 0.0
    %3067 = vmatpush1.msra.mxu0 0.0
    %3068 = vmatprep.subr.mxu0 0.0
    %3069 = vmatpush1.msra.mxu0 0.0
    %3070 = vmatprep.subr.mxu0 0.0
    %3071 = vmatpush1.msra.mxu0 0.0
    %3072 = vmatprep.subr.mxu0 0.0
    %3073 = vmatpush1.msra.mxu0 0.0
    %3074 = vmatprep.subr.mxu0 0.0
    %3075 = vmatpush1.msra.mxu0 0.0
    %3076 = vmatprep.subr.mxu0 0.0
    %3077 = vmatpush1.msra.mxu0 0.0
    %3078 = vmatprep.subr.mxu0 0.0
    %3079 = vmatpush1.msra.mxu0 0.0
    %3080 = vmatprep.subr.mxu0 0.0
    %3081 = vmatpush1.msra.mxu0 0.0
    %3082 = vmatprep.subr.mxu0 0.0
    %3083 = vmatpush1.msra.mxu0 0.0
    %3084 = vmatprep.subr.mxu0 0.0
    %3085 = vmatpush1.msra.mxu0 0.0
    %3086 = vmatprep.subr.mxu0 0.0
    %3087 = vmatpush1.msra.mxu0 0.0
    %3088 = vmatprep.mubr.f32.mxu0 0.0
    %3089 = vmatmul.mubr.f32.gmra.mrb[0].mxu0 %v3019
    %v3090 = vpop.f32.mrb[0].mxu0
    %v3091 = vadd.f32 0.0, %v3090
    %v3092 = vpop.f32.mrb[0].mxu0
    %v3093 = vadd.f32 0.0, %v3092
    %3094 = vdwg.mxu0
    %3095 = vmatprep.subr.mxu0 %v1911
    %3096 = vmatpush1.msra.mxu0 %v1910
    %3097 = vmatprep.subr.mxu0 %v1915
    %3098 = vmatpush1.msra.mxu0 %v1914
    %3099 = vmatprep.subr.mxu0 %v1919
    %3100 = vmatpush1.msra.mxu0 %v1918
    %3101 = vmatprep.subr.mxu0 %v1923
    %3102 = vmatpush1.msra.mxu0 %v1922
    %3103 = vmatprep.subr.mxu0 %v1927
    %3104 = vmatpush1.msra.mxu0 %v1926
    %3105 = vmatprep.subr.mxu0 %v1931
    %3106 = vmatpush1.msra.mxu0 %v1930
    %3107 = vmatprep.subr.mxu0 %v1935
    %3108 = vmatpush1.msra.mxu0 %v1934
    %3109 = vmatprep.subr.mxu0 %v1939
    %3110 = vmatpush1.msra.mxu0 %v1938
    %3111 = vmatprep.subr.mxu0 %v1943
    %3112 = vmatpush1.msra.mxu0 %v1942
    %3113 = vmatprep.subr.mxu0 %v1947
    %3114 = vmatpush1.msra.mxu0 %v1946
    %3115 = vmatprep.subr.mxu0 %v1951
    %3116 = vmatpush1.msra.mxu0 %v1950
    %3117 = vmatprep.subr.mxu0 %v1955
    %3118 = vmatpush1.msra.mxu0 %v1954
    %3119 = vmatprep.subr.mxu0 %v1959
    %3120 = vmatpush1.msra.mxu0 %v1958
    %3121 = vmatprep.subr.mxu0 %v1963
    %3122 = vmatpush1.msra.mxu0 %v1962
    %3123 = vmatprep.subr.mxu0 %v1967
    %3124 = vmatpush1.msra.mxu0 %v1966
    %3125 = vmatprep.subr.mxu0 %v1971
    %3126 = vmatpush1.msra.mxu0 %v1970
    %3127 = vmatprep.subr.mxu0 0.0
    %3128 = vmatpush1.msra.mxu0 0.0
    %3129 = vmatprep.subr.mxu0 0.0
    %3130 = vmatpush1.msra.mxu0 0.0
    %3131 = vmatprep.subr.mxu0 0.0
    %3132 = vmatpush1.msra.mxu0 0.0
    %3133 = vmatprep.subr.mxu0 0.0
    %3134 = vmatpush1.msra.mxu0 0.0
    %3135 = vmatprep.subr.mxu0 0.0
    %3136 = vmatpush1.msra.mxu0 0.0
    %3137 = vmatprep.subr.mxu0 0.0
    %3138 = vmatpush1.msra.mxu0 0.0
    %3139 = vmatprep.subr.mxu0 0.0
    %3140 = vmatpush1.msra.mxu0 0.0
    %3141 = vmatprep.subr.mxu0 0.0
    %3142 = vmatpush1.msra.mxu0 0.0
    %3143 = vmatprep.subr.mxu0 0.0
    %3144 = vmatpush1.msra.mxu0 0.0
    %3145 = vmatprep.subr.mxu0 0.0
    %3146 = vmatpush1.msra.mxu0 0.0
    %3147 = vmatprep.subr.mxu0 0.0
    %3148 = vmatpush1.msra.mxu0 0.0
    %3149 = vmatprep.subr.mxu0 0.0
    %3150 = vmatpush1.msra.mxu0 0.0
    %3151 = vmatprep.subr.mxu0 0.0
    %3152 = vmatpush1.msra.mxu0 0.0
    %3153 = vmatprep.subr.mxu0 0.0
    %3154 = vmatpush1.msra.mxu0 0.0
    %3155 = vmatprep.subr.mxu0 0.0
    %3156 = vmatpush1.msra.mxu0 0.0
    %3157 = vmatprep.subr.mxu0 0.0
    %3158 = vmatpush1.msra.mxu0 0.0
    %3159 = vmatprep.mubr.f32.mxu0 0.0
    %3160 = vmatmul.mubr.f32.gmra.mrb[0].mxu0 %v3019
    %v3161 = vpop.f32.mrb[0].mxu0
    %v3162 = vadd.f32 0.0, %v3161
    %v3163 = vpop.f32.mrb[0].mxu0
    %v3164 = vadd.f32 0.0, %v3163
    %3165 = vdwg.mxu0
    %v3166 = vadd.f32 %v3020, %v3091
    %v3167 = vadd.f32 %v3021, %v3093
    %v3168 = vadd.f32 %v3022, %v3162
    %v3169 = vadd.f32 %v3023, %v3164
    %v3170 = vxor.u32 %v3166, 2147483648
    %v3171 = vxor.u32 %v3167, 2147483648
    %v3172 = vxor.u32 %v3168, 2147483648
    %v3173 = vmul.f32 %v3170, 1.442695
    %v3174 = vpow.pop %v3173
    %v3175 = vmul.f32 %v3171, 1.442695
    %v3176 = vpow.pop %v3175
    %v3177 = vmul.f32 %v3172, 1.442695
    %v3178 = vpow.pop %v3177
    %v3179 = vadd.f32 %v3174, 1.0
    %v3180 = vadd.f32 %v3176, 1.0
    %v3181 = vadd.f32 %v3178, 1.0
    %v3182 = vrcp.pop %v3179
    %v3183 = vmul.f32 1.0, %v3182
    %v3184 = vrcp.pop %v3180
    %v3185 = vmul.f32 1.0, %v3184
    %v3186 = vrcp.pop %v3181
    %v3187 = vmul.f32 1.0, %v3186
    %v3188 = vtanh.pop %v3169
    %v3189 = vmul.f32 %v3185, %v3017
    %v3190 = vmul.f32 %v3183, %v3188
    %v3191 = vadd.f32 %v3189, %v3190
    %v3192 = vtanh.pop %v3191
    %v3193 = vmul.f32 %v3187, %v3192
    %v3194 = vld [vmem:[%s1377] sm:$0xff]
    %v3195 = vld [vmem:[%s1377 + $0x8] sm:$0xff]
    %v3196 = vld [vmem:[%s1377 + $0x10] sm:$0xff]
    %v3197 = vld [vmem:[%s1377 + $0x18] sm:$0xff]
    %3198 = vmatprep.subr.mxu0 %v1909
    %3199 = vmatpush1.msra.mxu0 %v1908
    %3200 = vmatprep.subr.mxu0 %v1913
    %3201 = vmatpush1.msra.mxu0 %v1912
    %3202 = vmatprep.subr.mxu0 %v1917
    %3203 = vmatpush1.msra.mxu0 %v1916
    %3204 = vmatprep.subr.mxu0 %v1921
    %3205 = vmatpush1.msra.mxu0 %v1920
    %3206 = vmatprep.subr.mxu0 %v1925
    %3207 = vmatpush1.msra.mxu0 %v1924
    %3208 = vmatprep.subr.mxu0 %v1929
    %3209 = vmatpush1.msra.mxu0 %v1928
    %3210 = vmatprep.subr.mxu0 %v1933
    %3211 = vmatpush1.msra.mxu0 %v1932
    %3212 = vmatprep.subr.mxu0 %v1937
    %3213 = vmatpush1.msra.mxu0 %v1936
    %3214 = vmatprep.subr.mxu0 %v1941
    %3215 = vmatpush1.msra.mxu0 %v1940
    %3216 = vmatprep.subr.mxu0 %v1945
    %3217 = vmatpush1.msra.mxu0 %v1944
    %3218 = vmatprep.subr.mxu0 %v1949
    %3219 = vmatpush1.msra.mxu0 %v1948
    %3220 = vmatprep.subr.mxu0 %v1953
    %3221 = vmatpush1.msra.mxu0 %v1952
    %3222 = vmatprep.subr.mxu0 %v1957
    %3223 = vmatpush1.msra.mxu0 %v1956
    %3224 = vmatprep.subr.mxu0 %v1961
    %3225 = vmatpush1.msra.mxu0 %v1960
    %3226 = vmatprep.subr.mxu0 %v1965
    %3227 = vmatpush1.msra.mxu0 %v1964
    %3228 = vmatprep.subr.mxu0 %v1969
    %3229 = vmatpush1.msra.mxu0 %v1968
    %3230 = vmatprep.subr.mxu0 0.0
    %3231 = vmatpush1.msra.mxu0 0.0
    %3232 = vmatprep.subr.mxu0 0.0
    %3233 = vmatpush1.msra.mxu0 0.0
    %3234 = vmatprep.subr.mxu0 0.0
    %3235 = vmatpush1.msra.mxu0 0.0
    %3236 = vmatprep.subr.mxu0 0.0
    %3237 = vmatpush1.msra.mxu0 0.0
    %3238 = vmatprep.subr.mxu0 0.0
    %3239 = vmatpush1.msra.mxu0 0.0
    %3240 = vmatprep.subr.mxu0 0.0
    %3241 = vmatpush1.msra.mxu0 0.0
    %3242 = vmatprep.subr.mxu0 0.0
    %3243 = vmatpush1.msra.mxu0 0.0
    %3244 = vmatprep.subr.mxu0 0.0
    %3245 = vmatpush1.msra.mxu0 0.0
    %3246 = vmatprep.subr.mxu0 0.0
    %3247 = vmatpush1.msra.mxu0 0.0
    %3248 = vmatprep.subr.mxu0 0.0
    %3249 = vmatpush1.msra.mxu0 0.0
    %3250 = vmatprep.subr.mxu0 0.0
    %3251 = vmatpush1.msra.mxu0 0.0
    %3252 = vmatprep.subr.mxu0 0.0
    %3253 = vmatpush1.msra.mxu0 0.0
    %3254 = vmatprep.subr.mxu0 0.0
    %3255 = vmatpush1.msra.mxu0 0.0
    %3256 = vmatprep.subr.mxu0 0.0
    %3257 = vmatpush1.msra.mxu0 0.0
    %3258 = vmatprep.subr.mxu0 0.0
    %3259 = vmatpush1.msra.mxu0 0.0
    %3260 = vmatprep.subr.mxu0 0.0
    %3261 = vmatpush1.msra.mxu0 0.0
    %3262 = vmatprep.mubr.f32.mxu0 0.0
    %3263 = vmatmul.mubr.f32.gmra.mrb[0].mxu0 %v3193
    %v3264 = vpop.f32.mrb[0].mxu0
    %v3265 = vadd.f32 0.0, %v3264
    %v3266 = vpop.f32.mrb[0].mxu0
    %v3267 = vadd.f32 0.0, %v3266
    %3268 = vdwg.mxu0
    %3269 = vmatprep.subr.mxu0 %v1911
    %3270 = vmatpush1.msra.mxu0 %v1910
    %3271 = vmatprep.subr.mxu0 %v1915
    %3272 = vmatpush1.msra.mxu0 %v1914
    %3273 = vmatprep.subr.mxu0 %v1919
    %3274 = vmatpush1.msra.mxu0 %v1918
    %3275 = vmatprep.subr.mxu0 %v1923
    %3276 = vmatpush1.msra.mxu0 %v1922
    %3277 = vmatprep.subr.mxu0 %v1927
    %3278 = vmatpush1.msra.mxu0 %v1926
    %3279 = vmatprep.subr.mxu0 %v1931
    %3280 = vmatpush1.msra.mxu0 %v1930
    %3281 = vmatprep.subr.mxu0 %v1935
    %3282 = vmatpush1.msra.mxu0 %v1934
    %3283 = vmatprep.subr.mxu0 %v1939
    %3284 = vmatpush1.msra.mxu0 %v1938
    %3285 = vmatprep.subr.mxu0 %v1943
    %3286 = vmatpush1.msra.mxu0 %v1942
    %3287 = vmatprep.subr.mxu0 %v1947
    %3288 = vmatpush1.msra.mxu0 %v1946
    %3289 = vmatprep.subr.mxu0 %v1951
    %3290 = vmatpush1.msra.mxu0 %v1950
    %3291 = vmatprep.subr.mxu0 %v1955
    %3292 = vmatpush1.msra.mxu0 %v1954
    %3293 = vmatprep.subr.mxu0 %v1959
    %3294 = vmatpush1.msra.mxu0 %v1958
    %3295 = vmatprep.subr.mxu0 %v1963
    %3296 = vmatpush1.msra.mxu0 %v1962
    %3297 = vmatprep.subr.mxu0 %v1967
    %3298 = vmatpush1.msra.mxu0 %v1966
    %3299 = vmatprep.subr.mxu0 %v1971
    %3300 = vmatpush1.msra.mxu0 %v1970
    %3301 = vmatprep.subr.mxu0 0.0
    %3302 = vmatpush1.msra.mxu0 0.0
    %3303 = vmatprep.subr.mxu0 0.0
    %3304 = vmatpush1.msra.mxu0 0.0
    %3305 = vmatprep.subr.mxu0 0.0
    %3306 = vmatpush1.msra.mxu0 0.0
    %3307 = vmatprep.subr.mxu0 0.0
    %3308 = vmatpush1.msra.mxu0 0.0
    %3309 = vmatprep.subr.mxu0 0.0
    %3310 = vmatpush1.msra.mxu0 0.0
    %3311 = vmatprep.subr.mxu0 0.0
    %3312 = vmatpush1.msra.mxu0 0.0
    %3313 = vmatprep.subr.mxu0 0.0
    %3314 = vmatpush1.msra.mxu0 0.0
    %3315 = vmatprep.subr.mxu0 0.0
    %3316 = vmatpush1.msra.mxu0 0.0
    %3317 = vmatprep.subr.mxu0 0.0
    %3318 = vmatpush1.msra.mxu0 0.0
    %3319 = vmatprep.subr.mxu0 0.0
    %3320 = vmatpush1.msra.mxu0 0.0
    %3321 = vmatprep.subr.mxu0 0.0
    %3322 = vmatpush1.msra.mxu0 0.0
    %3323 = vmatprep.subr.mxu0 0.0
    %3324 = vmatpush1.msra.mxu0 0.0
    %3325 = vmatprep.subr.mxu0 0.0
    %3326 = vmatpush1.msra.mxu0 0.0
    %3327 = vmatprep.subr.mxu0 0.0
    %3328 = vmatpush1.msra.mxu0 0.0
    %3329 = vmatprep.subr.mxu0 0.0
    %3330 = vmatpush1.msra.mxu0 0.0
    %3331 = vmatprep.subr.mxu0 0.0
    %3332 = vmatpush1.msra.mxu0 0.0
    %3333 = vmatprep.mubr.f32.mxu0 0.0
    %3334 = vmatmul.mubr.f32.gmra.mrb[0].mxu0 %v3193
    %v3335 = vpop.f32.mrb[0].mxu0
    %v3336 = vadd.f32 0.0, %v3335
    %v3337 = vpop.f32.mrb[0].mxu0
    %v3338 = vadd.f32 0.0, %v3337
    %3339 = vdwg.mxu0
    %v3340 = vadd.f32 %v3194, %v3265
    %v3341 = vadd.f32 %v3195, %v3267
    %v3342 = vadd.f32 %v3196, %v3336
    %v3343 = vadd.f32 %v3197, %v3338
    %v3344 = vxor.u32 %v3340, 2147483648
    %v3345 = vxor.u32 %v3341, 2147483648
    %v3346 = vxor.u32 %v3342, 2147483648
    %v3347 = vmul.f32 %v3344, 1.442695
    %v3348 = vpow.pop %v3347
    %v3349 = vmul.f32 %v3345, 1.442695
    %v3350 = vpow.pop %v3349
    %v3351 = vmul.f32 %v3346, 1.442695
    %v3352 = vpow.pop %v3351
    %v3353 = vadd.f32 %v3348, 1.0
    %v3354 = vadd.f32 %v3350, 1.0
    %v3355 = vadd.f32 %v3352, 1.0
    %v3356 = vrcp.pop %v3353
    %v3357 = vmul.f32 1.0, %v3356
    %v3358 = vrcp.pop %v3354
    %v3359 = vmul.f32 1.0, %v3358
    %v3360 = vrcp.pop %v3355
    %v3361 = vmul.f32 1.0, %v3360
    %v3362 = vtanh.pop %v3343
    %v3363 = vmul.f32 %v3359, %v3191
    %v3364 = vmul.f32 %v3357, %v3362
    %v3365 = vadd.f32 %v3363, %v3364
    %v3366 = vtanh.pop %v3365
    %v3367 = vmul.f32 %v3361, %v3366
    %v3368 = vld [vmem:[%s1554] sm:$0xff]
    %v3369 = vld [vmem:[%s1554 + $0x8] sm:$0xff]
    %v3370 = vld [vmem:[%s1554 + $0x10] sm:$0xff]
    %v3371 = vld [vmem:[%s1554 + $0x18] sm:$0xff]
    %3372 = vmatprep.subr.mxu0 %v1909
    %3373 = vmatpush1.msra.mxu0 %v1908
    %3374 = vmatprep.subr.mxu0 %v1913
    %3375 = vmatpush1.msra.mxu0 %v1912
    %3376 = vmatprep.subr.mxu0 %v1917
    %3377 = vmatpush1.msra.mxu0 %v1916
    %3378 = vmatprep.subr.mxu0 %v1921
    %3379 = vmatpush1.msra.mxu0 %v1920
    %3380 = vmatprep.subr.mxu0 %v1925
    %3381 = vmatpush1.msra.mxu0 %v1924
    %3382 = vmatprep.subr.mxu0 %v1929
    %3383 = vmatpush1.msra.mxu0 %v1928
    %3384 = vmatprep.subr.mxu0 %v1933
    %3385 = vmatpush1.msra.mxu0 %v1932
    %3386 = vmatprep.subr.mxu0 %v1937
    %3387 = vmatpush1.msra.mxu0 %v1936
    %3388 = vmatprep.subr.mxu0 %v1941
    %3389 = vmatpush1.msra.mxu0 %v1940
    %3390 = vmatprep.subr.mxu0 %v1945
    %3391 = vmatpush1.msra.mxu0 %v1944
    %3392 = vmatprep.subr.mxu0 %v1949
    %3393 = vmatpush1.msra.mxu0 %v1948
    %3394 = vmatprep.subr.mxu0 %v1953
    %3395 = vmatpush1.msra.mxu0 %v1952
    %3396 = vmatprep.subr.mxu0 %v1957
    %3397 = vmatpush1.msra.mxu0 %v1956
    %3398 = vmatprep.subr.mxu0 %v1961
    %3399 = vmatpush1.msra.mxu0 %v1960
    %3400 = vmatprep.subr.mxu0 %v1965
    %3401 = vmatpush1.msra.mxu0 %v1964
    %3402 = vmatprep.subr.mxu0 %v1969
    %3403 = vmatpush1.msra.mxu0 %v1968
    %3404 = vmatprep.subr.mxu0 0.0
    %3405 = vmatpush1.msra.mxu0 0.0
    %3406 = vmatprep.subr.mxu0 0.0
    %3407 = vmatpush1.msra.mxu0 0.0
    %3408 = vmatprep.subr.mxu0 0.0
    %3409 = vmatpush1.msra.mxu0 0.0
    %3410 = vmatprep.subr.mxu0 0.0
    %3411 = vmatpush1.msra.mxu0 0.0
    %3412 = vmatprep.subr.mxu0 0.0
    %3413 = vmatpush1.msra.mxu0 0.0
    %3414 = vmatprep.subr.mxu0 0.0
    %3415 = vmatpush1.msra.mxu0 0.0
    %3416 = vmatprep.subr.mxu0 0.0
    %3417 = vmatpush1.msra.mxu0 0.0
    %3418 = vmatprep.subr.mxu0 0.0
    %3419 = vmatpush1.msra.mxu0 0.0
    %3420 = vmatprep.subr.mxu0 0.0
    %3421 = vmatpush1.msra.mxu0 0.0
    %3422 = vmatprep.subr.mxu0 0.0
    %3423 = vmatpush1.msra.mxu0 0.0
    %3424 = vmatprep.subr.mxu0 0.0
    %3425 = vmatpush1.msra.mxu0 0.0
    %3426 = vmatprep.subr.mxu0 0.0
    %3427 = vmatpush1.msra.mxu0 0.0
    %3428 = vmatprep.subr.mxu0 0.0
    %3429 = vmatpush1.msra.mxu0 0.0
    %3430 = vmatprep.subr.mxu0 0.0
    %3431 = vmatpush1.msra.mxu0 0.0
    %3432 = vmatprep.subr.mxu0 0.0
    %3433 = vmatpush1.msra.mxu0 0.0
    %3434 = vmatprep.subr.mxu0 0.0
    %3435 = vmatpush1.msra.mxu0 0.0
    %3436 = vmatprep.mubr.f32.mxu0 0.0
    %3437 = vmatmul.mubr.f32.gmra.mrb[0].mxu0 %v3367
    %v3438 = vpop.f32.mrb[0].mxu0
    %v3439 = vadd.f32 0.0, %v3438
    %v3440 = vpop.f32.mrb[0].mxu0
    %v3441 = vadd.f32 0.0, %v3440
    %3442 = vdwg.mxu0
    %3443 = vmatprep.subr.mxu0 %v1911
    %3444 = vmatpush1.msra.mxu0 %v1910
    %3445 = vmatprep.subr.mxu0 %v1915
    %3446 = vmatpush1.msra.mxu0 %v1914
    %3447 = vmatprep.subr.mxu0 %v1919
    %3448 = vmatpush1.msra.mxu0 %v1918
    %3449 = vmatprep.subr.mxu0 %v1923
    %3450 = vmatpush1.msra.mxu0 %v1922
    %3451 = vmatprep.subr.mxu0 %v1927
    %3452 = vmatpush1.msra.mxu0 %v1926
    %3453 = vmatprep.subr.mxu0 %v1931
    %3454 = vmatpush1.msra.mxu0 %v1930
    %3455 = vmatprep.subr.mxu0 %v1935
    %3456 = vmatpush1.msra.mxu0 %v1934
    %3457 = vmatprep.subr.mxu0 %v1939
    %3458 = vmatpush1.msra.mxu0 %v1938
    %3459 = vmatprep.subr.mxu0 %v1943
    %3460 = vmatpush1.msra.mxu0 %v1942
    %3461 = vmatprep.subr.mxu0 %v1947
    %3462 = vmatpush1.msra.mxu0 %v1946
    %3463 = vmatprep.subr.mxu0 %v1951
    %3464 = vmatpush1.msra.mxu0 %v1950
    %3465 = vmatprep.subr.mxu0 %v1955
    %3466 = vmatpush1.msra.mxu0 %v1954
    %3467 = vmatprep.subr.mxu0 %v1959
    %3468 = vmatpush1.msra.mxu0 %v1958
    %3469 = vmatprep.subr.mxu0 %v1963
    %3470 = vmatpush1.msra.mxu0 %v1962
    %3471 = vmatprep.subr.mxu0 %v1967
    %3472 = vmatpush1.msra.mxu0 %v1966
    %3473 = vmatprep.subr.mxu0 %v1971
    %3474 = vmatpush1.msra.mxu0 %v1970
    %3475 = vmatprep.subr.mxu0 0.0
    %3476 = vmatpush1.msra.mxu0 0.0
    %3477 = vmatprep.subr.mxu0 0.0
    %3478 = vmatpush1.msra.mxu0 0.0
    %3479 = vmatprep.subr.mxu0 0.0
    %3480 = vmatpush1.msra.mxu0 0.0
    %3481 = vmatprep.subr.mxu0 0.0
    %3482 = vmatpush1.msra.mxu0 0.0
    %3483 = vmatprep.subr.mxu0 0.0
    %3484 = vmatpush1.msra.mxu0 0.0
    %3485 = vmatprep.subr.mxu0 0.0
    %3486 = vmatpush1.msra.mxu0 0.0
    %3487 = vmatprep.subr.mxu0 0.0
    %3488 = vmatpush1.msra.mxu0 0.0
    %3489 = vmatprep.subr.mxu0 0.0
    %3490 = vmatpush1.msra.mxu0 0.0
    %3491 = vmatprep.subr.mxu0 0.0
    %3492 = vmatpush1.msra.mxu0 0.0
    %3493 = vmatprep.subr.mxu0 0.0
    %3494 = vmatpush1.msra.mxu0 0.0
    %3495 = vmatprep.subr.mxu0 0.0
    %3496 = vmatpush1.msra.mxu0 0.0
    %3497 = vmatprep.subr.mxu0 0.0
    %3498 = vmatpush1.msra.mxu0 0.0
    %3499 = vmatprep.subr.mxu0 0.0
    %3500 = vmatpush1.msra.mxu0 0.0
    %3501 = vmatprep.subr.mxu0 0.0
    %3502 = vmatpush1.msra.mxu0 0.0
    %3503 = vmatprep.subr.mxu0 0.0
    %3504 = vmatpush1.msra.mxu0 0.0
    %3505 = vmatprep.subr.mxu0 0.0
    %3506 = vmatpush1.msra.mxu0 0.0
    %3507 = vmatprep.mubr.f32.mxu0 0.0
    %3508 = vmatmul.mubr.f32.gmra.mrb[0].mxu0 %v3367
    %v3509 = vpop.f32.mrb[0].mxu0
    %v3510 = vadd.f32 0.0, %v3509
    %v3511 = vpop.f32.mrb[0].mxu0
    %v3512 = vadd.f32 0.0, %v3511
    %3513 = vdwg.mxu0
    %v3514 = vadd.f32 %v3368, %v3439
    %v3515 = vadd.f32 %v3369, %v3441
    %v3516 = vadd.f32 %v3370, %v3510
    %v3517 = vadd.f32 %v3371, %v3512
    %v3518 = vxor.u32 %v3514, 2147483648
    %v3519 = vxor.u32 %v3515, 2147483648
    %v3520 = vxor.u32 %v3516, 2147483648
    %v3521 = vmul.f32 %v3518, 1.442695
    %v3522 = vpow.pop %v3521
    %v3523 = vmul.f32 %v3519, 1.442695
    %v3524 = vpow.pop %v3523
    %v3525 = vmul.f32 %v3520, 1.442695
    %v3526 = vpow.pop %v3525
    %v3527 = vadd.f32 %v3522, 1.0
    %v3528 = vadd.f32 %v3524, 1.0
    %v3529 = vadd.f32 %v3526, 1.0
    %v3530 = vrcp.pop %v3527
    %v3531 = vmul.f32 1.0, %v3530
    %v3532 = vrcp.pop %v3528
    %v3533 = vmul.f32 1.0, %v3532
    %v3534 = vrcp.pop %v3529
    %v3535 = vmul.f32 1.0, %v3534
    %v3536 = vtanh.pop %v3517
    %v3537 = vmul.f32 %v3533, %v3365
    %v3538 = vmul.f32 %v3531, %v3536
    %v3539 = vadd.f32 %v3537, %v3538
    %v3540 = vtanh.pop %v3539
    %v3541 = vmul.f32 %v3535, %v3540
    %v3542 = vld [vmem:[%s1731] sm:$0xff]
    %v3543 = vld [vmem:[%s1731 + $0x8] sm:$0xff]
    %v3544 = vld [vmem:[%s1731 + $0x10] sm:$0xff]
    %v3545 = vld [vmem:[%s1731 + $0x18] sm:$0xff]
    %3546 = vmatprep.subr.mxu0 %v1909
    %3547 = vmatpush1.msra.mxu0 %v1908
    %3548 = vmatprep.subr.mxu0 %v1913
    %3549 = vmatpush1.msra.mxu0 %v1912
    %3550 = vmatprep.subr.mxu0 %v1917
    %3551 = vmatpush1.msra.mxu0 %v1916
    %3552 = vmatprep.subr.mxu0 %v1921
    %3553 = vmatpush1.msra.mxu0 %v1920
    %3554 = vmatprep.subr.mxu0 %v1925
    %3555 = vmatpush1.msra.mxu0 %v1924
    %3556 = vmatprep.subr.mxu0 %v1929
    %3557 = vmatpush1.msra.mxu0 %v1928
    %3558 = vmatprep.subr.mxu0 %v1933
    %3559 = vmatpush1.msra.mxu0 %v1932
    %3560 = vmatprep.subr.mxu0 %v1937
    %3561 = vmatpush1.msra.mxu0 %v1936
    %3562 = vmatprep.subr.mxu0 %v1941
    %3563 = vmatpush1.msra.mxu0 %v1940
    %3564 = vmatprep.subr.mxu0 %v1945
    %3565 = vmatpush1.msra.mxu0 %v1944
    %3566 = vmatprep.subr.mxu0 %v1949
    %3567 = vmatpush1.msra.mxu0 %v1948
    %3568 = vmatprep.subr.mxu0 %v1953
    %3569 = vmatpush1.msra.mxu0 %v1952
    %3570 = vmatprep.subr.mxu0 %v1957
    %3571 = vmatpush1.msra.mxu0 %v1956
    %3572 = vmatprep.subr.mxu0 %v1961
    %3573 = vmatpush1.msra.mxu0 %v1960
    %3574 = vmatprep.subr.mxu0 %v1965
    %3575 = vmatpush1.msra.mxu0 %v1964
    %3576 = vmatprep.subr.mxu0 %v1969
    %3577 = vmatpush1.msra.mxu0 %v1968
    %3578 = vmatprep.subr.mxu0 0.0
    %3579 = vmatpush1.msra.mxu0 0.0
    %3580 = vmatprep.subr.mxu0 0.0
    %3581 = vmatpush1.msra.mxu0 0.0
    %3582 = vmatprep.subr.mxu0 0.0
    %3583 = vmatpush1.msra.mxu0 0.0
    %3584 = vmatprep.subr.mxu0 0.0
    %3585 = vmatpush1.msra.mxu0 0.0
    %3586 = vmatprep.subr.mxu0 0.0
    %3587 = vmatpush1.msra.mxu0 0.0
    %3588 = vmatprep.subr.mxu0 0.0
    %3589 = vmatpush1.msra.mxu0 0.0
    %3590 = vmatprep.subr.mxu0 0.0
    %3591 = vmatpush1.msra.mxu0 0.0
    %3592 = vmatprep.subr.mxu0 0.0
    %3593 = vmatpush1.msra.mxu0 0.0
    %3594 = vmatprep.subr.mxu0 0.0
    %3595 = vmatpush1.msra.mxu0 0.0
    %3596 = vmatprep.subr.mxu0 0.0
    %3597 = vmatpush1.msra.mxu0 0.0
    %3598 = vmatprep.subr.mxu0 0.0
    %3599 = vmatpush1.msra.mxu0 0.0
    %3600 = vmatprep.subr.mxu0 0.0
    %3601 = vmatpush1.msra.mxu0 0.0
    %3602 = vmatprep.subr.mxu0 0.0
    %3603 = vmatpush1.msra.mxu0 0.0
    %3604 = vmatprep.subr.mxu0 0.0
    %3605 = vmatpush1.msra.mxu0 0.0
    %3606 = vmatprep.subr.mxu0 0.0
    %3607 = vmatpush1.msra.mxu0 0.0
    %3608 = vmatprep.subr.mxu0 0.0
    %3609 = vmatpush1.msra.mxu0 0.0
    %3610 = vmatprep.mubr.f32.mxu0 0.0
    %3611 = vmatmul.mubr.f32.gmra.mrb[0].mxu0 %v3541
    %v3612 = vpop.f32.mrb[0].mxu0
    %v3613 = vadd.f32 0.0, %v3612
    %v3614 = vpop.f32.mrb[0].mxu0
    %v3615 = vadd.f32 0.0, %v3614
    %3616 = vdwg.mxu0
    %3617 = vmatprep.subr.mxu0 %v1911
    %3618 = vmatpush1.msra.mxu0 %v1910
    %3619 = vmatprep.subr.mxu0 %v1915
    %3620 = vmatpush1.msra.mxu0 %v1914
    %3621 = vmatprep.subr.mxu0 %v1919
    %3622 = vmatpush1.msra.mxu0 %v1918
    %3623 = vmatprep.subr.mxu0 %v1923
    %3624 = vmatpush1.msra.mxu0 %v1922
    %3625 = vmatprep.subr.mxu0 %v1927
    %3626 = vmatpush1.msra.mxu0 %v1926
    %3627 = vmatprep.subr.mxu0 %v1931
    %3628 = vmatpush1.msra.mxu0 %v1930
    %3629 = vmatprep.subr.mxu0 %v1935
    %3630 = vmatpush1.msra.mxu0 %v1934
    %3631 = vmatprep.subr.mxu0 %v1939
    %3632 = vmatpush1.msra.mxu0 %v1938
    %3633 = vmatprep.subr.mxu0 %v1943
    %3634 = vmatpush1.msra.mxu0 %v1942
    %3635 = vmatprep.subr.mxu0 %v1947
    %3636 = vmatpush1.msra.mxu0 %v1946
    %3637 = vmatprep.subr.mxu0 %v1951
    %3638 = vmatpush1.msra.mxu0 %v1950
    %3639 = vmatprep.subr.mxu0 %v1955
    %3640 = vmatpush1.msra.mxu0 %v1954
    %3641 = vmatprep.subr.mxu0 %v1959
    %3642 = vmatpush1.msra.mxu0 %v1958
    %3643 = vmatprep.subr.mxu0 %v1963
    %3644 = vmatpush1.msra.mxu0 %v1962
    %3645 = vmatprep.subr.mxu0 %v1967
    %3646 = vmatpush1.msra.mxu0 %v1966
    %3647 = vmatprep.subr.mxu0 %v1971
    %3648 = vmatpush1.msra.mxu0 %v1970
    %3649 = vmatprep.subr.mxu0 0.0
    %3650 = vmatpush1.msra.mxu0 0.0
    %3651 = vmatprep.subr.mxu0 0.0
    %3652 = vmatpush1.msra.mxu0 0.0
    %3653 = vmatprep.subr.mxu0 0.0
    %3654 = vmatpush1.msra.mxu0 0.0
    %3655 = vmatprep.subr.mxu0 0.0
    %3656 = vmatpush1.msra.mxu0 0.0
    %3657 = vmatprep.subr.mxu0 0.0
    %3658 = vmatpush1.msra.mxu0 0.0
    %3659 = vmatprep.subr.mxu0 0.0
    %3660 = vmatpush1.msra.mxu0 0.0
    %3661 = vmatprep.subr.mxu0 0.0
    %3662 = vmatpush1.msra.mxu0 0.0
    %3663 = vmatprep.subr.mxu0 0.0
    %3664 = vmatpush1.msra.mxu0 0.0
    %3665 = vmatprep.subr.mxu0 0.0
    %3666 = vmatpush1.msra.mxu0 0.0
    %3667 = vmatprep.subr.mxu0 0.0
    %3668 = vmatpush1.msra.mxu0 0.0
    %3669 = vmatprep.subr.mxu0 0.0
    %3670 = vmatpush1.msra.mxu0 0.0
    %3671 = vmatprep.subr.mxu0 0.0
    %3672 = vmatpush1.msra.mxu0 0.0
    %3673 = vmatprep.subr.mxu0 0.0
    %3674 = vmatpush1.msra.mxu0 0.0
    %3675 = vmatprep.subr.mxu0 0.0
    %3676 = vmatpush1.msra.mxu0 0.0
    %3677 = vmatprep.subr.mxu0 0.0
    %3678 = vmatpush1.msra.mxu0 0.0
    %3679 = vmatprep.subr.mxu0 0.0
    %3680 = vmatpush1.msra.mxu0 0.0
    %3681 = vmatprep.mubr.f32.mxu0 0.0
    %3682 = vmatmul.mubr.f32.gmra.mrb[0].mxu0 %v3541
    %v3683 = vpop.f32.mrb[0].mxu0
    %v3684 = vadd.f32 0.0, %v3683
    %v3685 = vpop.f32.mrb[0].mxu0
    %v3686 = vadd.f32 0.0, %v3685
    %3687 = vdwg.mxu0
    %v3688 = vadd.f32 %v3542, %v3613
    %v3689 = vadd.f32 %v3543, %v3615
    %v3690 = vadd.f32 %v3544, %v3684
    %v3691 = vadd.f32 %v3545, %v3686
    %v3692 = vxor.u32 %v3688, 2147483648
    %v3693 = vxor.u32 %v3689, 2147483648
    %v3694 = vxor.u32 %v3690, 2147483648
    %v3695 = vmul.f32 %v3692, 1.442695
    %v3696 = vpow.pop %v3695
    %v3697 = vmul.f32 %v3693, 1.442695
    %v3698 = vpow.pop %v3697
    %v3699 = vmul.f32 %v3694, 1.442695
    %v3700 = vpow.pop %v3699
    %v3701 = vadd.f32 %v3696, 1.0
    %v3702 = vadd.f32 %v3698, 1.0
    %v3703 = vadd.f32 %v3700, 1.0
    %v3704 = vrcp.pop %v3701
    %v3705 = vmul.f32 1.0, %v3704
    %v3706 = vrcp.pop %v3702
    %v3707 = vmul.f32 1.0, %v3706
    %v3708 = vrcp.pop %v3703
    %v3709 = vmul.f32 1.0, %v3708
    %v3710 = vtanh.pop %v3691
    %v3711 = vmul.f32 %v3707, %v3539
    %v3712 = vmul.f32 %v3705, %v3710
    %v3713 = vadd.f32 %v3711, %v3712
    %v3714 = vtanh.pop %v3713
    %v3715 = vmul.f32 %v3709, %v3714
    %v3716 = vld [vmem:[#allocation13] sm:$0xff]
    %v3717 = vld [vmem:[#allocation13 + $0x8] sm:$0xff]
    %v3718 = vld [vmem:[#allocation13 + $0x10] sm:$0xff]
    %v3719 = vld [vmem:[#allocation13 + $0x18] sm:$0xff]
    %v3720 = vld [vmem:[#allocation13 + $0x20] sm:$0xff]
    %v3721 = vld [vmem:[#allocation13 + $0x28] sm:$0xff]
    %v3722 = vld [vmem:[#allocation13 + $0x30] sm:$0xff]
    %v3723 = vld [vmem:[#allocation13 + $0x38] sm:$0xff]
    %v3724 = vld [vmem:[#allocation13 + $0x40] sm:$0xff]
    %v3725 = vld [vmem:[#allocation13 + $0x48] sm:$0xff]
    %v3726 = vld [vmem:[#allocation13 + $0x50] sm:$0xff]
    %v3727 = vld [vmem:[#allocation13 + $0x58] sm:$0xff]
    %v3728 = vld [vmem:[#allocation13 + $0x60] sm:$0xff]
    %v3729 = vld [vmem:[#allocation13 + $0x68] sm:$0xff]
    %v3730 = vld [vmem:[#allocation13 + $0x70] sm:$0xff]
    %v3731 = vld [vmem:[#allocation13 + $0x78] sm:$0xff]
    %v3732 = vld [vmem:[%s8] sm:$0x1]
    %v3734 = vlaneseq
    %v3735 = vshrl.u32 %v3734, 7
    %v3736 = vsub.s32 0, %v3735
    %v3737 = vrot.slane %v3732, %v3736
    %3739 = vmatprep.subr.mxu0 0.0
    %3740 = vmatpush1.msra.mxu0 %v3716
    %3741 = vmatprep.subr.mxu0 0.0
    %3742 = vmatpush1.msra.mxu0 %v3717
    %3743 = vmatprep.subr.mxu0 0.0
    %3744 = vmatpush1.msra.mxu0 %v3718
    %3745 = vmatprep.subr.mxu0 0.0
    %3746 = vmatpush1.msra.mxu0 %v3719
    %3747 = vmatprep.subr.mxu0 0.0
    %3748 = vmatpush1.msra.mxu0 %v3720
    %3749 = vmatprep.subr.mxu0 0.0
    %3750 = vmatpush1.msra.mxu0 %v3721
    %3751 = vmatprep.subr.mxu0 0.0
    %3752 = vmatpush1.msra.mxu0 %v3722
    %3753 = vmatprep.subr.mxu0 0.0
    %3754 = vmatpush1.msra.mxu0 %v3723
    %3755 = vmatprep.subr.mxu0 0.0
    %3756 = vmatpush1.msra.mxu0 %v3724
    %3757 = vmatprep.subr.mxu0 0.0
    %3758 = vmatpush1.msra.mxu0 %v3725
    %3759 = vmatprep.subr.mxu0 0.0
    %3760 = vmatpush1.msra.mxu0 %v3726
    %3761 = vmatprep.subr.mxu0 0.0
    %3762 = vmatpush1.msra.mxu0 %v3727
    %3763 = vmatprep.subr.mxu0 0.0
    %3764 = vmatpush1.msra.mxu0 %v3728
    %3765 = vmatprep.subr.mxu0 0.0
    %3766 = vmatpush1.msra.mxu0 %v3729
    %3767 = vmatprep.subr.mxu0 0.0
    %3768 = vmatpush1.msra.mxu0 %v3730
    %3769 = vmatprep.subr.mxu0 0.0
    %3770 = vmatpush1.msra.mxu0 %v3731
    %3771 = vmatprep.subr.mxu0 0.0
    %3772 = vmatpush1.msra.mxu0 0.0
    %3773 = vmatprep.subr.mxu0 0.0
    %3774 = vmatpush1.msra.mxu0 0.0
    %3775 = vmatprep.subr.mxu0 0.0
    %3776 = vmatpush1.msra.mxu0 0.0
    %3777 = vmatprep.subr.mxu0 0.0
    %3778 = vmatpush1.msra.mxu0 0.0
    %3779 = vmatprep.subr.mxu0 0.0
    %3780 = vmatpush1.msra.mxu0 0.0
    %3781 = vmatprep.subr.mxu0 0.0
    %3782 = vmatpush1.msra.mxu0 0.0
    %3783 = vmatprep.subr.mxu0 0.0
    %3784 = vmatpush1.msra.mxu0 0.0
    %3785 = vmatprep.subr.mxu0 0.0
    %3786 = vmatpush1.msra.mxu0 0.0
    %3787 = vmatprep.subr.mxu0 0.0
    %3788 = vmatpush1.msra.mxu0 0.0
    %3789 = vmatprep.subr.mxu0 0.0
    %3790 = vmatpush1.msra.mxu0 0.0
    %3791 = vmatprep.subr.mxu0 0.0
    %3792 = vmatpush1.msra.mxu0 0.0
    %3793 = vmatprep.subr.mxu0 0.0
    %3794 = vmatpush1.msra.mxu0 0.0
    %3795 = vmatprep.subr.mxu0 0.0
    %3796 = vmatpush1.msra.mxu0 0.0
    %3797 = vmatprep.subr.mxu0 0.0
    %3798 = vmatpush1.msra.mxu0 0.0
    %3799 = vmatprep.subr.mxu0 0.0
    %3800 = vmatpush1.msra.mxu0 0.0
    %3801 = vmatprep.subr.mxu0 0.0
    %3802 = vmatpush1.msra.mxu0 0.0
    %3803 = vmatprep.mubr.f32.mxu0 0.0
    %3804 = vmatmul.mubr.f32.gmra.mrb[0].mxu0 %v3715
    %v3805 = vpop.f32.mrb[0].mxu0
    %v3806 = vadd.f32 %v3737, %v3805
    %v3807 = vpop.f32.mrb[0].mxu0
    %3808 = vdwg.mxu0
    %3809 = vst [vmem:[#allocation15] sm:$0xff] %v3806
    // Predicated region
    $region62: #{tpu_custom_call.1} parent=1 // pred_check
      _
    $region63: #{tpu_custom_call.1} parent=1 // pred_check_branch
      %3811 = sbr.rel (0) target = $region65
    $region64: #{tpu_custom_call.1} parent=1 // pred_region
      %s3813 = ssub.s32 128, 128
      %3814 = vsyncadd [#allocation6], %s3813
      %s3816 = sshll.u32 [#allocation15], 4
      %s3817 = int_to_ptr.vmem [resolvable:$true] %s3816
      %3819 = dma.vmem_to_hbm [thread:$0]  %s3817, 128, %s9, [#allocation6]
    $region65: #{tpu_custom_call.1} parent=1 // pred_fallthru
      _
    // Predicated region
    $region66: #{tpu_custom_call.1} parent=1 // pred_check
      _
    $region67: #{tpu_custom_call.1} parent=1 // pred_check_branch
      %3821 = sbr.rel (0) target = $region69
    $region68: #{tpu_custom_call.1} parent=1 // pred_region
      %3822 = dma.done [#allocation6], 128
    $region69: #{tpu_custom_call.1} parent=1 // pred_fallthru
      _
    %3823 = vsyncpa [#allocation5], 1
    %3824 = vsyncpa [#allocation8], 1
    %3825 = vsyncpa [#allocation11], 1
    %3826 = vsyncpa [#allocation14], 1
    %3827 = vsyncpa [#allocation6], 1

</llo_original>
